<compile_context>
chip_gen: v7x
topology: tpu7x:2x2x1
jax: 0.10.0
libtpu: 0.0.40
codegen_flags: <defaults>
</compile_context>

<pallas_src>
import functools

import numpy as np
import jax
import jax.numpy as jnp
from jax.experimental import pallas as pl
from jax.experimental.pallas import tpu as pltpu


# ---------------------------------------------------------------------------
# Pallas kernel: one RGCN-BDD layer.
#
# grid = (Np//tm  [parallel, output-row tiles],
#         max_nnz [arbitrary, remapped non-empty source-column tiles])
# ---------------------------------------------------------------------------
def rgcn_bdd_kernel(ktab_ref, kcnt_ref,            # scalar prefetch (SMEM)
                    s_ref, xs_ref, xm_ref, w_ref, wloop_ref, bias_ref,
                    norm_ref, out_ref, *, num_rel, apply_relu):
    i = pl.program_id(0)
    kk = pl.program_id(1)
    last_kk = pl.num_programs(1) - 1

    # Init the resident f32 output block with self-loop message + bias
    # (once per output-row tile).
    @pl.when(kk == 0)
    def _():
        out_ref[...] = (
            jnp.dot(xs_ref[...], wloop_ref[...],
                    preferred_element_type=jnp.float32)
            + bias_ref[...])

    # Aggregate messages from this (non-empty) source-column tile.  Padded
    # grid steps (kk >= #non-empty tiles for this row tile) are skipped; their
    # block indices repeat the previous step so the S/X DMAs are elided too.
    @pl.when(kk < kcnt_ref[i])
    def _():
        xm = xm_ref[...]
        acc = jnp.zeros(out_ref.shape, jnp.float32)
        for r in range(num_rel):                       # static unroll over R
            # BDD message: one dense K=Dp MXU matmul per relation.
            msg = jnp.dot(xm, w_ref[r],
                          preferred_element_type=jnp.float32).astype(jnp.bfloat16)
            # Typed-adjacency counts (exact int8) -> bf16 for the MXU.
            s = s_ref[r].astype(jnp.float32).astype(jnp.bfloat16)
            acc = acc + jnp.dot(s, msg, preferred_element_type=jnp.float32)
        # Edge norm (1/in_deg of the destination) factored out of S: apply as
        # a per-destination-row scale.
        out_ref[...] += norm_ref[...] * acc

    if apply_relu:
        @pl.when(kk == last_kk)
        def _():
            out_ref[...] = jnp.maximum(out_ref[...], 0.0)


def rgcn_bdd_layer(x, graph, w_bd, w_loop, bias, *, apply_relu):
    """x: (Np, Dp) bf16.  graph: precomputed static-graph data (see
    precompute_graph).  Returns (Np, Dp) f32."""
    s, row_norm = graph["s"], graph["row_norm"]
    ktab, kcnt = graph["ktab"], graph["kcnt"]
    Np, Dp, tm, tk = graph["Np"], graph["Dp"], graph["tm"], graph["tk"]
    max_nnz = graph["max_nnz"]
    R = s.shape[0]

    kernel = functools.partial(rgcn_bdd_kernel, num_rel=R, apply_relu=apply_relu)
    return pl.pallas_call(
        kernel,
        out_shape=jax.ShapeDtypeStruct((Np, Dp), jnp.float32),
        grid_spec=pltpu.PrefetchScalarGridSpec(
            num_scalar_prefetch=2,                     # ktab, kcnt
            grid=(Np // tm, max_nnz),
            in_specs=[
                # S counts tile (R, tm, tk); source-col tile remapped through
                # the non-empty-tile table (tile-level sparsity).
                pl.BlockSpec((R, tm, tk), lambda i, kk, kt, kc: (0, i, kt[i, kk])),
                # X rows for the self-loop term (fetched once per row tile).
                pl.BlockSpec((tm, Dp), lambda i, kk, kt, kc: (i, 0)),
                # X rows for the message term (non-empty source-col tile).
                pl.BlockSpec((tk, Dp), lambda i, kk, kt, kc: (kt[i, kk], 0)),
                # Full block-diagonal weight stack, resident in VMEM.
                pl.BlockSpec((R, Dp, Dp), lambda i, kk, kt, kc: (0, 0, 0)),
                # Self-loop weight (resident).
                pl.BlockSpec((Dp, Dp), lambda i, kk, kt, kc: (0, 0)),
                # Bias (resident).
                pl.BlockSpec((1, Dp), lambda i, kk, kt, kc: (0, 0)),
                # Per-destination-row edge-norm scale.
                pl.BlockSpec((tm, 1), lambda i, kk, kt, kc: (i, 0)),
            ],
            out_specs=pl.BlockSpec((tm, Dp), lambda i, kk, kt, kc: (i, 0)),
        ),
        compiler_params=pltpu.CompilerParams(
            dimension_semantics=("parallel", "arbitrary"),
            vmem_limit_bytes=48 * 1024 * 1024),
    )(ktab, kcnt, s, x, x, w_bd, w_loop, bias, row_norm)


# ---------------------------------------------------------------------------
# Static-graph precompute (done ONCE, reused by both layers and every call).
# ---------------------------------------------------------------------------
def _round_up(n, m):
    return ((n + m - 1) // m) * m


def _pick_tile(n, candidates, min_tiles=1):
    for c in candidates:
        if c <= n and n % c == 0 and n // c >= min_tiles:
            return c
    for c in candidates:
        if c <= n and n % c == 0:
            return c
    return n


def precompute_graph(src, dst, etypes, norm, num_rels_x2, num_nodes, emb_dim):
    Np = _round_up(num_nodes, 128)       # lane-dense source dim of S
    Dp = _round_up(emb_dim, 128)         # lane-dense feature dim
    R = num_rels_x2

    # v7x megacore: prefer >= 2 output-row tiles on the parallel axis.
    tm = _pick_tile(Np, (512, 256, 128), min_tiles=2)
    tk = _pick_tile(Np, (1024, 512, 256, 128))
    # Keep double-buffered S block + resident W stack well inside VMEM
    # (64 MiB/TC on v7x; leave headroom).
    budget = 32 * 1024 * 1024
    while tk > 128 and 2 * R * tm * tk + 2 * R * Dp * Dp > budget:
        tk //= 2
    while tm > 128 and 2 * R * tm * tk + 2 * R * Dp * Dp > budget:
        tm //= 2

    # Typed-adjacency COUNTS (exact small ints) stored int8 to halve the
    # dominant HBM stream.  One-time precompute for a static graph, so the
    # int32 scatter intermediate is off the steady-state critical path.
    s = jnp.zeros((R, Np, Np), jnp.int32).at[etypes, dst, src].add(1)
    s = s.astype(jnp.int8)

    # Edge norm factored out of S: DGL usage passes norm = 1/in_deg(dst),
    # constant per destination row, applied as a per-row scale in the kernel.
    # TODO(synk): per-edge norms that vary within a destination would need S
    # to carry bf16 norm sums instead of int8 counts.
    row_norm = jnp.zeros((Np,), jnp.float32).at[dst].max(norm).reshape(Np, 1)

    # Tile-level sparsity tables: per output-row tile, the list of non-empty
    # source-column tiles (padded by repeating the last entry so padded grid
    # steps keep the same block index -> DMA elided, compute pl.when-skipped).
    num_i, num_k = Np // tm, Np // tk
    nz = np.asarray(jnp.any(
        (s != 0).reshape(R, num_i, tm, num_k, tk), axis=(0, 2, 4)))
    kcnt = nz.sum(axis=1).astype(np.int32)
    max_nnz = max(int(kcnt.max()), 1)
    ktab = np.zeros((num_i, max_nnz), np.int32)
    for i in range(num_i):
        ks = np.nonzero(nz[i])[0]
        if ks.size:
            ktab[i, :ks.size] = ks
            ktab[i, ks.size:] = ks[-1]

    return dict(s=s, row_norm=row_norm,
                ktab=jnp.asarray(ktab), kcnt=jnp.asarray(kcnt),
                Np=Np, Dp=Dp, tm=tm, tk=tk, max_nnz=max_nnz)


# ---------------------------------------------------------------------------
# Parameters & wrapper (glue / setup in plain JAX).
# ---------------------------------------------------------------------------
def init_params(key, num_entities, num_relations, embedding_dim, num_bases):
    D = embedding_dim
    R = num_relations * 2
    sub = D // num_bases
    k_emb, k_c1, k_c2 = jax.random.split(key, 3)

    # emb_e: xavier_normal, padding_idx=0 row zeroed (as nn.Embedding does).
    std_e = (2.0 / (num_entities + D)) ** 0.5
    emb_e = std_e * jax.random.normal(k_emb, (num_entities, D), jnp.float32)
    emb_e = emb_e.at[0].set(0.0)

    def conv_params(k):
        k1, k2 = jax.random.split(k, 2)
        w_bdd = (2.0 / (sub + sub)) ** 0.5 * jax.random.normal(
            k1, (R, num_bases, sub, sub), jnp.float32)
        w_loop = (2.0 / (D + D)) ** 0.5 * jax.random.normal(
            k2, (D, D), jnp.float32)
        bias = jnp.zeros((1, D), jnp.float32)   # DGL h_bias init = zeros
        return (w_bdd, w_loop, bias)

    return emb_e, conv_params(k_c1), conv_params(k_c2)


def _prep_conv(conv, Dp):
    """Expand per-block BDD weights into dense (R, Dp, Dp) block-diagonal bf16
    (off-diagonal blocks zero -> one K=Dp MXU matmul per relation); pad the
    self-loop weight / bias to Dp lanes."""
    # TODO(synk): on v7x, once S traffic is reduced, restore the true
    # block-diagonal structure instead of the dense DpxDp expansion to cut the
    # padded/zero MACs in X @ Wbd.
    w_bdd, w_loop, bias = conv
    R, B, sub, _ = w_bdd.shape
    D = B * sub
    w_bd = jnp.zeros((R, Dp, Dp), jnp.bfloat16)
    for b in range(B):
        w_bd = w_bd.at[:, b * sub:(b + 1) * sub, b * sub:(b + 1) * sub].set(
            w_bdd[:, b].astype(jnp.bfloat16))
    w_loop_p = jnp.zeros((Dp, Dp), jnp.bfloat16).at[:D, :D].set(
        w_loop.astype(jnp.bfloat16))
    bias_p = jnp.zeros((1, Dp), jnp.float32).at[:, :D].set(bias)
    return w_bd, w_loop_p, bias_p


def transe_forward(params, h, graph):
    emb_e, conv1, conv2 = params
    N = h.shape[0]
    D = emb_e.shape[1]
    Np, Dp = graph["Np"], graph["Dp"]

    # Embedding lookup (glue) + zero-padding to lane-dense (Np, Dp).
    x = jnp.take(emb_e, h, axis=0)                                   # (N, D)
    x_p = jnp.zeros((Np, Dp), jnp.float32).at[:N, :D].set(x)

    c1 = _prep_conv(conv1, Dp)
    c2 = _prep_conv(conv2, Dp)

    # conv1 activation=F.relu; the outer F.relu in TransE.forward is redundant
    # (relu(relu(x)) == relu(x)) and folded into the in-kernel relu.
    x_p = rgcn_bdd_layer(x_p.astype(jnp.bfloat16), graph, *c1, apply_relu=True)
    # TODO(synk): RelGraphConv dropout omitted (identity, eval-mode forward).
    x_p = rgcn_bdd_layer(x_p.astype(jnp.bfloat16), graph, *c2, apply_relu=False)
    return x_p[:N, :D]


# ---------------------------------------------------------------------------
# Pure-JAX reference (edge-wise DGL semantics) for a correctness check.
# ---------------------------------------------------------------------------
def reference_forward(params, h, src, dst, etypes, norm):
    emb_e, conv1, conv2 = params
    N = h.shape[0]
    x = emb_e[h]

    def layer(x, conv, relu):
        w_bdd, w_loop, bias = conv                      # (R,B,sub,sub),(D,D),(1,D)
        _, B, sub, _ = w_bdd.shape
        xb = x[src].reshape(-1, B, sub)                 # (E, B, sub)
        msg = jnp.einsum('ebs,ebst->ebt', xb, w_bdd[etypes]).reshape(-1, B * sub)
        msg = msg * norm[:, None]
        agg = jnp.zeros((N, B * sub), jnp.float32).at[dst].add(msg)
        out = agg + x @ w_loop + bias
        return jnp.maximum(out, 0.0) if relu else out

    x = layer(x, conv1, True)
    x = layer(x, conv2, False)
    return x


if __name__ == "__main__":
    key = jax.random.PRNGKey(0)
    num_entities, num_relations, num_bases, D = 50, 3, 4, 32
    N, E = 300, 600
    R = num_relations * 2

    k1, k2, k3, k4, kp = jax.random.split(key, 5)
    h = jax.random.randint(k1, (N,), 0, num_entities)
    # Sources clustered in the low node ids so some (row-tile, col-tile) S
    # blocks are empty and the tile-skip path is exercised.
    src = jax.random.randint(k2, (E,), 0, 140)
    dst = jax.random.randint(k3, (E,), 0, N)
    etypes = jax.random.randint(k4, (E,), 0, R)
    in_deg = jnp.zeros((N,), jnp.float32).at[dst].add(1.0)
    norm = 1.0 / jnp.maximum(in_deg[dst], 1.0)          # standard 1/in-degree norm

    params = init_params(kp, num_entities, num_relations, D, num_bases)
    # Static graph: typed adjacency / norm / sparsity tables built once.
    graph = precompute_graph(src, dst, etypes, norm, R, N, D)

    out = transe_forward(params, h, graph)
    jax.block_until_ready(out)
    assert out.shape == (N, D) and out.dtype == jnp.float32

    ref = reference_forward(params, h, src, dst, etypes, norm)
    err = float(jnp.max(jnp.abs(out - ref)))
    scale = float(jnp.max(jnp.abs(ref))) + 1e-6
    assert err <= 0.05 * scale + 0.05, f"mismatch: err={err}, scale={scale}"
    print("KERNEL_OK")
</pallas_src>

<mosaic_0001>
module attributes {stable_mosaic.version = 11 : i64} {
  func.func @rgcn_bdd_kernel(%arg0: i32, %arg1: i32, %arg2: memref<3x2xi32, #tpu.memory_space<smem>>, %arg3: memref<3xi32, #tpu.memory_space<smem>>, %arg4: memref<6x128x128xi8, #tpu.memory_space<vmem>>, %arg5: memref<128x128xbf16, #tpu.memory_space<vmem>>, %arg6: memref<128x128xbf16, #tpu.memory_space<vmem>>, %arg7: memref<6x128x128xbf16, #tpu.memory_space<vmem>>, %arg8: memref<128x128xbf16, #tpu.memory_space<vmem>>, %arg9: memref<1x128xf32, #tpu.memory_space<vmem>>, %arg10: memref<128x1xf32, #tpu.memory_space<vmem>>, %arg11: memref<128x128xf32, #tpu.memory_space<vmem>>) attributes {dimension_semantics = [#tpu.dimension_semantics<parallel>, #tpu.dimension_semantics<arbitrary>], iteration_bounds = array<i64: 3, 2>, scalar_prefetch = 2 : i64, scratch_operands = 0 : i64, tpu.core_type = #tpu.core_type<tc>, window_params = [{transform_indices = @transform_0, window_bounds = array<i64: 6, 128, 128>}, {transform_indices = @transform_1, window_bounds = array<i64: 128, 128>}, {transform_indices = @transform_2, window_bounds = array<i64: 128, 128>}, {pipeline_mode = #tpu.pipeline_mode<synchronous>, transform_indices = @transform_3, window_bounds = array<i64: 6, 128, 128>}, {pipeline_mode = #tpu.pipeline_mode<synchronous>, transform_indices = @transform_4, window_bounds = array<i64: 128, 128>}, {pipeline_mode = #tpu.pipeline_mode<synchronous>, transform_indices = @transform_5, window_bounds = array<i64: 1, 128>}, {transform_indices = @transform_6, window_bounds = array<i64: 128, 1>}, {transform_indices = @transform_7, window_bounds = array<i64: 128, 128>}]} {
    %c0_i32 = arith.constant 0 : i32
    %0 = arith.cmpi eq, %arg1, %c0_i32 : i32
    %1 = arith.extui %0 : i1 to i32
    %c0_i32_0 = arith.constant 0 : i32
    %2 = arith.cmpi ne, %1, %c0_i32_0 : i32
    scf.if %2 {
      %c0 = arith.constant 0 : index
      %c0_3 = arith.constant 0 : index
      %11 = vector.load %arg5[%c0, %c0_3] : memref<128x128xbf16, #tpu.memory_space<vmem>>, vector<128x128xbf16>
      %c0_4 = arith.constant 0 : index
      %c0_5 = arith.constant 0 : index
      %12 = vector.load %arg8[%c0_4, %c0_5] : memref<128x128xbf16, #tpu.memory_space<vmem>>, vector<128x128xbf16>
      %cst = arith.constant dense<0.000000e+00> : vector<128x128xf32>
      %13 = tpu.matmul %11, %12, %cst {dimension_numbers = #tpu.dot_dimension_numbers<[1], [0], [0], [1], [0, 0, 1, 1], [], []>} : vector<128x128xbf16>, vector<128x128xbf16>, vector<128x128xf32> -> vector<128x128xf32>
      %c0_6 = arith.constant 0 : index
      %c0_7 = arith.constant 0 : index
      %14 = vector.load %arg9[%c0_6, %c0_7] : memref<1x128xf32, #tpu.memory_space<vmem>>, vector<1x128xf32>
      %15 = vector.broadcast %14 : vector<1x128xf32> to vector<128x128xf32>
      %16 = arith.addf %13, %15 : vector<128x128xf32>
      %c0_8 = arith.constant 0 : index
      %c0_9 = arith.constant 0 : index
      %17 = vector.load %arg11[%c0_8, %c0_9] : memref<128x128xf32, #tpu.memory_space<vmem>>, vector<128x128xf32>
      tpu.vector_store %arg11[%c0_8, %c0_9], %16 {strides = array<i32>} : memref<128x128xf32, #tpu.memory_space<vmem>>, vector<128x128xf32>,
    } else {
    }
    %3 = arith.index_cast %arg0 : i32 to index
    %4 = memref.load %arg3[%3] : memref<3xi32, #tpu.memory_space<smem>>
    %5 = arith.cmpi slt, %arg1, %4 : i32
    %6 = arith.extui %5 : i1 to i32
    %c0_i32_1 = arith.constant 0 : i32
    %7 = arith.cmpi ne, %6, %c0_i32_1 : i32
    scf.if %7 {
      %c0 = arith.constant 0 : index
      %c0_3 = arith.constant 0 : index
      %11 = vector.load %arg6[%c0, %c0_3] : memref<128x128xbf16, #tpu.memory_space<vmem>>, vector<128x128xbf16>
      %cst = arith.constant 0.000000e+00 : f32
      %12 = vector.broadcast %cst : f32 to vector<128x128xf32>
      %c0_4 = arith.constant 0 : index
      %c0_5 = arith.constant 0 : index
      %c0_6 = arith.constant 0 : index
      %13 = vector.load %arg7[%c0_4, %c0_5, %c0_6] : memref<6x128x128xbf16, #tpu.memory_space<vmem>>, vector<1x128x128xbf16>
      %14 = vector.shape_cast %13 : vector<1x128x128xbf16> to vector<128x128xbf16>
      %cst_7 = arith.constant dense<0.000000e+00> : vector<128x128xf32>
      %15 = tpu.matmul %11, %14, %cst_7 {dimension_numbers = #tpu.dot_dimension_numbers<[1], [0], [0], [1], [0, 0, 1, 1], [], []>} : vector<128x128xbf16>, vector<128x128xbf16>, vector<128x128xf32> -> vector<128x128xf32>
      %16 = arith.truncf %15 : vector<128x128xf32> to vector<128x128xbf16>
      %c0_8 = arith.constant 0 : index
      %c0_9 = arith.constant 0 : index
      %c0_10 = arith.constant 0 : index
      %17 = vector.load %arg4[%c0_8, %c0_9, %c0_10] : memref<6x128x128xi8, #tpu.memory_space<vmem>>, vector<1x128x128xi8>
      %18 = vector.shape_cast %17 : vector<1x128x128xi8> to vector<128x128xi8>
      %19 = arith.sitofp %18 : vector<128x128xi8> to vector<128x128xf32>
      %20 = arith.truncf %19 : vector<128x128xf32> to vector<128x128xbf16>
      %cst_11 = arith.constant dense<0.000000e+00> : vector<128x128xf32>
      %21 = tpu.matmul %20, %16, %cst_11 {dimension_numbers = #tpu.dot_dimension_numbers<[1], [0], [0], [1], [0, 0, 1, 1], [], []>} : vector<128x128xbf16>, vector<128x128xbf16>, vector<128x128xf32> -> vector<128x128xf32>
      %22 = arith.addf %12, %21 : vector<128x128xf32>
      %c1 = arith.constant 1 : index
      %c0_12 = arith.constant 0 : index
      %c0_13 = arith.constant 0 : index
      %23 = vector.load %arg7[%c1, %c0_12, %c0_13] : memref<6x128x128xbf16, #tpu.memory_space<vmem>>, vector<1x128x128xbf16>
      %24 = vector.shape_cast %23 : vector<1x128x128xbf16> to vector<128x128xbf16>
      %cst_14 = arith.constant dense<0.000000e+00> : vector<128x128xf32>
      %25 = tpu.matmul %11, %24, %cst_14 {dimension_numbers = #tpu.dot_dimension_numbers<[1], [0], [0], [1], [0, 0, 1, 1], [], []>} : vector<128x128xbf16>, vector<128x128xbf16>, vector<128x128xf32> -> vector<128x128xf32>
      %26 = arith.truncf %25 : vector<128x128xf32> to vector<128x128xbf16>
      %c1_15 = arith.constant 1 : index
      %c0_16 = arith.constant 0 : index
      %c0_17 = arith.constant 0 : index
      %27 = vector.load %arg4[%c1_15, %c0_16, %c0_17] : memref<6x128x128xi8, #tpu.memory_space<vmem>>, vector<1x128x128xi8>
      %28 = vector.shape_cast %27 : vector<1x128x128xi8> to vector<128x128xi8>
      %29 = arith.sitofp %28 : vector<128x128xi8> to vector<128x128xf32>
      %30 = arith.truncf %29 : vector<128x128xf32> to vector<128x128xbf16>
      %cst_18 = arith.constant dense<0.000000e+00> : vector<128x128xf32>
      %31 = tpu.matmul %30, %26, %cst_18 {dimension_numbers = #tpu.dot_dimension_numbers<[1], [0], [0], [1], [0, 0, 1, 1], [], []>} : vector<128x128xbf16>, vector<128x128xbf16>, vector<128x128xf32> -> vector<128x128xf32>
      %32 = arith.addf %22, %31 : vector<128x128xf32>
      %c2 = arith.constant 2 : index
      %c0_19 = arith.constant 0 : index
      %c0_20 = arith.constant 0 : index
      %33 = vector.load %arg7[%c2, %c0_19, %c0_20] : memref<6x128x128xbf16, #tpu.memory_space<vmem>>, vector<1x128x128xbf16>
      %34 = vector.shape_cast %33 : vector<1x128x128xbf16> to vector<128x128xbf16>
      %cst_21 = arith.constant dense<0.000000e+00> : vector<128x128xf32>
      %35 = tpu.matmul %11, %34, %cst_21 {dimension_numbers = #tpu.dot_dimension_numbers<[1], [0], [0], [1], [0, 0, 1, 1], [], []>} : vector<128x128xbf16>, vector<128x128xbf16>, vector<128x128xf32> -> vector<128x128xf32>
      %36 = arith.truncf %35 : vector<128x128xf32> to vector<128x128xbf16>
      %c2_22 = arith.constant 2 : index
      %c0_23 = arith.constant 0 : index
      %c0_24 = arith.constant 0 : index
      %37 = vector.load %arg4[%c2_22, %c0_23, %c0_24] : memref<6x128x128xi8, #tpu.memory_space<vmem>>, vector<1x128x128xi8>
      %38 = vector.shape_cast %37 : vector<1x128x128xi8> to vector<128x128xi8>
      %39 = arith.sitofp %38 : vector<128x128xi8> to vector<128x128xf32>
      %40 = arith.truncf %39 : vector<128x128xf32> to vector<128x128xbf16>
      %cst_25 = arith.constant dense<0.000000e+00> : vector<128x128xf32>
      %41 = tpu.matmul %40, %36, %cst_25 {dimension_numbers = #tpu.dot_dimension_numbers<[1], [0], [0], [1], [0, 0, 1, 1], [], []>} : vector<128x128xbf16>, vector<128x128xbf16>, vector<128x128xf32> -> vector<128x128xf32>
      %42 = arith.addf %32, %41 : vector<128x128xf32>
      %c3 = arith.constant 3 : index
      %c0_26 = arith.constant 0 : index
      %c0_27 = arith.constant 0 : index
      %43 = vector.load %arg7[%c3, %c0_26, %c0_27] : memref<6x128x128xbf16, #tpu.memory_space<vmem>>, vector<1x128x128xbf16>
      %44 = vector.shape_cast %43 : vector<1x128x128xbf16> to vector<128x128xbf16>
      %cst_28 = arith.constant dense<0.000000e+00> : vector<128x128xf32>
      %45 = tpu.matmul %11, %44, %cst_28 {dimension_numbers = #tpu.dot_dimension_numbers<[1], [0], [0], [1], [0, 0, 1, 1], [], []>} : vector<128x128xbf16>, vector<128x128xbf16>, vector<128x128xf32> -> vector<128x128xf32>
      %46 = arith.truncf %45 : vector<128x128xf32> to vector<128x128xbf16>
      %c3_29 = arith.constant 3 : index
      %c0_30 = arith.constant 0 : index
      %c0_31 = arith.constant 0 : index
      %47 = vector.load %arg4[%c3_29, %c0_30, %c0_31] : memref<6x128x128xi8, #tpu.memory_space<vmem>>, vector<1x128x128xi8>
      %48 = vector.shape_cast %47 : vector<1x128x128xi8> to vector<128x128xi8>
      %49 = arith.sitofp %48 : vector<128x128xi8> to vector<128x128xf32>
      %50 = arith.truncf %49 : vector<128x128xf32> to vector<128x128xbf16>
      %cst_32 = arith.constant dense<0.000000e+00> : vector<128x128xf32>
      %51 = tpu.matmul %50, %46, %cst_32 {dimension_numbers = #tpu.dot_dimension_numbers<[1], [0], [0], [1], [0, 0, 1, 1], [], []>} : vector<128x128xbf16>, vector<128x128xbf16>, vector<128x128xf32> -> vector<128x128xf32>
      %52 = arith.addf %42, %51 : vector<128x128xf32>
      %c4 = arith.constant 4 : index
      %c0_33 = arith.constant 0 : index
      %c0_34 = arith.constant 0 : index
      %53 = vector.load %arg7[%c4, %c0_33, %c0_34] : memref<6x128x128xbf16, #tpu.memory_space<vmem>>, vector<1x128x128xbf16>
      %54 = vector.shape_cast %53 : vector<1x128x128xbf16> to vector<128x128xbf16>
      %cst_35 = arith.constant dense<0.000000e+00> : vector<128x128xf32>
      %55 = tpu.matmul %11, %54, %cst_35 {dimension_numbers = #tpu.dot_dimension_numbers<[1], [0], [0], [1], [0, 0, 1, 1], [], []>} : vector<128x128xbf16>, vector<128x128xbf16>, vector<128x128xf32> -> vector<128x128xf32>
      %56 = arith.truncf %55 : vector<128x128xf32> to vector<128x128xbf16>
      %c4_36 = arith.constant 4 : index
      %c0_37 = arith.constant 0 : index
      %c0_38 = arith.constant 0 : index
      %57 = vector.load %arg4[%c4_36, %c0_37, %c0_38] : memref<6x128x128xi8, #tpu.memory_space<vmem>>, vector<1x128x128xi8>
      %58 = vector.shape_cast %57 : vector<1x128x128xi8> to vector<128x128xi8>
      %59 = arith.sitofp %58 : vector<128x128xi8> to vector<128x128xf32>
      %60 = arith.truncf %59 : vector<128x128xf32> to vector<128x128xbf16>
      %cst_39 = arith.constant dense<0.000000e+00> : vector<128x128xf32>
      %61 = tpu.matmul %60, %56, %cst_39 {dimension_numbers = #tpu.dot_dimension_numbers<[1], [0], [0], [1], [0, 0, 1, 1], [], []>} : vector<128x128xbf16>, vector<128x128xbf16>, vector<128x128xf32> -> vector<128x128xf32>
      %62 = arith.addf %52, %61 : vector<128x128xf32>
      %c5 = arith.constant 5 : index
      %c0_40 = arith.constant 0 : index
      %c0_41 = arith.constant 0 : index
      %63 = vector.load %arg7[%c5, %c0_40, %c0_41] : memref<6x128x128xbf16, #tpu.memory_space<vmem>>, vector<1x128x128xbf16>
      %64 = vector.shape_cast %63 : vector<1x128x128xbf16> to vector<128x128xbf16>
      %cst_42 = arith.constant dense<0.000000e+00> : vector<128x128xf32>
      %65 = tpu.matmul %11, %64, %cst_42 {dimension_numbers = #tpu.dot_dimension_numbers<[1], [0], [0], [1], [0, 0, 1, 1], [], []>} : vector<128x128xbf16>, vector<128x128xbf16>, vector<128x128xf32> -> vector<128x128xf32>
      %66 = arith.truncf %65 : vector<128x128xf32> to vector<128x128xbf16>
      %c5_43 = arith.constant 5 : index
      %c0_44 = arith.constant 0 : index
      %c0_45 = arith.constant 0 : index
      %67 = vector.load %arg4[%c5_43, %c0_44, %c0_45] : memref<6x128x128xi8, #tpu.memory_space<vmem>>, vector<1x128x128xi8>
      %68 = vector.shape_cast %67 : vector<1x128x128xi8> to vector<128x128xi8>
      %69 = arith.sitofp %68 : vector<128x128xi8> to vector<128x128xf32>
      %70 = arith.truncf %69 : vector<128x128xf32> to vector<128x128xbf16>
      %cst_46 = arith.constant dense<0.000000e+00> : vector<128x128xf32>
      %71 = tpu.matmul %70, %66, %cst_46 {dimension_numbers = #tpu.dot_dimension_numbers<[1], [0], [0], [1], [0, 0, 1, 1], [], []>} : vector<128x128xbf16>, vector<128x128xbf16>, vector<128x128xf32> -> vector<128x128xf32>
      %72 = arith.addf %62, %71 : vector<128x128xf32>
      %c0_47 = arith.constant 0 : index
      %c0_48 = arith.constant 0 : index
      %73 = vector.load %arg11[%c0_47, %c0_48] : memref<128x128xf32, #tpu.memory_space<vmem>>, vector<128x128xf32>
      %c0_49 = arith.constant 0 : index
      %c0_50 = arith.constant 0 : index
      %74 = vector.load %arg10[%c0_49, %c0_50] : memref<128x1xf32, #tpu.memory_space<vmem>>, vector<128x1xf32>
      %75 = vector.broadcast %74 : vector<128x1xf32> to vector<128x128xf32>
      %76 = arith.mulf %75, %72 : vector<128x128xf32>
      %77 = arith.addf %73, %76 : vector<128x128xf32>
      %c0_51 = arith.constant 0 : index
      %c0_52 = arith.constant 0 : index
      %78 = vector.load %arg11[%c0_51, %c0_52] : memref<128x128xf32, #tpu.memory_space<vmem>>, vector<128x128xf32>
      tpu.vector_store %arg11[%c0_51, %c0_52], %77 {strides = array<i32>} : memref<128x128xf32, #tpu.memory_space<vmem>>, vector<128x128xf32>,
    } else {
    }
    %c1_i32 = arith.constant 1 : i32
    %8 = arith.cmpi eq, %arg1, %c1_i32 : i32
    %9 = arith.extui %8 : i1 to i32
    %c0_i32_2 = arith.constant 0 : i32
    %10 = arith.cmpi ne, %9, %c0_i32_2 : i32
    scf.if %10 {
      %c0 = arith.constant 0 : index
      %c0_3 = arith.constant 0 : index
      %11 = vector.load %arg11[%c0, %c0_3] : memref<128x128xf32, #tpu.memory_space<vmem>>, vector<128x128xf32>
      %cst = arith.constant 0.000000e+00 : f32
      %12 = vector.broadcast %cst : f32 to vector<128x128xf32>
      %13 = arith.maximumf %11, %12 : vector<128x128xf32>
      %c0_4 = arith.constant 0 : index
      %c0_5 = arith.constant 0 : index
      %14 = vector.load %arg11[%c0_4, %c0_5] : memref<128x128xf32, #tpu.memory_space<vmem>>, vector<128x128xf32>
      tpu.vector_store %arg11[%c0_4, %c0_5], %13 {strides = array<i32>} : memref<128x128xf32, #tpu.memory_space<vmem>>, vector<128x128xf32>,
    } else {
    }
    return
  }
  func.func @transform_0(%arg0: i32, %arg1: i32, %arg2: memref<3x2xi32, #tpu.memory_space<smem>>, %arg3: memref<3xi32, #tpu.memory_space<smem>>) -> (i32, i32, i32) {
    %0 = arith.index_cast %arg0 : i32 to index
    %1 = arith.index_cast %arg1 : i32 to index
    %2 = memref.load %arg2[%0, %1] : memref<3x2xi32, #tpu.memory_space<smem>>
    %c0_i32 = arith.constant 0 : i32
    %c0_i32_0 = arith.constant 0 : i32
    return %c0_i32, %arg0, %2 : i32, i32, i32
  }
  func.func @transform_1(%arg0: i32, %arg1: i32, %arg2: memref<3x2xi32, #tpu.memory_space<smem>>, %arg3: memref<3xi32, #tpu.memory_space<smem>>) -> (i32, i32) {
    %c0_i32 = arith.constant 0 : i32
    %c0_i32_0 = arith.constant 0 : i32
    return %arg0, %c0_i32 : i32, i32
  }
  func.func @transform_2(%arg0: i32, %arg1: i32, %arg2: memref<3x2xi32, #tpu.memory_space<smem>>, %arg3: memref<3xi32, #tpu.memory_space<smem>>) -> (i32, i32) {
    %0 = arith.index_cast %arg0 : i32 to index
    %1 = arith.index_cast %arg1 : i32 to index
    %2 = memref.load %arg2[%0, %1] : memref<3x2xi32, #tpu.memory_space<smem>>
    %c0_i32 = arith.constant 0 : i32
    %c0_i32_0 = arith.constant 0 : i32
    return %2, %c0_i32 : i32, i32
  }
  func.func @transform_3(%arg0: i32, %arg1: i32, %arg2: memref<3x2xi32, #tpu.memory_space<smem>>, %arg3: memref<3xi32, #tpu.memory_space<smem>>) -> (i32, i32, i32) {
    %c0_i32 = arith.constant 0 : i32
    %c0_i32_0 = arith.constant 0 : i32
    %c0_i32_1 = arith.constant 0 : i32
    %c0_i32_2 = arith.constant 0 : i32
    return %c0_i32, %c0_i32_0, %c0_i32_1 : i32, i32, i32
  }
  func.func @transform_4(%arg0: i32, %arg1: i32, %arg2: memref<3x2xi32, #tpu.memory_space<smem>>, %arg3: memref<3xi32, #tpu.memory_space<smem>>) -> (i32, i32) {
    %c0_i32 = arith.constant 0 : i32
    %c0_i32_0 = arith.constant 0 : i32
    %c0_i32_1 = arith.constant 0 : i32
    return %c0_i32, %c0_i32_0 : i32, i32
  }
  func.func @transform_5(%arg0: i32, %arg1: i32, %arg2: memref<3x2xi32, #tpu.memory_space<smem>>, %arg3: memref<3xi32, #tpu.memory_space<smem>>) -> (i32, i32) {
    %c0_i32 = arith.constant 0 : i32
    %c0_i32_0 = arith.constant 0 : i32
    %c0_i32_1 = arith.constant 0 : i32
    return %c0_i32, %c0_i32_0 : i32, i32
  }
  func.func @transform_6(%arg0: i32, %arg1: i32, %arg2: memref<3x2xi32, #tpu.memory_space<smem>>, %arg3: memref<3xi32, #tpu.memory_space<smem>>) -> (i32, i32) {
    %c0_i32 = arith.constant 0 : i32
    %c0_i32_0 = arith.constant 0 : i32
    return %arg0, %c0_i32 : i32, i32
  }
  func.func @transform_7(%arg0: i32, %arg1: i32, %arg2: memref<3x2xi32, #tpu.memory_space<smem>>, %arg3: memref<3xi32, #tpu.memory_space<smem>>) -> (i32, i32) {
    %c0_i32 = arith.constant 0 : i32
    %c0_i32_0 = arith.constant 0 : i32
    return %arg0, %c0_i32 : i32, i32
  }
}

</mosaic_0001>

<llo_original>
// kernel: tpu_custom_call.1
$region0: #{tpu_custom_call.1}
  #allocation0 [shape = 'u32[]', space=smem, size = 0x4, offset = 0x4, fixed_abs, tag = 'smem constant byte address 0x4 - core index']
  #allocation1 [shape = 'u32[144,128]{1,0:T(1,128)}', space=vmem, size = 0x12000, scoped, tag = 'internal scratch']
  #allocation2 [shape = 's32[1]{0}', space=sflag, size = 0x4, scoped, tag = 'scoped memory for tpu_custom_call.1']
  #allocation3 [shape = 'u8[2048]{0}', space=smem, size = 0x800, scoped, tag = 'prefetched SMEM operand 0']
  #allocation4 [shape = 'u8[512]{0}', space=smem, size = 0x200, scoped, tag = 'prefetched SMEM operand 1']
  #allocation14 [shape = 's32[]', space=sflag, size = 0x4, offset = 0, fixed_abs, tag = 'sflag constant byte address 0x0 - dummy sync flag']
  %s0 = inlined_call_operand.vmem [shape: s32[3,2], index: 0, kind: input, shape index: {}]
  %s1 = inlined_call_operand.vmem [shape: s32[3], index: 1, kind: input, shape index: {}]
  %s2 = inlined_call_operand.hbm [shape: s8[6,384,384], index: 2, kind: input, shape index: {}]
  %s3 = inlined_call_operand.hbm [shape: bf16[384,128], index: 3, kind: input, shape index: {}]
  %s4 = inlined_call_operand.hbm [shape: bf16[384,128], index: 4, kind: input, shape index: {}]
  %s5 = inlined_call_operand.vmem [shape: bf16[6,128,128], index: 5, kind: input, shape index: {}]
  %s6 = inlined_call_operand.hbm [shape: bf16[128,128], index: 6, kind: input, shape index: {}]
  %s7 = inlined_call_operand.vmem [shape: f32[1,128], index: 7, kind: input, shape index: {}]
  %s8 = inlined_call_operand.vmem [shape: f32[384,1], index: 8, kind: input, shape index: {}]
  %s9 = inlined_call_operand.hbm [shape: f32[384,128], index: 9, kind: output, shape index: {}]
  %s10 = sld [smem:[#allocation0]]
  $region89: #{tpu_custom_call.1} parent=0
    _
  %s12 = ssub.s32 1, %s10
  %s13 = scalar_select 0, %s12, %s10
  %s14 = sshll.u32 %s0, 4
  %s15 = int_to_ptr.vmem [resolvable:$true] %s14
  %17 = dma.vmem_to_smem %s15, 64, [#allocation3], [#allocation2]
  %s18 = sshll.u32 %s1, 4
  %s19 = int_to_ptr.vmem [resolvable:$true] %s18
  %21 = dma.vmem_to_smem %s19, 16, [#allocation4], [#allocation2]
  %22 = dma.done [#allocation2], 80
  %23 = sfence
  $region1: #{tpu_custom_call.1} parent=0
    #allocation5 [shape = 'u8[196608]{0}', space=vmem, size = 0x30000, scoped, tag = 'input window, operand 2']
    #allocation6 [shape = 's32[2]{0}', space=sflag, size = 0x8, scoped, tag = 'scoped memory for tpu_custom_call.1']
    #allocation7 [shape = 's32[2]{0}', space=sflag, size = 0x8, scoped, tag = 'scoped memory for tpu_custom_call.1']
    #allocation8 [shape = 'u8[65536]{0}', space=vmem, size = 0x10000, scoped, tag = 'input window, operand 3']
    #allocation9 [shape = 's32[2]{0}', space=sflag, size = 0x8, scoped, tag = 'scoped memory for tpu_custom_call.1']
    #allocation10 [shape = 'u8[65536]{0}', space=vmem, size = 0x10000, scoped, tag = 'input window, operand 4']
    #allocation11 [shape = 'u8[32768]{0}', space=vmem, size = 0x8000, scoped, tag = 'input window, operand 6, single buffered']
    #allocation12 [shape = 's32[1]{0}', space=sflag, size = 0x4, scoped, tag = 'scoped memory for tpu_custom_call.1']
    #allocation13 [shape = 'u8[131072]{0}', space=vmem, size = 0x20000, scoped, tag = 'output window, operand 0']
    %24 = vsyncpa [#allocation6], 0
    %s25 = scalar_lea.sflag [#allocation6], 1
    %26 = vsyncpa %s25, 0
    %27 = vsyncpa [#allocation9], 0
    %s28 = scalar_lea.sflag [#allocation9], 1
    %29 = vsyncpa %s28, 0
    %30 = vsyncpa [#allocation12], 0
    %31 = vsyncpa [#allocation7], 0
    %s32 = scalar_lea.sflag [#allocation7], 1
    %33 = vsyncpa %s32, 0
    loop: start=0, step=1, limit=8
    $region2: #{tpu_custom_call.1} parent=1 // loop_pre_header
      _
    $region3: #{tpu_custom_call.1} parent=1 // loop_header
      %s35 = sphi 0, %s39
      %p36 = scmp.ge.s32.totalorder %s35, 8
      %s42 = sphi 0, %s54
      %s43 = sphi 0, %s50
      %s44 = sphi 0, %s42
      %s45 = sphi 0, %s43
      %s46 = sphi 0, %s44
      %s47 = sphi 0, %s45
      %s75 = sphi 0, %s77
      %s78 = sphi 0, %s75
      %s79 = sphi 0, %s78
      %s95 = sphi 0, %s79
      %s101 = sphi 0, %s103
      %s104 = sphi 0, %s101
      %s105 = sphi 0, %s104
      %s121 = sphi 0, %s105
      %s143 = sphi 0, %s145
      %s146 = sphi 0, %s143
      %s147 = sphi 0, %s146
      %s163 = sphi 0, %s147
      %s167 = sphi 0, %s167
      %s169 = sphi 0, %s167
      %s170 = sphi 0, %s169
      %s184 = sphi 0, %s170
      %s188 = sphi 0, %s188
      %s190 = sphi 0, %s188
      %s191 = sphi 0, %s190
      %s205 = sphi 0, %s191
      %s209 = sphi 0, %s209
      %s211 = sphi 0, %s209
      %s212 = sphi 0, %s211
      %s226 = sphi 0, %s212
      %s232 = sphi 0, %s234
      %s235 = sphi 0, %s232
      %s236 = sphi 0, %s235
      %s252 = sphi 0, %s236
      %s258 = sphi 0, %s260
      %s261 = sphi 0, %s258
      %s262 = sphi 0, %s261
      %s278 = sphi 0, %s262
    $region4: #{tpu_custom_call.1} parent=1 // loop_header_branch
      %38 = sbr.rel (%p36) target = $region8
    $region5: #{tpu_custom_call.1} parent=1 // loop_body
      %s40 = ssub.s32 %s35, 1
      %s41 = ssub.s32 %s35, 2
      %s48 = sadd.s32 1, %s43
      %p49 = scmp.ge.s32.totalorder %s48, 2
      %s50 = scalar_select %p49, 0, %s48
      %s51 = sadd.s32 1, %s42
      %s52 = scalar_select %p49, %s51, %s42
      %p53 = scmp.ge.s32.totalorder %s52, 3
      %s54 = scalar_select %p53, 0, %s52
      %s55 = sshra.s32 %s43, 7
      %s56 = sand.u32 %s43, 127
      %s57 = sadd.s32 %s55, %s42
      %s58 = smul.u32 %s57, 128
      %s59 = sshra.s32 %s43, 7
      %s60 = sand.u32 %s43, 127
      %s61 = sadd.s32 %s58, %s60
      %s62 = sld [smem:[#allocation3 + %s61]]
      %s63 = sshra.s32 %s50, 7
      %s64 = sand.u32 %s50, 127
      %s65 = sadd.s32 %s63, %s54
      %s66 = smul.u32 %s65, 128
      %s67 = sshra.s32 %s50, 7
      %s68 = sand.u32 %s50, 127
      %s69 = sadd.s32 %s66, %s68
      %s70 = sld [smem:[#allocation3 + %s69]]
      %s71 = ssub.s32 %s42, %s54
      %s72 = ssub.s32 %s62, %s70
      %s73 = sor.u32 %s71, %s72
      %p74 = scmp.eq.s32.totalorder %s73, 0
      %s76 = sadd.s32 %s75, 1
      %s77 = scalar_select %p74, %s75, %s76
      %p80 = pneg %p74
      %p81 = scmp.eq.s32.totalorder %s35, 5
      %p82 = por %p80, %p81
      %p83 = scmp.ne.s32.totalorder %s75, %s78
      %p84 = scmp.eq.s32.totalorder %s35, 0
      %p85 = por %p83, %p84
      %p86 = scmp.ne.s32.totalorder %s75, %s78
      %p87 = scmp.eq.s32.totalorder %s40, 5
      %p88 = por %p86, %p87
      %p89 = scmp.ne.s32.totalorder %s78, %s79
      %p90 = scmp.eq.s32.totalorder %s40, 0
      %p91 = por %p89, %p90
      %p92 = scmp.ne.s32.totalorder %s78, %s79
      %p93 = scmp.eq.s32.totalorder %s41, 5
      %p94 = por %p92, %p93
      %p96 = scmp.ne.s32.totalorder %s79, %s95
      %p97 = scmp.eq.s32.totalorder %s41, 0
      %p98 = por %p96, %p97
      %s99 = ssub.s32 %s42, %s54
      %p100 = scmp.eq.s32.totalorder %s99, 0
      %s102 = sadd.s32 %s101, 1
      %s103 = scalar_select %p100, %s101, %s102
      %p106 = pneg %p100
      %p107 = scmp.eq.s32.totalorder %s35, 5
      %p108 = por %p106, %p107
      %p109 = scmp.ne.s32.totalorder %s101, %s104
      %p110 = scmp.eq.s32.totalorder %s35, 0
      %p111 = por %p109, %p110
      %p112 = scmp.ne.s32.totalorder %s101, %s104
      %p113 = scmp.eq.s32.totalorder %s40, 5
      %p114 = por %p112, %p113
      %p115 = scmp.ne.s32.totalorder %s104, %s105
      %p116 = scmp.eq.s32.totalorder %s40, 0
      %p117 = por %p115, %p116
      %p118 = scmp.ne.s32.totalorder %s104, %s105
      %p119 = scmp.eq.s32.totalorder %s41, 5
      %p120 = por %p118, %p119
      %p122 = scmp.ne.s32.totalorder %s105, %s121
      %p123 = scmp.eq.s32.totalorder %s41, 0
      %p124 = por %p122, %p123
      %s125 = sshra.s32 %s43, 7
      %s126 = sand.u32 %s43, 127
      %s127 = sadd.s32 %s125, %s42
      %s128 = smul.u32 %s127, 128
      %s129 = sshra.s32 %s43, 7
      %s130 = sand.u32 %s43, 127
      %s131 = sadd.s32 %s128, %s130
      %s132 = sld [smem:[#allocation3 + %s131]]
      %s133 = sshra.s32 %s50, 7
      %s134 = sand.u32 %s50, 127
      %s135 = sadd.s32 %s133, %s54
      %s136 = smul.u32 %s135, 128
      %s137 = sshra.s32 %s50, 7
      %s138 = sand.u32 %s50, 127
      %s139 = sadd.s32 %s136, %s138
      %s140 = sld [smem:[#allocation3 + %s139]]
      %s141 = ssub.s32 %s132, %s140
      %p142 = scmp.eq.s32.totalorder %s141, 0
      %s144 = sadd.s32 %s143, 1
      %s145 = scalar_select %p142, %s143, %s144
      %p148 = pneg %p142
      %p149 = scmp.eq.s32.totalorder %s35, 5
      %p150 = por %p148, %p149
      %p151 = scmp.ne.s32.totalorder %s143, %s146
      %p152 = scmp.eq.s32.totalorder %s35, 0
      %p153 = por %p151, %p152
      %p154 = scmp.ne.s32.totalorder %s143, %s146
      %p155 = scmp.eq.s32.totalorder %s40, 5
      %p156 = por %p154, %p155
      %p157 = scmp.ne.s32.totalorder %s146, %s147
      %p158 = scmp.eq.s32.totalorder %s40, 0
      %p159 = por %p157, %p158
      %p160 = scmp.ne.s32.totalorder %s146, %s147
      %p161 = scmp.eq.s32.totalorder %s41, 5
      %p162 = por %p160, %p161
      %p164 = scmp.ne.s32.totalorder %s147, %s163
      %p165 = scmp.eq.s32.totalorder %s41, 0
      %p166 = por %p164, %p165
      %s168 = sadd.s32 %s167, 1
      %p171 = scmp.eq.s32.totalorder %s35, 5
      %p172 = scmp.ne.s32.totalorder %s167, %s169
      %p173 = scmp.eq.s32.totalorder %s35, 0
      %p174 = por %p172, %p173
      %p175 = scmp.ne.s32.totalorder %s167, %s169
      %p176 = scmp.eq.s32.totalorder %s40, 5
      %p177 = por %p175, %p176
      %p178 = scmp.ne.s32.totalorder %s169, %s170
      %p179 = scmp.eq.s32.totalorder %s40, 0
      %p180 = por %p178, %p179
      %p181 = scmp.ne.s32.totalorder %s169, %s170
      %p182 = scmp.eq.s32.totalorder %s41, 5
      %p183 = por %p181, %p182
      %p185 = scmp.ne.s32.totalorder %s170, %s184
      %p186 = scmp.eq.s32.totalorder %s41, 0
      %p187 = por %p185, %p186
      %s189 = sadd.s32 %s188, 1
      %p192 = scmp.eq.s32.totalorder %s35, 5
      %p193 = scmp.ne.s32.totalorder %s188, %s190
      %p194 = scmp.eq.s32.totalorder %s35, 0
      %p195 = por %p193, %p194
      %p196 = scmp.ne.s32.totalorder %s188, %s190
      %p197 = scmp.eq.s32.totalorder %s40, 5
      %p198 = por %p196, %p197
      %p199 = scmp.ne.s32.totalorder %s190, %s191
      %p200 = scmp.eq.s32.totalorder %s40, 0
      %p201 = por %p199, %p200
      %p202 = scmp.ne.s32.totalorder %s190, %s191
      %p203 = scmp.eq.s32.totalorder %s41, 5
      %p204 = por %p202, %p203
      %p206 = scmp.ne.s32.totalorder %s191, %s205
      %p207 = scmp.eq.s32.totalorder %s41, 0
      %p208 = por %p206, %p207
      %s210 = sadd.s32 %s209, 1
      %p213 = scmp.eq.s32.totalorder %s35, 5
      %p214 = scmp.ne.s32.totalorder %s209, %s211
      %p215 = scmp.eq.s32.totalorder %s35, 0
      %p216 = por %p214, %p215
      %p217 = scmp.ne.s32.totalorder %s209, %s211
      %p218 = scmp.eq.s32.totalorder %s40, 5
      %p219 = por %p217, %p218
      %p220 = scmp.ne.s32.totalorder %s211, %s212
      %p221 = scmp.eq.s32.totalorder %s40, 0
      %p222 = por %p220, %p221
      %p223 = scmp.ne.s32.totalorder %s211, %s212
      %p224 = scmp.eq.s32.totalorder %s41, 5
      %p225 = por %p223, %p224
      %p227 = scmp.ne.s32.totalorder %s212, %s226
      %p228 = scmp.eq.s32.totalorder %s41, 0
      %p229 = por %p227, %p228
      %s230 = ssub.s32 %s42, %s54
      %p231 = scmp.eq.s32.totalorder %s230, 0
      %s233 = sadd.s32 %s232, 1
      %s234 = scalar_select %p231, %s232, %s233
      %p237 = pneg %p231
      %p238 = scmp.eq.s32.totalorder %s35, 5
      %p239 = por %p237, %p238
      %p240 = scmp.ne.s32.totalorder %s232, %s235
      %p241 = scmp.eq.s32.totalorder %s35, 0
      %p242 = por %p240, %p241
      %p243 = scmp.ne.s32.totalorder %s232, %s235
      %p244 = scmp.eq.s32.totalorder %s40, 5
      %p245 = por %p243, %p244
      %p246 = scmp.ne.s32.totalorder %s235, %s236
      %p247 = scmp.eq.s32.totalorder %s40, 0
      %p248 = por %p246, %p247
      %p249 = scmp.ne.s32.totalorder %s235, %s236
      %p250 = scmp.eq.s32.totalorder %s41, 5
      %p251 = por %p249, %p250
      %p253 = scmp.ne.s32.totalorder %s236, %s252
      %p254 = scmp.eq.s32.totalorder %s41, 0
      %p255 = por %p253, %p254
      %s256 = ssub.s32 %s42, %s54
      %p257 = scmp.eq.s32.totalorder %s256, 0
      %s259 = sadd.s32 %s258, 1
      %s260 = scalar_select %p257, %s258, %s259
      %p263 = pneg %p257
      %p264 = scmp.eq.s32.totalorder %s35, 5
      %p265 = por %p263, %p264
      %p266 = scmp.ne.s32.totalorder %s258, %s261
      %p267 = scmp.eq.s32.totalorder %s35, 0
      %p268 = por %p266, %p267
      %p269 = scmp.ne.s32.totalorder %s258, %s261
      %p270 = scmp.eq.s32.totalorder %s40, 5
      %p271 = por %p269, %p270
      %p272 = scmp.ne.s32.totalorder %s261, %s262
      %p273 = scmp.eq.s32.totalorder %s40, 0
      %p274 = por %p272, %p273
      %p275 = scmp.ne.s32.totalorder %s261, %s262
      %p276 = scmp.eq.s32.totalorder %s41, 5
      %p277 = por %p275, %p276
      %p279 = scmp.ne.s32.totalorder %s262, %s278
      %p280 = scmp.eq.s32.totalorder %s41, 0
      %p281 = por %p279, %p280
      %p282 = scmp.le.s32.totalorder 1, %s35
      %p283 = scmp.lt.s32.totalorder %s35, 7
      %p284 = pnand %p282, %p283
      %p285 = pneg %p284
      // Predicated region
      $region9: #{tpu_custom_call.1} parent=5 // pred_check
        _
      $region10: #{tpu_custom_call.1} parent=5 // pred_check_branch
        %287 = sbr.rel (%p284) target = $region12
      $region11: #{tpu_custom_call.1} parent=5 // pred_region
        %s288 = ssub.s32 %s35, 1
        // Predicated region
        $region13: #{tpu_custom_call.1} parent=11 // pred_check
          %p289 = pneg %p180
        $region14: #{tpu_custom_call.1} parent=11 // pred_check_branch
          %291 = sbr.rel (%p289) target = $region16
        $region15: #{tpu_custom_call.1} parent=11 // pred_region
          _
        $region16: #{tpu_custom_call.1} parent=11 // pred_fallthru
          _
        // Predicated region
        $region17: #{tpu_custom_call.1} parent=11 // pred_check
          %p292 = pneg %p201
        $region18: #{tpu_custom_call.1} parent=11 // pred_check_branch
          %294 = sbr.rel (%p292) target = $region20
        $region19: #{tpu_custom_call.1} parent=11 // pred_region
          %s296 = ssub.s32 1024, 1024
          %297 = vsyncadd [#allocation12], %s296
          %s298 = sshll.u32 [#allocation11], 4
          %s299 = int_to_ptr.vmem [resolvable:$true] %s298
          %304 = dma.hbm_to_vmem [thread:$0]  %s6, 1024, %s299, [#allocation12], 64, 64, 4
        $region20: #{tpu_custom_call.1} parent=11 // pred_fallthru
          _
        // Predicated region
        $region21: #{tpu_custom_call.1} parent=11 // pred_check
          %p305 = pneg %p222
        $region22: #{tpu_custom_call.1} parent=11 // pred_check_branch
          %307 = sbr.rel (%p305) target = $region24
        $region23: #{tpu_custom_call.1} parent=11 // pred_region
          _
        $region24: #{tpu_custom_call.1} parent=11 // pred_fallthru
          _
      $region12: #{tpu_custom_call.1} parent=5 // pred_fallthru
        _
      %p308 = scmp.lt.s32.totalorder %s35, 6
      // Predicated region
      $region25: #{tpu_custom_call.1} parent=5 // pred_check
        %p309 = pneg %p308
      $region26: #{tpu_custom_call.1} parent=5 // pred_check_branch
        %311 = sbr.rel (%p309) target = $region28
      $region27: #{tpu_custom_call.1} parent=5 // pred_region
        // Predicated region
        $region29: #{tpu_custom_call.1} parent=27 // pred_check
          %p312 = pneg %p85
        $region30: #{tpu_custom_call.1} parent=27 // pred_check_branch
          %314 = sbr.rel (%p312) target = $region32
        $region31: #{tpu_custom_call.1} parent=27 // pred_region
          #allocation15 [shape = 'u32[6]{0}', space=smem, size = 0x18, scoped, tag = 'DMA stride descriptor']
          %s315 = sand.u32 %s75, 1
          %s316 = scalar_lea.sflag [#allocation6], %s315
          %s317 = sand.u32 %s75, 1
          %s318 = smul.addr %s317, 192
          %s319 = scalar_lea.vmem [#allocation5], %s318
          %s320 = sshra.s32 %s43, 7
          %s321 = sand.u32 %s43, 127
          %s322 = sadd.s32 %s320, %s42
          %s323 = smul.u32 %s322, 128
          %s324 = sshra.s32 %s43, 7
          %s325 = sand.u32 %s43, 127
          %s326 = sadd.s32 %s323, %s325
          %s327 = sld [smem:[#allocation3 + %s326]]
          %s328 = smul.u32 4, %s42
          %s330 = ssub.s32 3072, 3072
          %331 = vsyncadd %s316, %s330
          %s332 = smul.addr %s328, 3
          %s333 = sadd.s32 %s327, %s332
          %s334 = smul.addr %s333, 128
          %s335 = scalar_lea.hbm %s2, %s334
          %s337 = sshll.u32 1, 14
          %s338 = sxor.u32 4294967295, %s337
          %s340 = sld [smem:[#allocation0]]
          %s341 = sadd.s32 2, %s340
          %s343 = sshll.u32 7, 26
          %s344 = sxor.u32 4294967295, %s343
          %s345 = sand.u32 0, %s344
          %s346 = sshll.u32 %s341, 26
          %s347 = sor.u32 %s345, %s346
          %s348 = sshll.u32 %s319, 4
          %s349 = int_to_ptr.vmem [resolvable:$true] %s348
          %355 = sst [smem:[#allocation15]] 4608
          %s356 = scalar_lea.smem [#allocation15], 1
          %357 = sst [smem:[%s356]] 512
          %s358 = scalar_lea.smem [#allocation15], 2
          %359 = sst [smem:[%s358]] 4
          %s360 = scalar_lea.smem [#allocation15], 3
          %361 = sst [smem:[%s360]] 384
          %s362 = scalar_lea.smem [#allocation15], 4
          %363 = sst [smem:[%s362]] 128
          %s364 = scalar_lea.smem [#allocation15], 5
          %365 = sst [smem:[%s364]] 8
          %367 = dma.general %s335, 3072, %s349, %s316, [#allocation14], [#allocation15], %s347, 0
        $region32: #{tpu_custom_call.1} parent=27 // pred_fallthru
          _
        // Predicated region
        $region33: #{tpu_custom_call.1} parent=27 // pred_check
          %p368 = pneg %p111
        $region34: #{tpu_custom_call.1} parent=27 // pred_check_branch
          %370 = sbr.rel (%p368) target = $region36
        $region35: #{tpu_custom_call.1} parent=27 // pred_region
          %s371 = sand.u32 %s35, 1
          %s372 = scalar_lea.sflag [#allocation9], %s371
          %s373 = sand.u32 %s101, 1
          %s374 = smul.addr %s373, 64
          %s375 = scalar_lea.vmem [#allocation8], %s374
          %s376 = smul.u32 16, %s42
          %s378 = ssub.s32 1024, 1024
          %379 = vsyncadd %s372, %s378
          %s380 = smul.addr %s376, 64
          %s381 = scalar_lea.hbm %s3, %s380
          %s382 = sshll.u32 %s375, 4
          %s383 = int_to_ptr.vmem [resolvable:$true] %s382
          %388 = dma.hbm_to_vmem [thread:$0]  %s381, 1024, %s383, %s372, 64, 64, 4
        $region36: #{tpu_custom_call.1} parent=27 // pred_fallthru
          _
        // Predicated region
        $region37: #{tpu_custom_call.1} parent=27 // pred_check
          %p389 = pneg %p153
        $region38: #{tpu_custom_call.1} parent=27 // pred_check_branch
          %391 = sbr.rel (%p389) target = $region40
        $region39: #{tpu_custom_call.1} parent=27 // pred_region
          %s392 = sand.u32 %s35, 1
          %s393 = scalar_lea.sflag [#allocation9], %s392
          %s394 = sand.u32 %s143, 1
          %s395 = smul.addr %s394, 64
          %s396 = scalar_lea.vmem [#allocation10], %s395
          %s397 = sshra.s32 %s43, 7
          %s398 = sand.u32 %s43, 127
          %s399 = sadd.s32 %s397, %s42
          %s400 = smul.u32 %s399, 128
          %s401 = sshra.s32 %s43, 7
          %s402 = sand.u32 %s43, 127
          %s403 = sadd.s32 %s400, %s402
          %s404 = sld [smem:[#allocation3 + %s403]]
          %s405 = smul.u32 16, %s404
          %s407 = ssub.s32 1024, 1024
          %408 = vsyncadd %s393, %s407
          %s409 = smul.addr %s405, 64
          %s410 = scalar_lea.hbm %s4, %s409
          %s411 = sshll.u32 %s396, 4
          %s412 = int_to_ptr.vmem [resolvable:$true] %s411
          %417 = dma.hbm_to_vmem [thread:$0]  %s410, 1024, %s412, %s393, 64, 64, 4
        $region40: #{tpu_custom_call.1} parent=27 // pred_fallthru
          _
        // Predicated region
        $region41: #{tpu_custom_call.1} parent=27 // pred_check
          %p418 = pneg %p242
        $region42: #{tpu_custom_call.1} parent=27 // pred_check_branch
          %420 = sbr.rel (%p418) target = $region44
        $region43: #{tpu_custom_call.1} parent=27 // pred_region
          %s421 = smul.u32 16, %s42
          %p422 = scmp.lt.s32.totalorder %s421, 47
          %s423 = scalar_select %p422, %s421, 47
          %s424 = smul.addr %s423, 8
          %s425 = scalar_lea.vmem %s8, %s424
          %s426 = smul.u32 16, %s42
        $region44: #{tpu_custom_call.1} parent=27 // pred_fallthru
          _
      $region28: #{tpu_custom_call.1} parent=5 // pred_fallthru
        _
      %p427 = scmp.le.s32.totalorder 1, %s35
      %p428 = scmp.lt.s32.totalorder %s35, 7
      %p429 = pnand %p427, %p428
      %p430 = pneg %p429
      // Predicated region
      $region45: #{tpu_custom_call.1} parent=5 // pred_check
        _
      $region46: #{tpu_custom_call.1} parent=5 // pred_check_branch
        %432 = sbr.rel (%p429) target = $region48
      $region47: #{tpu_custom_call.1} parent=5 // pred_region
        %s433 = ssub.s32 %s35, 1
        %s434 = sand.u32 %s78, 1
        %s435 = scalar_lea.sflag [#allocation6], %s434
        %s436 = sand.u32 %s78, 1
        %s437 = smul.addr %s436, 192
        %s438 = scalar_lea.vmem [#allocation5], %s437
        // Predicated region
        $region49: #{tpu_custom_call.1} parent=47 // pred_check
          %p439 = pneg %p91
        $region50: #{tpu_custom_call.1} parent=47 // pred_check_branch
          %441 = sbr.rel (%p439) target = $region52
        $region51: #{tpu_custom_call.1} parent=47 // pred_region
          %442 = dma.done %s435, 3072
        $region52: #{tpu_custom_call.1} parent=47 // pred_fallthru
          _
        %s443 = sand.u32 %s40, 1
        %s444 = scalar_lea.sflag [#allocation9], %s443
        %s445 = sand.u32 %s104, 1
        %s446 = smul.addr %s445, 64
        %s447 = scalar_lea.vmem [#allocation8], %s446
        // Predicated region
        $region53: #{tpu_custom_call.1} parent=47 // pred_check
          %p448 = pneg %p117
        $region54: #{tpu_custom_call.1} parent=47 // pred_check_branch
          %450 = sbr.rel (%p448) target = $region56
        $region55: #{tpu_custom_call.1} parent=47 // pred_region
          %451 = dma.done %s444, 1024
        $region56: #{tpu_custom_call.1} parent=47 // pred_fallthru
          _
        %s452 = sand.u32 %s40, 1
        %s453 = scalar_lea.sflag [#allocation9], %s452
        %s454 = sand.u32 %s146, 1
        %s455 = smul.addr %s454, 64
        %s456 = scalar_lea.vmem [#allocation10], %s455
        // Predicated region
        $region57: #{tpu_custom_call.1} parent=47 // pred_check
          %p457 = pneg %p159
        $region58: #{tpu_custom_call.1} parent=47 // pred_check_branch
          %459 = sbr.rel (%p457) target = $region60
        $region59: #{tpu_custom_call.1} parent=47 // pred_region
          %460 = dma.done %s453, 1024
        $region60: #{tpu_custom_call.1} parent=47 // pred_fallthru
          _
        // Predicated region
        $region61: #{tpu_custom_call.1} parent=47 // pred_check
          %p461 = pneg %p201
        $region62: #{tpu_custom_call.1} parent=47 // pred_check_branch
          %463 = sbr.rel (%p461) target = $region64
        $region63: #{tpu_custom_call.1} parent=47 // pred_region
          %464 = dma.done [#allocation12], 1024
        $region64: #{tpu_custom_call.1} parent=47 // pred_fallthru
          _
        %s465 = sand.u32 %s78, 1
        %s466 = scalar_lea.sflag [#allocation6], %s465
        %s467 = sand.u32 %s78, 1
        %s468 = smul.addr %s467, 192
        %s469 = scalar_lea.vmem [#allocation5], %s468
        %p470 = pneg %p91
        %p471 = pneg %p88
        %s472 = sand.u32 %s40, 1
        %s473 = scalar_lea.sflag [#allocation9], %s472
        %s474 = sand.u32 %s104, 1
        %s475 = smul.addr %s474, 64
        %s476 = scalar_lea.vmem [#allocation8], %s475
        %p477 = pneg %p117
        %p478 = pneg %p114
        %s479 = sand.u32 %s40, 1
        %s480 = scalar_lea.sflag [#allocation9], %s479
        %s481 = sand.u32 %s146, 1
        %s482 = smul.addr %s481, 64
        %s483 = scalar_lea.vmem [#allocation10], %s482
        %p484 = pneg %p159
        %p485 = pneg %p156
        %p486 = pneg %p180
        %p487 = pneg %p177
        %p488 = pneg %p201
        %p489 = pneg %p198
        %p490 = pneg %p222
        %p491 = pneg %p219
        %s492 = smul.u32 16, %s44
        %p493 = scmp.lt.s32.totalorder %s492, 47
        %s494 = scalar_select %p493, %s492, 47
        %s495 = smul.addr %s494, 8
        %s496 = scalar_lea.vmem %s8, %s495
        %p497 = pneg %p248
        %p498 = pneg %p245
        %p499 = pneg %p274
        %p500 = pneg %p271
        %s501 = sand.u32 %s261, 1
        %s502 = scalar_lea.sflag [#allocation7], %s501
        %s503 = sand.u32 %s261, 1
        %s504 = smul.addr %s503, 128
        %s505 = scalar_lea.vmem [#allocation13], %s504
        %s506 = sshra.s32 %s45, 7
        %s507 = sand.u32 %s45, 127
        %s508 = sadd.s32 %s506, %s44
        %s509 = smul.u32 %s508, 128
        %s510 = sshra.s32 %s45, 7
        %s511 = sand.u32 %s45, 127
        %s512 = sadd.s32 %s509, %s511
        %s513 = sld [smem:[#allocation3 + %s512]]
        %s514 = smul.u32 4, %s44
        %s515 = smul.u32 16, %s44
        %s516 = sshra.s32 %s45, 7
        %s517 = sand.u32 %s45, 127
        %s518 = sadd.s32 %s516, %s44
        %s519 = smul.u32 %s518, 128
        %s520 = sshra.s32 %s45, 7
        %s521 = sand.u32 %s45, 127
        %s522 = sadd.s32 %s519, %s521
        %s523 = sld [smem:[#allocation3 + %s522]]
        %s524 = smul.u32 16, %s523
        %s525 = smul.u32 16, %s44
        %p526 = scmp.lt.s32.totalorder %s525, 47
        %s527 = scalar_select %p526, %s525, 47
        %s528 = smul.addr %s527, 8
        %s529 = scalar_lea.vmem %s8, %s528
        %s530 = smul.u32 16, %s44
        %s531 = smul.u32 16, %s44
        %p533 = scmp.eq.s32.totalorder %s45, 0
        // Predicated region
        $region65: #{tpu_custom_call.1} parent=47 // pred_check
          %p534 = pneg %p533
        $region66: #{tpu_custom_call.1} parent=47 // pred_check_branch
          %536 = sbr.rel (%p534) target = $region68
        $region67: #{tpu_custom_call.1} parent=47 // pred_region
          %v537 = vld [vmem:[%s447] sm:$0xf]
          %v538 = vld [vmem:[%s447 + $0x4] sm:$0xf]
          %v539 = vld [vmem:[%s447 + $0x8] sm:$0xf]
          %v540 = vld [vmem:[%s447 + $0xc] sm:$0xf]
          %v541 = vld [vmem:[%s447 + $0x10] sm:$0xf]
          %v542 = vld [vmem:[%s447 + $0x14] sm:$0xf]
          %v543 = vld [vmem:[%s447 + $0x18] sm:$0xf]
          %v544 = vld [vmem:[%s447 + $0x1c] sm:$0xf]
          %v545 = vld [vmem:[%s447 + $0x20] sm:$0xf]
          %v546 = vld [vmem:[%s447 + $0x24] sm:$0xf]
          %v547 = vld [vmem:[%s447 + $0x28] sm:$0xf]
          %v548 = vld [vmem:[%s447 + $0x2c] sm:$0xf]
          %v549 = vld [vmem:[%s447 + $0x30] sm:$0xf]
          %v550 = vld [vmem:[%s447 + $0x34] sm:$0xf]
          %v551 = vld [vmem:[%s447 + $0x38] sm:$0xf]
          %v552 = vld [vmem:[%s447 + $0x3c] sm:$0xf]
          %v553 = vld [vmem:[#allocation11] sm:$0xf]
          %v554 = vld [vmem:[#allocation11 + $0x4] sm:$0xf]
          %v555 = vld [vmem:[#allocation11 + $0x8] sm:$0xf]
          %v556 = vld [vmem:[#allocation11 + $0xc] sm:$0xf]
          %v557 = vld [vmem:[#allocation11 + $0x10] sm:$0xf]
          %v558 = vld [vmem:[#allocation11 + $0x14] sm:$0xf]
          %v559 = vld [vmem:[#allocation11 + $0x18] sm:$0xf]
          %v560 = vld [vmem:[#allocation11 + $0x1c] sm:$0xf]
          %v561 = vld [vmem:[#allocation11 + $0x20] sm:$0xf]
          %v562 = vld [vmem:[#allocation11 + $0x24] sm:$0xf]
          %v563 = vld [vmem:[#allocation11 + $0x28] sm:$0xf]
          %v564 = vld [vmem:[#allocation11 + $0x2c] sm:$0xf]
          %v565 = vld [vmem:[#allocation11 + $0x30] sm:$0xf]
          %v566 = vld [vmem:[#allocation11 + $0x34] sm:$0xf]
          %v567 = vld [vmem:[#allocation11 + $0x38] sm:$0xf]
          %v568 = vld [vmem:[#allocation11 + $0x3c] sm:$0xf]
          %v569 = vld [vmem:[%s7] sm:$0x1]
          %v571 = vlaneseq
          %v572 = vshrl.u32 %v571, 7
          %v573 = vsub.s32 0, %v572
          %v574 = vrot.slane %v569, %v573
          %v592 = vunpack.c.l.b16 %v537
          %v593 = vunpack.c.l.b16 %v538
          %v594 = vunpack.c.l.b16 %v539
          %v595 = vunpack.c.l.b16 %v540
          %v596 = vunpack.c.l.b16 %v541
          %v597 = vunpack.c.l.b16 %v542
          %v598 = vunpack.c.l.b16 %v543
          %v599 = vunpack.c.l.b16 %v544
          %v600 = vunpack.c.l.b16 %v545
          %v601 = vunpack.c.l.b16 %v546
          %v602 = vunpack.c.l.b16 %v547
          %v603 = vunpack.c.l.b16 %v548
          %v604 = vunpack.c.l.b16 %v549
          %v605 = vunpack.c.l.b16 %v550
          %v606 = vunpack.c.l.b16 %v551
          %v607 = vunpack.c.l.b16 %v552
          %v608 = vpack.c.b16 %v593, %v592
          %v609 = vpack.c.b16 %v595, %v594
          %v610 = vpack.c.b16 %v597, %v596
          %v611 = vpack.c.b16 %v599, %v598
          %v612 = vpack.c.b16 %v601, %v600
          %v613 = vpack.c.b16 %v603, %v602
          %v614 = vpack.c.b16 %v605, %v604
          %v615 = vpack.c.b16 %v607, %v606
          %v640 = vunpack.c.l.b16 %v553
          %v641 = vunpack.c.l.b16 %v554
          %v642 = vunpack.c.l.b16 %v555
          %v643 = vunpack.c.l.b16 %v556
          %v644 = vunpack.c.l.b16 %v557
          %v645 = vunpack.c.l.b16 %v558
          %v646 = vunpack.c.l.b16 %v559
          %v647 = vunpack.c.l.b16 %v560
          %v648 = vunpack.c.l.b16 %v561
          %v649 = vunpack.c.l.b16 %v562
          %v650 = vunpack.c.l.b16 %v563
          %v651 = vunpack.c.l.b16 %v564
          %v652 = vunpack.c.l.b16 %v565
          %v653 = vunpack.c.l.b16 %v566
          %v654 = vunpack.c.l.b16 %v567
          %v655 = vunpack.c.l.b16 %v568
          %v656 = vpack.c.b16 %v641, %v640
          %v657 = vpack.c.b16 %v643, %v642
          %v658 = vpack.c.b16 %v645, %v644
          %v659 = vpack.c.b16 %v647, %v646
          %v660 = vpack.c.b16 %v649, %v648
          %v661 = vpack.c.b16 %v651, %v650
          %v662 = vpack.c.b16 %v653, %v652
          %v663 = vpack.c.b16 %v655, %v654
          %672 = vmatprep.subr.bf16.mxu0 0
          %673 = vmatpush1.bf16.msra.mxu0 %v656
          %674 = vmatprep.subr.bf16.mxu0 0
          %675 = vmatpush1.bf16.msra.mxu0 %v657
          %676 = vmatprep.subr.bf16.mxu0 0
          %677 = vmatpush1.bf16.msra.mxu0 %v658
          %678 = vmatprep.subr.bf16.mxu0 0
          %679 = vmatpush1.bf16.msra.mxu0 %v659
          %680 = vmatprep.subr.bf16.mxu0 0
          %681 = vmatpush1.bf16.msra.mxu0 %v660
          %682 = vmatprep.subr.bf16.mxu0 0
          %683 = vmatpush1.bf16.msra.mxu0 %v661
          %684 = vmatprep.subr.bf16.mxu0 0
          %685 = vmatpush1.bf16.msra.mxu0 %v662
          %686 = vmatprep.subr.bf16.mxu0 0
          %687 = vmatpush1.bf16.msra.mxu0 %v663
          %688 = vmatprep.subr.bf16.mxu0 0
          %689 = vmatpush1.bf16.msra.mxu0 0
          %690 = vmatprep.subr.bf16.mxu0 0
          %691 = vmatpush1.bf16.msra.mxu0 0
          %692 = vmatprep.subr.bf16.mxu0 0
          %693 = vmatpush1.bf16.msra.mxu0 0
          %694 = vmatprep.subr.bf16.mxu0 0
          %695 = vmatpush1.bf16.msra.mxu0 0
          %696 = vmatprep.subr.bf16.mxu0 0
          %697 = vmatpush1.bf16.msra.mxu0 0
          %698 = vmatprep.subr.bf16.mxu0 0
          %699 = vmatpush1.bf16.msra.mxu0 0
          %700 = vmatprep.subr.bf16.mxu0 0
          %701 = vmatpush1.bf16.msra.mxu0 0
          %702 = vmatprep.subr.bf16.mxu0 0
          %703 = vmatpush1.bf16.msra.mxu0 0
          %704 = vmatprep.mubr.bf16.mxu0 0
          %705 = vmatmul.mubr.bf16.gmra.mrb[0].mxu0 %v608
          %v706 = vpop.f32.mrb[0].mxu0
          %v707 = vadd.f32 %v574, %v706
          %v708 = vpop.f32.mrb[0].mxu0
          %v709 = vpop.f32.mrb[0].mxu0
          %v710 = vadd.f32 %v574, %v709
          %v711 = vpop.f32.mrb[0].mxu0
          %712 = vmatprep.mubr.bf16.mxu0 0
          %713 = vmatmul.mubr.bf16.gmra.mrb[0].mxu0 %v609
          %v714 = vpop.f32.mrb[0].mxu0
          %v715 = vadd.f32 %v574, %v714
          %v716 = vpop.f32.mrb[0].mxu0
          %v717 = vpop.f32.mrb[0].mxu0
          %v718 = vadd.f32 %v574, %v717
          %v719 = vpop.f32.mrb[0].mxu0
          %720 = vmatprep.mubr.bf16.mxu0 0
          %721 = vmatmul.mubr.bf16.gmra.mrb[0].mxu0 %v610
          %v722 = vpop.f32.mrb[0].mxu0
          %v723 = vadd.f32 %v574, %v722
          %v724 = vpop.f32.mrb[0].mxu0
          %v725 = vpop.f32.mrb[0].mxu0
          %v726 = vadd.f32 %v574, %v725
          %v727 = vpop.f32.mrb[0].mxu0
          %728 = vmatprep.mubr.bf16.mxu0 0
          %729 = vmatmul.mubr.bf16.gmra.mrb[0].mxu0 %v611
          %v730 = vpop.f32.mrb[0].mxu0
          %v731 = vadd.f32 %v574, %v730
          %v732 = vpop.f32.mrb[0].mxu0
          %v733 = vpop.f32.mrb[0].mxu0
          %v734 = vadd.f32 %v574, %v733
          %v735 = vpop.f32.mrb[0].mxu0
          %736 = vmatprep.mubr.bf16.mxu0 0
          %737 = vmatmul.mubr.bf16.gmra.mrb[0].mxu0 %v612
          %v738 = vpop.f32.mrb[0].mxu0
          %v739 = vadd.f32 %v574, %v738
          %v740 = vpop.f32.mrb[0].mxu0
          %v741 = vpop.f32.mrb[0].mxu0
          %v742 = vadd.f32 %v574, %v741
          %v743 = vpop.f32.mrb[0].mxu0
          %744 = vmatprep.mubr.bf16.mxu0 0
          %745 = vmatmul.mubr.bf16.gmra.mrb[0].mxu0 %v613
          %v746 = vpop.f32.mrb[0].mxu0
          %v747 = vadd.f32 %v574, %v746
          %v748 = vpop.f32.mrb[0].mxu0
          %v749 = vpop.f32.mrb[0].mxu0
          %v750 = vadd.f32 %v574, %v749
          %v751 = vpop.f32.mrb[0].mxu0
          %752 = vmatprep.mubr.bf16.mxu0 0
          %753 = vmatmul.mubr.bf16.gmra.mrb[0].mxu0 %v614
          %v754 = vpop.f32.mrb[0].mxu0
          %v755 = vadd.f32 %v574, %v754
          %v756 = vpop.f32.mrb[0].mxu0
          %v757 = vpop.f32.mrb[0].mxu0
          %v758 = vadd.f32 %v574, %v757
          %v759 = vpop.f32.mrb[0].mxu0
          %760 = vmatprep.mubr.bf16.mxu0 0
          %761 = vmatmul.mubr.bf16.gmra.mrb[0].mxu0 %v615
          %v762 = vpop.f32.mrb[0].mxu0
          %v763 = vadd.f32 %v574, %v762
          %v764 = vpop.f32.mrb[0].mxu0
          %v765 = vpop.f32.mrb[0].mxu0
          %v766 = vadd.f32 %v574, %v765
          %v767 = vpop.f32.mrb[0].mxu0
          %768 = vdwg.mxu0
          %769 = vst [vmem:[%s505] sm:$0xff] %v707
          %770 = vst [vmem:[%s505 + $0x8] sm:$0xff] %v710
          %771 = vst [vmem:[%s505 + $0x10] sm:$0xff] %v715
          %772 = vst [vmem:[%s505 + $0x18] sm:$0xff] %v718
          %773 = vst [vmem:[%s505 + $0x20] sm:$0xff] %v723
          %774 = vst [vmem:[%s505 + $0x28] sm:$0xff] %v726
          %775 = vst [vmem:[%s505 + $0x30] sm:$0xff] %v731
          %776 = vst [vmem:[%s505 + $0x38] sm:$0xff] %v734
          %777 = vst [vmem:[%s505 + $0x40] sm:$0xff] %v739
          %778 = vst [vmem:[%s505 + $0x48] sm:$0xff] %v742
          %779 = vst [vmem:[%s505 + $0x50] sm:$0xff] %v747
          %780 = vst [vmem:[%s505 + $0x58] sm:$0xff] %v750
          %781 = vst [vmem:[%s505 + $0x60] sm:$0xff] %v755
          %782 = vst [vmem:[%s505 + $0x68] sm:$0xff] %v758
          %783 = vst [vmem:[%s505 + $0x70] sm:$0xff] %v763
          %784 = vst [vmem:[%s505 + $0x78] sm:$0xff] %v766
        $region68: #{tpu_custom_call.1} parent=47 // pred_fallthru
          _
        %s785 = sld [smem:[#allocation4 + %s44]]
        %p786 = scmp.lt.s32.totalorder %s45, %s785
        // Predicated region
        $region69: #{tpu_custom_call.1} parent=47 // pred_check
          %p787 = pneg %p786
        $region70: #{tpu_custom_call.1} parent=47 // pred_check_branch
          %789 = sbr.rel (%p787) target = $region72
        $region71: #{tpu_custom_call.1} parent=47 // pred_region
          %v790 = vld [vmem:[%s456] sm:$0xf]
          %v791 = vld [vmem:[%s456 + $0x4] sm:$0xf]
          %v792 = vld [vmem:[%s456 + $0x8] sm:$0xf]
          %v793 = vld [vmem:[%s456 + $0xc] sm:$0xf]
          %v794 = vld [vmem:[%s456 + $0x10] sm:$0xf]
          %v795 = vld [vmem:[%s456 + $0x14] sm:$0xf]
          %v796 = vld [vmem:[%s456 + $0x18] sm:$0xf]
          %v797 = vld [vmem:[%s456 + $0x1c] sm:$0xf]
          %v798 = vld [vmem:[%s456 + $0x20] sm:$0xf]
          %v799 = vld [vmem:[%s456 + $0x24] sm:$0xf]
          %v800 = vld [vmem:[%s456 + $0x28] sm:$0xf]
          %v801 = vld [vmem:[%s456 + $0x2c] sm:$0xf]
          %v802 = vld [vmem:[%s456 + $0x30] sm:$0xf]
          %v803 = vld [vmem:[%s456 + $0x34] sm:$0xf]
          %v804 = vld [vmem:[%s456 + $0x38] sm:$0xf]
          %v805 = vld [vmem:[%s456 + $0x3c] sm:$0xf]
          %v806 = vld [vmem:[%s5] sm:$0xf]
          %v807 = vld [vmem:[%s5 + $0x4] sm:$0xf]
          %v808 = vld [vmem:[%s5 + $0x8] sm:$0xf]
          %v809 = vld [vmem:[%s5 + $0xc] sm:$0xf]
          %v810 = vld [vmem:[%s5 + $0x10] sm:$0xf]
          %v811 = vld [vmem:[%s5 + $0x14] sm:$0xf]
          %v812 = vld [vmem:[%s5 + $0x18] sm:$0xf]
          %v813 = vld [vmem:[%s5 + $0x1c] sm:$0xf]
          %v814 = vld [vmem:[%s5 + $0x20] sm:$0xf]
          %v815 = vld [vmem:[%s5 + $0x24] sm:$0xf]
          %v816 = vld [vmem:[%s5 + $0x28] sm:$0xf]
          %v817 = vld [vmem:[%s5 + $0x2c] sm:$0xf]
          %v818 = vld [vmem:[%s5 + $0x30] sm:$0xf]
          %v819 = vld [vmem:[%s5 + $0x34] sm:$0xf]
          %v820 = vld [vmem:[%s5 + $0x38] sm:$0xf]
          %v821 = vld [vmem:[%s5 + $0x3c] sm:$0xf]
          %v838 = vunpack.c.l.b16 %v790
          %v839 = vunpack.c.l.b16 %v791
          %v840 = vunpack.c.l.b16 %v792
          %v841 = vunpack.c.l.b16 %v793
          %v842 = vunpack.c.l.b16 %v794
          %v843 = vunpack.c.l.b16 %v795
          %v844 = vunpack.c.l.b16 %v796
          %v845 = vunpack.c.l.b16 %v797
          %v846 = vunpack.c.l.b16 %v798
          %v847 = vunpack.c.l.b16 %v799
          %v848 = vunpack.c.l.b16 %v800
          %v849 = vunpack.c.l.b16 %v801
          %v850 = vunpack.c.l.b16 %v802
          %v851 = vunpack.c.l.b16 %v803
          %v852 = vunpack.c.l.b16 %v804
          %v853 = vunpack.c.l.b16 %v805
          %v854 = vpack.c.b16 %v839, %v838
          %v855 = vpack.c.b16 %v841, %v840
          %v856 = vpack.c.b16 %v843, %v842
          %v857 = vpack.c.b16 %v845, %v844
          %v858 = vpack.c.b16 %v847, %v846
          %v859 = vpack.c.b16 %v849, %v848
          %v860 = vpack.c.b16 %v851, %v850
          %v861 = vpack.c.b16 %v853, %v852
          %v886 = vunpack.c.l.b16 %v806
          %v887 = vunpack.c.l.b16 %v807
          %v888 = vunpack.c.l.b16 %v808
          %v889 = vunpack.c.l.b16 %v809
          %v890 = vunpack.c.l.b16 %v810
          %v891 = vunpack.c.l.b16 %v811
          %v892 = vunpack.c.l.b16 %v812
          %v893 = vunpack.c.l.b16 %v813
          %v894 = vunpack.c.l.b16 %v814
          %v895 = vunpack.c.l.b16 %v815
          %v896 = vunpack.c.l.b16 %v816
          %v897 = vunpack.c.l.b16 %v817
          %v898 = vunpack.c.l.b16 %v818
          %v899 = vunpack.c.l.b16 %v819
          %v900 = vunpack.c.l.b16 %v820
          %v901 = vunpack.c.l.b16 %v821
          %v902 = vpack.c.b16 %v887, %v886
          %v903 = vpack.c.b16 %v889, %v888
          %v904 = vpack.c.b16 %v891, %v890
          %v905 = vpack.c.b16 %v893, %v892
          %v906 = vpack.c.b16 %v895, %v894
          %v907 = vpack.c.b16 %v897, %v896
          %v908 = vpack.c.b16 %v899, %v898
          %v909 = vpack.c.b16 %v901, %v900
          %918 = vmatprep.subr.bf16.mxu0 0
          %919 = vmatpush1.bf16.msra.mxu0 %v902
          %920 = vmatprep.subr.bf16.mxu0 0
          %921 = vmatpush1.bf16.msra.mxu0 %v903
          %922 = vmatprep.subr.bf16.mxu0 0
          %923 = vmatpush1.bf16.msra.mxu0 %v904
          %924 = vmatprep.subr.bf16.mxu0 0
          %925 = vmatpush1.bf16.msra.mxu0 %v905
          %926 = vmatprep.subr.bf16.mxu0 0
          %927 = vmatpush1.bf16.msra.mxu0 %v906
          %928 = vmatprep.subr.bf16.mxu0 0
          %929 = vmatpush1.bf16.msra.mxu0 %v907
          %930 = vmatprep.subr.bf16.mxu0 0
          %931 = vmatpush1.bf16.msra.mxu0 %v908
          %932 = vmatprep.subr.bf16.mxu0 0
          %933 = vmatpush1.bf16.msra.mxu0 %v909
          %934 = vmatprep.subr.bf16.mxu0 0
          %935 = vmatpush1.bf16.msra.mxu0 0
          %936 = vmatprep.subr.bf16.mxu0 0
          %937 = vmatpush1.bf16.msra.mxu0 0
          %938 = vmatprep.subr.bf16.mxu0 0
          %939 = vmatpush1.bf16.msra.mxu0 0
          %940 = vmatprep.subr.bf16.mxu0 0
          %941 = vmatpush1.bf16.msra.mxu0 0
          %942 = vmatprep.subr.bf16.mxu0 0
          %943 = vmatpush1.bf16.msra.mxu0 0
          %944 = vmatprep.subr.bf16.mxu0 0
          %945 = vmatpush1.bf16.msra.mxu0 0
          %946 = vmatprep.subr.bf16.mxu0 0
          %947 = vmatpush1.bf16.msra.mxu0 0
          %948 = vmatprep.subr.bf16.mxu0 0
          %949 = vmatpush1.bf16.msra.mxu0 0
          %950 = vmatprep.mubr.bf16.mxu0 0
          %951 = vmatmul.mubr.bf16.gmra.mrb[0].mxu0 %v854
          %v952 = vpop.f32.mrb[0].mxu0
          %v953 = vadd.f32 0.0, %v952
          %v954 = vpop.f32.mrb[0].mxu0
          %v955 = vpop.f32.mrb[0].mxu0
          %v956 = vadd.f32 0.0, %v955
          %v957 = vpop.f32.mrb[0].mxu0
          %958 = vmatprep.mubr.bf16.mxu0 0
          %959 = vmatmul.mubr.bf16.gmra.mrb[0].mxu0 %v855
          %v960 = vpop.f32.mrb[0].mxu0
          %v961 = vadd.f32 0.0, %v960
          %v962 = vpop.f32.mrb[0].mxu0
          %v963 = vpop.f32.mrb[0].mxu0
          %v964 = vadd.f32 0.0, %v963
          %v965 = vpop.f32.mrb[0].mxu0
          %966 = vmatprep.mubr.bf16.mxu0 0
          %967 = vmatmul.mubr.bf16.gmra.mrb[0].mxu0 %v856
          %v968 = vpop.f32.mrb[0].mxu0
          %v969 = vadd.f32 0.0, %v968
          %v970 = vpop.f32.mrb[0].mxu0
          %v971 = vpop.f32.mrb[0].mxu0
          %v972 = vadd.f32 0.0, %v971
          %v973 = vpop.f32.mrb[0].mxu0
          %974 = vmatprep.mubr.bf16.mxu0 0
          %975 = vmatmul.mubr.bf16.gmra.mrb[0].mxu0 %v857
          %v976 = vpop.f32.mrb[0].mxu0
          %v977 = vadd.f32 0.0, %v976
          %v978 = vpop.f32.mrb[0].mxu0
          %v979 = vpop.f32.mrb[0].mxu0
          %v980 = vadd.f32 0.0, %v979
          %v981 = vpop.f32.mrb[0].mxu0
          %982 = vmatprep.mubr.bf16.mxu0 0
          %983 = vmatmul.mubr.bf16.gmra.mrb[0].mxu0 %v858
          %v984 = vpop.f32.mrb[0].mxu0
          %v985 = vadd.f32 0.0, %v984
          %v986 = vpop.f32.mrb[0].mxu0
          %v987 = vpop.f32.mrb[0].mxu0
          %v988 = vadd.f32 0.0, %v987
          %v989 = vpop.f32.mrb[0].mxu0
          %990 = vmatprep.mubr.bf16.mxu0 0
          %991 = vmatmul.mubr.bf16.gmra.mrb[0].mxu0 %v859
          %v992 = vpop.f32.mrb[0].mxu0
          %v993 = vadd.f32 0.0, %v992
          %v994 = vpop.f32.mrb[0].mxu0
          %v995 = vpop.f32.mrb[0].mxu0
          %v996 = vadd.f32 0.0, %v995
          %v997 = vpop.f32.mrb[0].mxu0
          %998 = vmatprep.mubr.bf16.mxu0 0
          %999 = vmatmul.mubr.bf16.gmra.mrb[0].mxu0 %v860
          %v1000 = vpop.f32.mrb[0].mxu0
          %v1001 = vadd.f32 0.0, %v1000
          %v1002 = vpop.f32.mrb[0].mxu0
          %v1003 = vpop.f32.mrb[0].mxu0
          %v1004 = vadd.f32 0.0, %v1003
          %v1005 = vpop.f32.mrb[0].mxu0
          %1006 = vmatprep.mubr.bf16.mxu0 0
          %1007 = vmatmul.mubr.bf16.gmra.mrb[0].mxu0 %v861
          %v1008 = vpop.f32.mrb[0].mxu0
          %v1009 = vadd.f32 0.0, %v1008
          %v1010 = vpop.f32.mrb[0].mxu0
          %v1011 = vpop.f32.mrb[0].mxu0
          %v1012 = vadd.f32 0.0, %v1011
          %v1013 = vpop.f32.mrb[0].mxu0
          %1014 = vdwg.mxu0
          %v1015 = vpack.c.bf16 %v956, %v953
          %v1016 = vpack.c.bf16 %v964, %v961
          %v1017 = vpack.c.bf16 %v972, %v969
          %v1018 = vpack.c.bf16 %v980, %v977
          %v1019 = vpack.c.bf16 %v988, %v985
          %v1020 = vpack.c.bf16 %v996, %v993
          %v1021 = vpack.c.bf16 %v1004, %v1001
          %v1022 = vpack.c.bf16 %v1012, %v1009
          %v1023 = vld [vmem:[%s438] sm:$0xff]
          %v1024 = vld [vmem:[%s438 + $0x8] sm:$0xff]
          %v1025 = vld [vmem:[%s438 + $0x10] sm:$0xff]
          %v1026 = vld [vmem:[%s438 + $0x18] sm:$0xff]
          %v1027 = vunpack.c.l.s8.bf16 %v1023
          %v1028 = vunpack.c.h.s8.bf16 %v1023
          %v1029 = vunpack.c.l.s8.bf16 %v1024
          %v1030 = vunpack.c.h.s8.bf16 %v1024
          %v1031 = vunpack.c.l.s8.bf16 %v1025
          %v1032 = vunpack.c.h.s8.bf16 %v1025
          %v1033 = vunpack.c.l.s8.bf16 %v1026
          %v1034 = vunpack.c.h.s8.bf16 %v1026
          %s1035 = scalar_lea.vmem %s5, 64
          %v1036 = vld [vmem:[%s1035] sm:$0xf]
          %v1037 = vld [vmem:[%s1035 + $0x4] sm:$0xf]
          %v1038 = vld [vmem:[%s1035 + $0x8] sm:$0xf]
          %v1039 = vld [vmem:[%s1035 + $0xc] sm:$0xf]
          %v1040 = vld [vmem:[%s1035 + $0x10] sm:$0xf]
          %v1041 = vld [vmem:[%s1035 + $0x14] sm:$0xf]
          %v1042 = vld [vmem:[%s1035 + $0x18] sm:$0xf]
          %v1043 = vld [vmem:[%s1035 + $0x1c] sm:$0xf]
          %v1044 = vld [vmem:[%s1035 + $0x20] sm:$0xf]
          %v1045 = vld [vmem:[%s1035 + $0x24] sm:$0xf]
          %v1046 = vld [vmem:[%s1035 + $0x28] sm:$0xf]
          %v1047 = vld [vmem:[%s1035 + $0x2c] sm:$0xf]
          %v1048 = vld [vmem:[%s1035 + $0x30] sm:$0xf]
          %v1049 = vld [vmem:[%s1035 + $0x34] sm:$0xf]
          %v1050 = vld [vmem:[%s1035 + $0x38] sm:$0xf]
          %v1051 = vld [vmem:[%s1035 + $0x3c] sm:$0xf]
          %v1068 = vunpack.c.l.b16 %v1036
          %v1069 = vunpack.c.l.b16 %v1037
          %v1070 = vunpack.c.l.b16 %v1038
          %v1071 = vunpack.c.l.b16 %v1039
          %v1072 = vunpack.c.l.b16 %v1040
          %v1073 = vunpack.c.l.b16 %v1041
          %v1074 = vunpack.c.l.b16 %v1042
          %v1075 = vunpack.c.l.b16 %v1043
          %v1076 = vunpack.c.l.b16 %v1044
          %v1077 = vunpack.c.l.b16 %v1045
          %v1078 = vunpack.c.l.b16 %v1046
          %v1079 = vunpack.c.l.b16 %v1047
          %v1080 = vunpack.c.l.b16 %v1048
          %v1081 = vunpack.c.l.b16 %v1049
          %v1082 = vunpack.c.l.b16 %v1050
          %v1083 = vunpack.c.l.b16 %v1051
          %v1084 = vpack.c.b16 %v1069, %v1068
          %v1085 = vpack.c.b16 %v1071, %v1070
          %v1086 = vpack.c.b16 %v1073, %v1072
          %v1087 = vpack.c.b16 %v1075, %v1074
          %v1088 = vpack.c.b16 %v1077, %v1076
          %v1089 = vpack.c.b16 %v1079, %v1078
          %v1090 = vpack.c.b16 %v1081, %v1080
          %v1091 = vpack.c.b16 %v1083, %v1082
          %1100 = vmatprep.subr.bf16.mxu0 0
          %1101 = vmatpush1.bf16.msra.mxu0 %v1084
          %1102 = vmatprep.subr.bf16.mxu0 0
          %1103 = vmatpush1.bf16.msra.mxu0 %v1085
          %1104 = vmatprep.subr.bf16.mxu0 0
          %1105 = vmatpush1.bf16.msra.mxu0 %v1086
          %1106 = vmatprep.subr.bf16.mxu0 0
          %1107 = vmatpush1.bf16.msra.mxu0 %v1087
          %1108 = vmatprep.subr.bf16.mxu0 0
          %1109 = vmatpush1.bf16.msra.mxu0 %v1088
          %1110 = vmatprep.subr.bf16.mxu0 0
          %1111 = vmatpush1.bf16.msra.mxu0 %v1089
          %1112 = vmatprep.subr.bf16.mxu0 0
          %1113 = vmatpush1.bf16.msra.mxu0 %v1090
          %1114 = vmatprep.subr.bf16.mxu0 0
          %1115 = vmatpush1.bf16.msra.mxu0 %v1091
          %1116 = vmatprep.subr.bf16.mxu0 0
          %1117 = vmatpush1.bf16.msra.mxu0 0
          %1118 = vmatprep.subr.bf16.mxu0 0
          %1119 = vmatpush1.bf16.msra.mxu0 0
          %1120 = vmatprep.subr.bf16.mxu0 0
          %1121 = vmatpush1.bf16.msra.mxu0 0
          %1122 = vmatprep.subr.bf16.mxu0 0
          %1123 = vmatpush1.bf16.msra.mxu0 0
          %1124 = vmatprep.subr.bf16.mxu0 0
          %1125 = vmatpush1.bf16.msra.mxu0 0
          %1126 = vmatprep.subr.bf16.mxu0 0
          %1127 = vmatpush1.bf16.msra.mxu0 0
          %1128 = vmatprep.subr.bf16.mxu0 0
          %1129 = vmatpush1.bf16.msra.mxu0 0
          %1130 = vmatprep.subr.bf16.mxu0 0
          %1131 = vmatpush1.bf16.msra.mxu0 0
          %1132 = vmatprep.mubr.bf16.mxu0 0
          %1133 = vmatmul.mubr.bf16.gmra.mrb[0].mxu0 %v854
          %v1134 = vpop.f32.mrb[0].mxu0
          %v1135 = vadd.f32 0.0, %v1134
          %v1136 = vpop.f32.mrb[0].mxu0
          %v1137 = vpop.f32.mrb[0].mxu0
          %v1138 = vadd.f32 0.0, %v1137
          %v1139 = vpop.f32.mrb[0].mxu0
          %1140 = vmatprep.mubr.bf16.mxu0 0
          %1141 = vmatmul.mubr.bf16.gmra.mrb[0].mxu0 %v855
          %v1142 = vpop.f32.mrb[0].mxu0
          %v1143 = vadd.f32 0.0, %v1142
          %v1144 = vpop.f32.mrb[0].mxu0
          %v1145 = vpop.f32.mrb[0].mxu0
          %v1146 = vadd.f32 0.0, %v1145
          %v1147 = vpop.f32.mrb[0].mxu0
          %1148 = vmatprep.mubr.bf16.mxu0 0
          %1149 = vmatmul.mubr.bf16.gmra.mrb[0].mxu0 %v856
          %v1150 = vpop.f32.mrb[0].mxu0
          %v1151 = vadd.f32 0.0, %v1150
          %v1152 = vpop.f32.mrb[0].mxu0
          %v1153 = vpop.f32.mrb[0].mxu0
          %v1154 = vadd.f32 0.0, %v1153
          %v1155 = vpop.f32.mrb[0].mxu0
          %1156 = vmatprep.mubr.bf16.mxu0 0
          %1157 = vmatmul.mubr.bf16.gmra.mrb[0].mxu0 %v857
          %v1158 = vpop.f32.mrb[0].mxu0
          %v1159 = vadd.f32 0.0, %v1158
          %v1160 = vpop.f32.mrb[0].mxu0
          %v1161 = vpop.f32.mrb[0].mxu0
          %v1162 = vadd.f32 0.0, %v1161
          %v1163 = vpop.f32.mrb[0].mxu0
          %1164 = vmatprep.mubr.bf16.mxu0 0
          %1165 = vmatmul.mubr.bf16.gmra.mrb[0].mxu0 %v858
          %v1166 = vpop.f32.mrb[0].mxu0
          %v1167 = vadd.f32 0.0, %v1166
          %v1168 = vpop.f32.mrb[0].mxu0
          %v1169 = vpop.f32.mrb[0].mxu0
          %v1170 = vadd.f32 0.0, %v1169
          %v1171 = vpop.f32.mrb[0].mxu0
          %1172 = vmatprep.mubr.bf16.mxu0 0
          %1173 = vmatmul.mubr.bf16.gmra.mrb[0].mxu0 %v859
          %v1174 = vpop.f32.mrb[0].mxu0
          %v1175 = vadd.f32 0.0, %v1174
          %v1176 = vpop.f32.mrb[0].mxu0
          %v1177 = vpop.f32.mrb[0].mxu0
          %v1178 = vadd.f32 0.0, %v1177
          %v1179 = vpop.f32.mrb[0].mxu0
          %1180 = vmatprep.mubr.bf16.mxu0 0
          %1181 = vmatmul.mubr.bf16.gmra.mrb[0].mxu0 %v860
          %v1182 = vpop.f32.mrb[0].mxu0
          %v1183 = vadd.f32 0.0, %v1182
          %v1184 = vpop.f32.mrb[0].mxu0
          %v1185 = vpop.f32.mrb[0].mxu0
          %v1186 = vadd.f32 0.0, %v1185
          %v1187 = vpop.f32.mrb[0].mxu0
          %1188 = vmatprep.mubr.bf16.mxu0 0
          %1189 = vmatmul.mubr.bf16.gmra.mrb[0].mxu0 %v861
          %v1190 = vpop.f32.mrb[0].mxu0
          %v1191 = vadd.f32 0.0, %v1190
          %v1192 = vpop.f32.mrb[0].mxu0
          %v1193 = vpop.f32.mrb[0].mxu0
          %v1194 = vadd.f32 0.0, %v1193
          %v1195 = vpop.f32.mrb[0].mxu0
          %1196 = vdwg.mxu0
          %v1197 = vpack.c.bf16 %v1138, %v1135
          %v1198 = vpack.c.bf16 %v1146, %v1143
          %v1199 = vpack.c.bf16 %v1154, %v1151
          %v1200 = vpack.c.bf16 %v1162, %v1159
          %v1201 = vpack.c.bf16 %v1170, %v1167
          %v1202 = vpack.c.bf16 %v1178, %v1175
          %v1203 = vpack.c.bf16 %v1186, %v1183
          %v1204 = vpack.c.bf16 %v1194, %v1191
          %s1205 = scalar_lea.vmem %s438, 32 [#allocation5]
          %v1206 = vld [vmem:[%s1205] sm:$0xff]
          %v1207 = vld [vmem:[%s1205 + $0x8] sm:$0xff]
          %v1208 = vld [vmem:[%s1205 + $0x10] sm:$0xff]
          %v1209 = vld [vmem:[%s1205 + $0x18] sm:$0xff]
          %v1210 = vunpack.c.l.s8.bf16 %v1206
          %v1211 = vunpack.c.h.s8.bf16 %v1206
          %v1212 = vunpack.c.l.s8.bf16 %v1207
          %v1213 = vunpack.c.h.s8.bf16 %v1207
          %v1214 = vunpack.c.l.s8.bf16 %v1208
          %v1215 = vunpack.c.h.s8.bf16 %v1208
          %v1216 = vunpack.c.l.s8.bf16 %v1209
          %v1217 = vunpack.c.h.s8.bf16 %v1209
          %1218 = vmatprep.subr.bf16.mxu0 0
          %1219 = vmatpush1.bf16.msra.mxu0 %v1197
          %1220 = vmatprep.subr.bf16.mxu0 0
          %1221 = vmatpush1.bf16.msra.mxu0 %v1198
          %1222 = vmatprep.subr.bf16.mxu0 0
          %1223 = vmatpush1.bf16.msra.mxu0 %v1199
          %1224 = vmatprep.subr.bf16.mxu0 0
          %1225 = vmatpush1.bf16.msra.mxu0 %v1200
          %1226 = vmatprep.subr.bf16.mxu0 0
          %1227 = vmatpush1.bf16.msra.mxu0 %v1201
          %1228 = vmatprep.subr.bf16.mxu0 0
          %1229 = vmatpush1.bf16.msra.mxu0 %v1202
          %1230 = vmatprep.subr.bf16.mxu0 0
          %1231 = vmatpush1.bf16.msra.mxu0 %v1203
          %1232 = vmatprep.subr.bf16.mxu0 0
          %1233 = vmatpush1.bf16.msra.mxu0 %v1204
          %1234 = vmatprep.subr.bf16.mxu0 0
          %1235 = vmatpush1.bf16.msra.mxu0 0
          %1236 = vmatprep.subr.bf16.mxu0 0
          %1237 = vmatpush1.bf16.msra.mxu0 0
          %1238 = vmatprep.subr.bf16.mxu0 0
          %1239 = vmatpush1.bf16.msra.mxu0 0
          %1240 = vmatprep.subr.bf16.mxu0 0
          %1241 = vmatpush1.bf16.msra.mxu0 0
          %1242 = vmatprep.subr.bf16.mxu0 0
          %1243 = vmatpush1.bf16.msra.mxu0 0
          %1244 = vmatprep.subr.bf16.mxu0 0
          %1245 = vmatpush1.bf16.msra.mxu0 0
          %1246 = vmatprep.subr.bf16.mxu0 0
          %1247 = vmatpush1.bf16.msra.mxu0 0
          %1248 = vmatprep.subr.bf16.mxu0 0
          %1249 = vmatpush1.bf16.msra.mxu0 0
          %1250 = vmatprep.mubr.bf16.mxu0 0
          %1251 = vmatmul.mubr.bf16.gmra.mrb[0].mxu0 %v1210
          %v1252 = vpop.f32.mrb[0].mxu0
          %v1253 = vadd.f32 0.0, %v1252
          %v1254 = vpop.f32.mrb[0].mxu0
          %v1255 = vpop.f32.mrb[0].mxu0
          %v1256 = vadd.f32 0.0, %v1255
          %v1257 = vpop.f32.mrb[0].mxu0
          %1258 = vmatprep.mubr.bf16.mxu0 0
          %1259 = vmatmul.mubr.bf16.gmra.mrb[0].mxu0 %v1211
          %v1260 = vpop.f32.mrb[0].mxu0
          %v1261 = vadd.f32 0.0, %v1260
          %v1262 = vpop.f32.mrb[0].mxu0
          %v1263 = vpop.f32.mrb[0].mxu0
          %v1264 = vadd.f32 0.0, %v1263
          %v1265 = vpop.f32.mrb[0].mxu0
          %1266 = vmatprep.mubr.bf16.mxu0 0
          %1267 = vmatmul.mubr.bf16.gmra.mrb[0].mxu0 %v1212
          %v1268 = vpop.f32.mrb[0].mxu0
          %v1269 = vadd.f32 0.0, %v1268
          %v1270 = vpop.f32.mrb[0].mxu0
          %v1271 = vpop.f32.mrb[0].mxu0
          %v1272 = vadd.f32 0.0, %v1271
          %v1273 = vpop.f32.mrb[0].mxu0
          %1274 = vmatprep.mubr.bf16.mxu0 0
          %1275 = vmatmul.mubr.bf16.gmra.mrb[0].mxu0 %v1213
          %v1276 = vpop.f32.mrb[0].mxu0
          %v1277 = vadd.f32 0.0, %v1276
          %v1278 = vpop.f32.mrb[0].mxu0
          %v1279 = vpop.f32.mrb[0].mxu0
          %v1280 = vadd.f32 0.0, %v1279
          %v1281 = vpop.f32.mrb[0].mxu0
          %1282 = vmatprep.mubr.bf16.mxu0 0
          %1283 = vmatmul.mubr.bf16.gmra.mrb[0].mxu0 %v1214
          %v1284 = vpop.f32.mrb[0].mxu0
          %v1285 = vadd.f32 0.0, %v1284
          %v1286 = vpop.f32.mrb[0].mxu0
          %v1287 = vpop.f32.mrb[0].mxu0
          %v1288 = vadd.f32 0.0, %v1287
          %v1289 = vpop.f32.mrb[0].mxu0
          %1290 = vmatprep.mubr.bf16.mxu0 0
          %1291 = vmatmul.mubr.bf16.gmra.mrb[0].mxu0 %v1215
          %v1292 = vpop.f32.mrb[0].mxu0
          %v1293 = vadd.f32 0.0, %v1292
          %v1294 = vpop.f32.mrb[0].mxu0
          %v1295 = vpop.f32.mrb[0].mxu0
          %v1296 = vadd.f32 0.0, %v1295
          %v1297 = vpop.f32.mrb[0].mxu0
          %1298 = vmatprep.mubr.bf16.mxu0 0
          %1299 = vmatmul.mubr.bf16.gmra.mrb[0].mxu0 %v1216
          %v1300 = vpop.f32.mrb[0].mxu0
          %v1301 = vadd.f32 0.0, %v1300
          %v1302 = vpop.f32.mrb[0].mxu0
          %v1303 = vpop.f32.mrb[0].mxu0
          %v1304 = vadd.f32 0.0, %v1303
          %v1305 = vpop.f32.mrb[0].mxu0
          %1306 = vmatprep.mubr.bf16.mxu0 0
          %1307 = vmatmul.mubr.bf16.gmra.mrb[0].mxu0 %v1217
          %v1308 = vpop.f32.mrb[0].mxu0
          %v1309 = vadd.f32 0.0, %v1308
          %v1310 = vpop.f32.mrb[0].mxu0
          %v1311 = vpop.f32.mrb[0].mxu0
          %v1312 = vadd.f32 0.0, %v1311
          %v1313 = vpop.f32.mrb[0].mxu0
          %1314 = vdwg.mxu0
          %1315 = vmatprep.subr.bf16.mxu0 0
          %1316 = vmatpush1.bf16.msra.mxu0 %v1015
          %1317 = vmatprep.subr.bf16.mxu0 0
          %1318 = vmatpush1.bf16.msra.mxu0 %v1016
          %1319 = vmatprep.subr.bf16.mxu0 0
          %1320 = vmatpush1.bf16.msra.mxu0 %v1017
          %1321 = vmatprep.subr.bf16.mxu0 0
          %1322 = vmatpush1.bf16.msra.mxu0 %v1018
          %1323 = vmatprep.subr.bf16.mxu0 0
          %1324 = vmatpush1.bf16.msra.mxu0 %v1019
          %1325 = vmatprep.subr.bf16.mxu0 0
          %1326 = vmatpush1.bf16.msra.mxu0 %v1020
          %1327 = vmatprep.subr.bf16.mxu0 0
          %1328 = vmatpush1.bf16.msra.mxu0 %v1021
          %1329 = vmatprep.subr.bf16.mxu0 0
          %1330 = vmatpush1.bf16.msra.mxu0 %v1022
          %1331 = vmatprep.subr.bf16.mxu0 0
          %1332 = vmatpush1.bf16.msra.mxu0 0
          %1333 = vmatprep.subr.bf16.mxu0 0
          %1334 = vmatpush1.bf16.msra.mxu0 0
          %1335 = vmatprep.subr.bf16.mxu0 0
          %1336 = vmatpush1.bf16.msra.mxu0 0
          %1337 = vmatprep.subr.bf16.mxu0 0
          %1338 = vmatpush1.bf16.msra.mxu0 0
          %1339 = vmatprep.subr.bf16.mxu0 0
          %1340 = vmatpush1.bf16.msra.mxu0 0
          %1341 = vmatprep.subr.bf16.mxu0 0
          %1342 = vmatpush1.bf16.msra.mxu0 0
          %1343 = vmatprep.subr.bf16.mxu0 0
          %1344 = vmatpush1.bf16.msra.mxu0 0
          %1345 = vmatprep.subr.bf16.mxu0 0
          %1346 = vmatpush1.bf16.msra.mxu0 0
          %1347 = vmatprep.mubr.bf16.mxu0 0
          %1348 = vmatmul.mubr.bf16.gmra.mrb[0].mxu0 %v1027
          %v1349 = vpop.f32.mrb[0].mxu0
          %v1350 = vadd.f32 %v1253, %v1349
          %v1351 = vpop.f32.mrb[0].mxu0
          %v1352 = vpop.f32.mrb[0].mxu0
          %v1353 = vadd.f32 %v1256, %v1352
          %v1354 = vpop.f32.mrb[0].mxu0
          %1355 = vmatprep.mubr.bf16.mxu0 0
          %1356 = vmatmul.mubr.bf16.gmra.mrb[0].mxu0 %v1028
          %v1357 = vpop.f32.mrb[0].mxu0
          %v1358 = vadd.f32 %v1261, %v1357
          %v1359 = vpop.f32.mrb[0].mxu0
          %v1360 = vpop.f32.mrb[0].mxu0
          %v1361 = vadd.f32 %v1264, %v1360
          %v1362 = vpop.f32.mrb[0].mxu0
          %1363 = vmatprep.mubr.bf16.mxu0 0
          %1364 = vmatmul.mubr.bf16.gmra.mrb[0].mxu0 %v1029
          %v1365 = vpop.f32.mrb[0].mxu0
          %v1366 = vadd.f32 %v1269, %v1365
          %v1367 = vpop.f32.mrb[0].mxu0
          %v1368 = vpop.f32.mrb[0].mxu0
          %v1369 = vadd.f32 %v1272, %v1368
          %v1370 = vpop.f32.mrb[0].mxu0
          %1371 = vmatprep.mubr.bf16.mxu0 0
          %1372 = vmatmul.mubr.bf16.gmra.mrb[0].mxu0 %v1030
          %v1373 = vpop.f32.mrb[0].mxu0
          %v1374 = vadd.f32 %v1277, %v1373
          %v1375 = vpop.f32.mrb[0].mxu0
          %v1376 = vpop.f32.mrb[0].mxu0
          %v1377 = vadd.f32 %v1280, %v1376
          %v1378 = vpop.f32.mrb[0].mxu0
          %1379 = vmatprep.mubr.bf16.mxu0 0
          %1380 = vmatmul.mubr.bf16.gmra.mrb[0].mxu0 %v1031
          %v1381 = vpop.f32.mrb[0].mxu0
          %v1382 = vadd.f32 %v1285, %v1381
          %v1383 = vpop.f32.mrb[0].mxu0
          %v1384 = vpop.f32.mrb[0].mxu0
          %v1385 = vadd.f32 %v1288, %v1384
          %v1386 = vpop.f32.mrb[0].mxu0
          %1387 = vmatprep.mubr.bf16.mxu0 0
          %1388 = vmatmul.mubr.bf16.gmra.mrb[0].mxu0 %v1032
          %v1389 = vpop.f32.mrb[0].mxu0
          %v1390 = vadd.f32 %v1293, %v1389
          %v1391 = vpop.f32.mrb[0].mxu0
          %v1392 = vpop.f32.mrb[0].mxu0
          %v1393 = vadd.f32 %v1296, %v1392
          %v1394 = vpop.f32.mrb[0].mxu0
          %1395 = vmatprep.mubr.bf16.mxu0 0
          %1396 = vmatmul.mubr.bf16.gmra.mrb[0].mxu0 %v1033
          %v1397 = vpop.f32.mrb[0].mxu0
          %v1398 = vadd.f32 %v1301, %v1397
          %v1399 = vpop.f32.mrb[0].mxu0
          %v1400 = vpop.f32.mrb[0].mxu0
          %v1401 = vadd.f32 %v1304, %v1400
          %v1402 = vpop.f32.mrb[0].mxu0
          %1403 = vmatprep.mubr.bf16.mxu0 0
          %1404 = vmatmul.mubr.bf16.gmra.mrb[0].mxu0 %v1034
          %v1405 = vpop.f32.mrb[0].mxu0
          %v1406 = vadd.f32 %v1309, %v1405
          %v1407 = vpop.f32.mrb[0].mxu0
          %v1408 = vpop.f32.mrb[0].mxu0
          %v1409 = vadd.f32 %v1312, %v1408
          %v1410 = vpop.f32.mrb[0].mxu0
          %1411 = vdwg.mxu0
          %s1412 = scalar_lea.vmem %s5, 128
          %v1413 = vld [vmem:[%s1412] sm:$0xf]
          %v1414 = vld [vmem:[%s1412 + $0x4] sm:$0xf]
          %v1415 = vld [vmem:[%s1412 + $0x8] sm:$0xf]
          %v1416 = vld [vmem:[%s1412 + $0xc] sm:$0xf]
          %v1417 = vld [vmem:[%s1412 + $0x10] sm:$0xf]
          %v1418 = vld [vmem:[%s1412 + $0x14] sm:$0xf]
          %v1419 = vld [vmem:[%s1412 + $0x18] sm:$0xf]
          %v1420 = vld [vmem:[%s1412 + $0x1c] sm:$0xf]
          %v1421 = vld [vmem:[%s1412 + $0x20] sm:$0xf]
          %v1422 = vld [vmem:[%s1412 + $0x24] sm:$0xf]
          %v1423 = vld [vmem:[%s1412 + $0x28] sm:$0xf]
          %v1424 = vld [vmem:[%s1412 + $0x2c] sm:$0xf]
          %v1425 = vld [vmem:[%s1412 + $0x30] sm:$0xf]
          %v1426 = vld [vmem:[%s1412 + $0x34] sm:$0xf]
          %v1427 = vld [vmem:[%s1412 + $0x38] sm:$0xf]
          %v1428 = vld [vmem:[%s1412 + $0x3c] sm:$0xf]
          %v1445 = vunpack.c.l.b16 %v1413
          %v1446 = vunpack.c.l.b16 %v1414
          %v1447 = vunpack.c.l.b16 %v1415
          %v1448 = vunpack.c.l.b16 %v1416
          %v1449 = vunpack.c.l.b16 %v1417
          %v1450 = vunpack.c.l.b16 %v1418
          %v1451 = vunpack.c.l.b16 %v1419
          %v1452 = vunpack.c.l.b16 %v1420
          %v1453 = vunpack.c.l.b16 %v1421
          %v1454 = vunpack.c.l.b16 %v1422
          %v1455 = vunpack.c.l.b16 %v1423
          %v1456 = vunpack.c.l.b16 %v1424
          %v1457 = vunpack.c.l.b16 %v1425
          %v1458 = vunpack.c.l.b16 %v1426
          %v1459 = vunpack.c.l.b16 %v1427
          %v1460 = vunpack.c.l.b16 %v1428
          %v1461 = vpack.c.b16 %v1446, %v1445
          %v1462 = vpack.c.b16 %v1448, %v1447
          %v1463 = vpack.c.b16 %v1450, %v1449
          %v1464 = vpack.c.b16 %v1452, %v1451
          %v1465 = vpack.c.b16 %v1454, %v1453
          %v1466 = vpack.c.b16 %v1456, %v1455
          %v1467 = vpack.c.b16 %v1458, %v1457
          %v1468 = vpack.c.b16 %v1460, %v1459
          %1477 = vmatprep.subr.bf16.mxu0 0
          %1478 = vmatpush1.bf16.msra.mxu0 %v1461
          %1479 = vmatprep.subr.bf16.mxu0 0
          %1480 = vmatpush1.bf16.msra.mxu0 %v1462
          %1481 = vmatprep.subr.bf16.mxu0 0
          %1482 = vmatpush1.bf16.msra.mxu0 %v1463
          %1483 = vmatprep.subr.bf16.mxu0 0
          %1484 = vmatpush1.bf16.msra.mxu0 %v1464
          %1485 = vmatprep.subr.bf16.mxu0 0
          %1486 = vmatpush1.bf16.msra.mxu0 %v1465
          %1487 = vmatprep.subr.bf16.mxu0 0
          %1488 = vmatpush1.bf16.msra.mxu0 %v1466
          %1489 = vmatprep.subr.bf16.mxu0 0
          %1490 = vmatpush1.bf16.msra.mxu0 %v1467
          %1491 = vmatprep.subr.bf16.mxu0 0
          %1492 = vmatpush1.bf16.msra.mxu0 %v1468
          %1493 = vmatprep.subr.bf16.mxu0 0
          %1494 = vmatpush1.bf16.msra.mxu0 0
          %1495 = vmatprep.subr.bf16.mxu0 0
          %1496 = vmatpush1.bf16.msra.mxu0 0
          %1497 = vmatprep.subr.bf16.mxu0 0
          %1498 = vmatpush1.bf16.msra.mxu0 0
          %1499 = vmatprep.subr.bf16.mxu0 0
          %1500 = vmatpush1.bf16.msra.mxu0 0
          %1501 = vmatprep.subr.bf16.mxu0 0
          %1502 = vmatpush1.bf16.msra.mxu0 0
          %1503 = vmatprep.subr.bf16.mxu0 0
          %1504 = vmatpush1.bf16.msra.mxu0 0
          %1505 = vmatprep.subr.bf16.mxu0 0
          %1506 = vmatpush1.bf16.msra.mxu0 0
          %1507 = vmatprep.subr.bf16.mxu0 0
          %1508 = vmatpush1.bf16.msra.mxu0 0
          %1509 = vmatprep.mubr.bf16.mxu0 0
          %1510 = vmatmul.mubr.bf16.gmra.mrb[0].mxu0 %v854
          %v1511 = vpop.f32.mrb[0].mxu0
          %v1512 = vadd.f32 0.0, %v1511
          %v1513 = vpop.f32.mrb[0].mxu0
          %v1514 = vpop.f32.mrb[0].mxu0
          %v1515 = vadd.f32 0.0, %v1514
          %v1516 = vpop.f32.mrb[0].mxu0
          %1517 = vmatprep.mubr.bf16.mxu0 0
          %1518 = vmatmul.mubr.bf16.gmra.mrb[0].mxu0 %v855
          %v1519 = vpop.f32.mrb[0].mxu0
          %v1520 = vadd.f32 0.0, %v1519
          %v1521 = vpop.f32.mrb[0].mxu0
          %v1522 = vpop.f32.mrb[0].mxu0
          %v1523 = vadd.f32 0.0, %v1522
          %v1524 = vpop.f32.mrb[0].mxu0
          %1525 = vmatprep.mubr.bf16.mxu0 0
          %1526 = vmatmul.mubr.bf16.gmra.mrb[0].mxu0 %v856
          %v1527 = vpop.f32.mrb[0].mxu0
          %v1528 = vadd.f32 0.0, %v1527
          %v1529 = vpop.f32.mrb[0].mxu0
          %v1530 = vpop.f32.mrb[0].mxu0
          %v1531 = vadd.f32 0.0, %v1530
          %v1532 = vpop.f32.mrb[0].mxu0
          %1533 = vmatprep.mubr.bf16.mxu0 0
          %1534 = vmatmul.mubr.bf16.gmra.mrb[0].mxu0 %v857
          %v1535 = vpop.f32.mrb[0].mxu0
          %v1536 = vadd.f32 0.0, %v1535
          %v1537 = vpop.f32.mrb[0].mxu0
          %v1538 = vpop.f32.mrb[0].mxu0
          %v1539 = vadd.f32 0.0, %v1538
          %v1540 = vpop.f32.mrb[0].mxu0
          %1541 = vmatprep.mubr.bf16.mxu0 0
          %1542 = vmatmul.mubr.bf16.gmra.mrb[0].mxu0 %v858
          %v1543 = vpop.f32.mrb[0].mxu0
          %v1544 = vadd.f32 0.0, %v1543
          %v1545 = vpop.f32.mrb[0].mxu0
          %v1546 = vpop.f32.mrb[0].mxu0
          %v1547 = vadd.f32 0.0, %v1546
          %v1548 = vpop.f32.mrb[0].mxu0
          %1549 = vmatprep.mubr.bf16.mxu0 0
          %1550 = vmatmul.mubr.bf16.gmra.mrb[0].mxu0 %v859
          %v1551 = vpop.f32.mrb[0].mxu0
          %v1552 = vadd.f32 0.0, %v1551
          %v1553 = vpop.f32.mrb[0].mxu0
          %v1554 = vpop.f32.mrb[0].mxu0
          %v1555 = vadd.f32 0.0, %v1554
          %v1556 = vpop.f32.mrb[0].mxu0
          %1557 = vmatprep.mubr.bf16.mxu0 0
          %1558 = vmatmul.mubr.bf16.gmra.mrb[0].mxu0 %v860
          %v1559 = vpop.f32.mrb[0].mxu0
          %v1560 = vadd.f32 0.0, %v1559
          %v1561 = vpop.f32.mrb[0].mxu0
          %v1562 = vpop.f32.mrb[0].mxu0
          %v1563 = vadd.f32 0.0, %v1562
          %v1564 = vpop.f32.mrb[0].mxu0
          %1565 = vmatprep.mubr.bf16.mxu0 0
          %1566 = vmatmul.mubr.bf16.gmra.mrb[0].mxu0 %v861
          %v1567 = vpop.f32.mrb[0].mxu0
          %v1568 = vadd.f32 0.0, %v1567
          %v1569 = vpop.f32.mrb[0].mxu0
          %v1570 = vpop.f32.mrb[0].mxu0
          %v1571 = vadd.f32 0.0, %v1570
          %v1572 = vpop.f32.mrb[0].mxu0
          %1573 = vdwg.mxu0
          %v1574 = vpack.c.bf16 %v1515, %v1512
          %v1575 = vpack.c.bf16 %v1523, %v1520
          %v1576 = vpack.c.bf16 %v1531, %v1528
          %v1577 = vpack.c.bf16 %v1539, %v1536
          %v1578 = vpack.c.bf16 %v1547, %v1544
          %v1579 = vpack.c.bf16 %v1555, %v1552
          %v1580 = vpack.c.bf16 %v1563, %v1560
          %v1581 = vpack.c.bf16 %v1571, %v1568
          %s1582 = scalar_lea.vmem %s438, 64 [#allocation5]
          %v1583 = vld [vmem:[%s1582] sm:$0xff]
          %v1584 = vld [vmem:[%s1582 + $0x8] sm:$0xff]
          %v1585 = vld [vmem:[%s1582 + $0x10] sm:$0xff]
          %v1586 = vld [vmem:[%s1582 + $0x18] sm:$0xff]
          %v1587 = vunpack.c.l.s8.bf16 %v1583
          %v1588 = vunpack.c.h.s8.bf16 %v1583
          %v1589 = vunpack.c.l.s8.bf16 %v1584
          %v1590 = vunpack.c.h.s8.bf16 %v1584
          %v1591 = vunpack.c.l.s8.bf16 %v1585
          %v1592 = vunpack.c.h.s8.bf16 %v1585
          %v1593 = vunpack.c.l.s8.bf16 %v1586
          %v1594 = vunpack.c.h.s8.bf16 %v1586
          %1595 = vmatprep.subr.bf16.mxu0 0
          %1596 = vmatpush1.bf16.msra.mxu0 %v1574
          %1597 = vmatprep.subr.bf16.mxu0 0
          %1598 = vmatpush1.bf16.msra.mxu0 %v1575
          %1599 = vmatprep.subr.bf16.mxu0 0
          %1600 = vmatpush1.bf16.msra.mxu0 %v1576
          %1601 = vmatprep.subr.bf16.mxu0 0
          %1602 = vmatpush1.bf16.msra.mxu0 %v1577
          %1603 = vmatprep.subr.bf16.mxu0 0
          %1604 = vmatpush1.bf16.msra.mxu0 %v1578
          %1605 = vmatprep.subr.bf16.mxu0 0
          %1606 = vmatpush1.bf16.msra.mxu0 %v1579
          %1607 = vmatprep.subr.bf16.mxu0 0
          %1608 = vmatpush1.bf16.msra.mxu0 %v1580
          %1609 = vmatprep.subr.bf16.mxu0 0
          %1610 = vmatpush1.bf16.msra.mxu0 %v1581
          %1611 = vmatprep.subr.bf16.mxu0 0
          %1612 = vmatpush1.bf16.msra.mxu0 0
          %1613 = vmatprep.subr.bf16.mxu0 0
          %1614 = vmatpush1.bf16.msra.mxu0 0
          %1615 = vmatprep.subr.bf16.mxu0 0
          %1616 = vmatpush1.bf16.msra.mxu0 0
          %1617 = vmatprep.subr.bf16.mxu0 0
          %1618 = vmatpush1.bf16.msra.mxu0 0
          %1619 = vmatprep.subr.bf16.mxu0 0
          %1620 = vmatpush1.bf16.msra.mxu0 0
          %1621 = vmatprep.subr.bf16.mxu0 0
          %1622 = vmatpush1.bf16.msra.mxu0 0
          %1623 = vmatprep.subr.bf16.mxu0 0
          %1624 = vmatpush1.bf16.msra.mxu0 0
          %1625 = vmatprep.subr.bf16.mxu0 0
          %1626 = vmatpush1.bf16.msra.mxu0 0
          %1627 = vmatprep.mubr.bf16.mxu0 0
          %1628 = vmatmul.mubr.bf16.gmra.mrb[0].mxu0 %v1587
          %v1629 = vpop.f32.mrb[0].mxu0
          %v1630 = vadd.f32 0.0, %v1629
          %v1631 = vpop.f32.mrb[0].mxu0
          %v1632 = vpop.f32.mrb[0].mxu0
          %v1633 = vadd.f32 0.0, %v1632
          %v1634 = vpop.f32.mrb[0].mxu0
          %1635 = vmatprep.mubr.bf16.mxu0 0
          %1636 = vmatmul.mubr.bf16.gmra.mrb[0].mxu0 %v1588
          %v1637 = vpop.f32.mrb[0].mxu0
          %v1638 = vadd.f32 0.0, %v1637
          %v1639 = vpop.f32.mrb[0].mxu0
          %v1640 = vpop.f32.mrb[0].mxu0
          %v1641 = vadd.f32 0.0, %v1640
          %v1642 = vpop.f32.mrb[0].mxu0
          %1643 = vmatprep.mubr.bf16.mxu0 0
          %1644 = vmatmul.mubr.bf16.gmra.mrb[0].mxu0 %v1589
          %v1645 = vpop.f32.mrb[0].mxu0
          %v1646 = vadd.f32 0.0, %v1645
          %v1647 = vpop.f32.mrb[0].mxu0
          %v1648 = vpop.f32.mrb[0].mxu0
          %v1649 = vadd.f32 0.0, %v1648
          %v1650 = vpop.f32.mrb[0].mxu0
          %1651 = vmatprep.mubr.bf16.mxu0 0
          %1652 = vmatmul.mubr.bf16.gmra.mrb[0].mxu0 %v1590
          %v1653 = vpop.f32.mrb[0].mxu0
          %v1654 = vadd.f32 0.0, %v1653
          %v1655 = vpop.f32.mrb[0].mxu0
          %v1656 = vpop.f32.mrb[0].mxu0
          %v1657 = vadd.f32 0.0, %v1656
          %v1658 = vpop.f32.mrb[0].mxu0
          %1659 = vmatprep.mubr.bf16.mxu0 0
          %1660 = vmatmul.mubr.bf16.gmra.mrb[0].mxu0 %v1591
          %v1661 = vpop.f32.mrb[0].mxu0
          %v1662 = vadd.f32 0.0, %v1661
          %v1663 = vpop.f32.mrb[0].mxu0
          %v1664 = vpop.f32.mrb[0].mxu0
          %v1665 = vadd.f32 0.0, %v1664
          %v1666 = vpop.f32.mrb[0].mxu0
          %1667 = vmatprep.mubr.bf16.mxu0 0
          %1668 = vmatmul.mubr.bf16.gmra.mrb[0].mxu0 %v1592
          %v1669 = vpop.f32.mrb[0].mxu0
          %v1670 = vadd.f32 0.0, %v1669
          %v1671 = vpop.f32.mrb[0].mxu0
          %v1672 = vpop.f32.mrb[0].mxu0
          %v1673 = vadd.f32 0.0, %v1672
          %v1674 = vpop.f32.mrb[0].mxu0
          %1675 = vmatprep.mubr.bf16.mxu0 0
          %1676 = vmatmul.mubr.bf16.gmra.mrb[0].mxu0 %v1593
          %v1677 = vpop.f32.mrb[0].mxu0
          %v1678 = vadd.f32 0.0, %v1677
          %v1679 = vpop.f32.mrb[0].mxu0
          %v1680 = vpop.f32.mrb[0].mxu0
          %v1681 = vadd.f32 0.0, %v1680
          %v1682 = vpop.f32.mrb[0].mxu0
          %1683 = vmatprep.mubr.bf16.mxu0 0
          %1684 = vmatmul.mubr.bf16.gmra.mrb[0].mxu0 %v1594
          %v1685 = vpop.f32.mrb[0].mxu0
          %v1686 = vadd.f32 0.0, %v1685
          %v1687 = vpop.f32.mrb[0].mxu0
          %v1688 = vpop.f32.mrb[0].mxu0
          %v1689 = vadd.f32 0.0, %v1688
          %v1690 = vpop.f32.mrb[0].mxu0
          %1691 = vdwg.mxu0
          %v1692 = vadd.f32 %v1350, %v1630
          %v1693 = vadd.f32 %v1353, %v1633
          %v1694 = vadd.f32 %v1358, %v1638
          %v1695 = vadd.f32 %v1361, %v1641
          %v1696 = vadd.f32 %v1366, %v1646
          %v1697 = vadd.f32 %v1369, %v1649
          %v1698 = vadd.f32 %v1374, %v1654
          %v1699 = vadd.f32 %v1377, %v1657
          %v1700 = vadd.f32 %v1382, %v1662
          %v1701 = vadd.f32 %v1385, %v1665
          %v1702 = vadd.f32 %v1390, %v1670
          %v1703 = vadd.f32 %v1393, %v1673
          %v1704 = vadd.f32 %v1398, %v1678
          %v1705 = vadd.f32 %v1401, %v1681
          %v1706 = vadd.f32 %v1406, %v1686
          %v1707 = vadd.f32 %v1409, %v1689
          %s1708 = scalar_lea.vmem %s5, 192
          %v1709 = vld [vmem:[%s1708] sm:$0xf]
          %v1710 = vld [vmem:[%s1708 + $0x4] sm:$0xf]
          %v1711 = vld [vmem:[%s1708 + $0x8] sm:$0xf]
          %v1712 = vld [vmem:[%s1708 + $0xc] sm:$0xf]
          %v1713 = vld [vmem:[%s1708 + $0x10] sm:$0xf]
          %v1714 = vld [vmem:[%s1708 + $0x14] sm:$0xf]
          %v1715 = vld [vmem:[%s1708 + $0x18] sm:$0xf]
          %v1716 = vld [vmem:[%s1708 + $0x1c] sm:$0xf]
          %v1717 = vld [vmem:[%s1708 + $0x20] sm:$0xf]
          %v1718 = vld [vmem:[%s1708 + $0x24] sm:$0xf]
          %v1719 = vld [vmem:[%s1708 + $0x28] sm:$0xf]
          %v1720 = vld [vmem:[%s1708 + $0x2c] sm:$0xf]
          %v1721 = vld [vmem:[%s1708 + $0x30] sm:$0xf]
          %v1722 = vld [vmem:[%s1708 + $0x34] sm:$0xf]
          %v1723 = vld [vmem:[%s1708 + $0x38] sm:$0xf]
          %v1724 = vld [vmem:[%s1708 + $0x3c] sm:$0xf]
          %v1741 = vunpack.c.l.b16 %v1709
          %v1742 = vunpack.c.l.b16 %v1710
          %v1743 = vunpack.c.l.b16 %v1711
          %v1744 = vunpack.c.l.b16 %v1712
          %v1745 = vunpack.c.l.b16 %v1713
          %v1746 = vunpack.c.l.b16 %v1714
          %v1747 = vunpack.c.l.b16 %v1715
          %v1748 = vunpack.c.l.b16 %v1716
          %v1749 = vunpack.c.l.b16 %v1717
          %v1750 = vunpack.c.l.b16 %v1718
          %v1751 = vunpack.c.l.b16 %v1719
          %v1752 = vunpack.c.l.b16 %v1720
          %v1753 = vunpack.c.l.b16 %v1721
          %v1754 = vunpack.c.l.b16 %v1722
          %v1755 = vunpack.c.l.b16 %v1723
          %v1756 = vunpack.c.l.b16 %v1724
          %v1757 = vpack.c.b16 %v1742, %v1741
          %v1758 = vpack.c.b16 %v1744, %v1743
          %v1759 = vpack.c.b16 %v1746, %v1745
          %v1760 = vpack.c.b16 %v1748, %v1747
          %v1761 = vpack.c.b16 %v1750, %v1749
          %v1762 = vpack.c.b16 %v1752, %v1751
          %v1763 = vpack.c.b16 %v1754, %v1753
          %v1764 = vpack.c.b16 %v1756, %v1755
          %1773 = vmatprep.subr.bf16.mxu0 0
          %1774 = vmatpush1.bf16.msra.mxu0 %v1757
          %1775 = vmatprep.subr.bf16.mxu0 0
          %1776 = vmatpush1.bf16.msra.mxu0 %v1758
          %1777 = vmatprep.subr.bf16.mxu0 0
          %1778 = vmatpush1.bf16.msra.mxu0 %v1759
          %1779 = vmatprep.subr.bf16.mxu0 0
          %1780 = vmatpush1.bf16.msra.mxu0 %v1760
          %1781 = vmatprep.subr.bf16.mxu0 0
          %1782 = vmatpush1.bf16.msra.mxu0 %v1761
          %1783 = vmatprep.subr.bf16.mxu0 0
          %1784 = vmatpush1.bf16.msra.mxu0 %v1762
          %1785 = vmatprep.subr.bf16.mxu0 0
          %1786 = vmatpush1.bf16.msra.mxu0 %v1763
          %1787 = vmatprep.subr.bf16.mxu0 0
          %1788 = vmatpush1.bf16.msra.mxu0 %v1764
          %1789 = vmatprep.subr.bf16.mxu0 0
          %1790 = vmatpush1.bf16.msra.mxu0 0
          %1791 = vmatprep.subr.bf16.mxu0 0
          %1792 = vmatpush1.bf16.msra.mxu0 0
          %1793 = vmatprep.subr.bf16.mxu0 0
          %1794 = vmatpush1.bf16.msra.mxu0 0
          %1795 = vmatprep.subr.bf16.mxu0 0
          %1796 = vmatpush1.bf16.msra.mxu0 0
          %1797 = vmatprep.subr.bf16.mxu0 0
          %1798 = vmatpush1.bf16.msra.mxu0 0
          %1799 = vmatprep.subr.bf16.mxu0 0
          %1800 = vmatpush1.bf16.msra.mxu0 0
          %1801 = vmatprep.subr.bf16.mxu0 0
          %1802 = vmatpush1.bf16.msra.mxu0 0
          %1803 = vmatprep.subr.bf16.mxu0 0
          %1804 = vmatpush1.bf16.msra.mxu0 0
          %1805 = vmatprep.mubr.bf16.mxu0 0
          %1806 = vmatmul.mubr.bf16.gmra.mrb[0].mxu0 %v854
          %v1807 = vpop.f32.mrb[0].mxu0
          %v1808 = vadd.f32 0.0, %v1807
          %v1809 = vpop.f32.mrb[0].mxu0
          %v1810 = vpop.f32.mrb[0].mxu0
          %v1811 = vadd.f32 0.0, %v1810
          %v1812 = vpop.f32.mrb[0].mxu0
          %1813 = vmatprep.mubr.bf16.mxu0 0
          %1814 = vmatmul.mubr.bf16.gmra.mrb[0].mxu0 %v855
          %v1815 = vpop.f32.mrb[0].mxu0
          %v1816 = vadd.f32 0.0, %v1815
          %v1817 = vpop.f32.mrb[0].mxu0
          %v1818 = vpop.f32.mrb[0].mxu0
          %v1819 = vadd.f32 0.0, %v1818
          %v1820 = vpop.f32.mrb[0].mxu0
          %1821 = vmatprep.mubr.bf16.mxu0 0
          %1822 = vmatmul.mubr.bf16.gmra.mrb[0].mxu0 %v856
          %v1823 = vpop.f32.mrb[0].mxu0
          %v1824 = vadd.f32 0.0, %v1823
          %v1825 = vpop.f32.mrb[0].mxu0
          %v1826 = vpop.f32.mrb[0].mxu0
          %v1827 = vadd.f32 0.0, %v1826
          %v1828 = vpop.f32.mrb[0].mxu0
          %1829 = vmatprep.mubr.bf16.mxu0 0
          %1830 = vmatmul.mubr.bf16.gmra.mrb[0].mxu0 %v857
          %v1831 = vpop.f32.mrb[0].mxu0
          %v1832 = vadd.f32 0.0, %v1831
          %v1833 = vpop.f32.mrb[0].mxu0
          %v1834 = vpop.f32.mrb[0].mxu0
          %v1835 = vadd.f32 0.0, %v1834
          %v1836 = vpop.f32.mrb[0].mxu0
          %1837 = vmatprep.mubr.bf16.mxu0 0
          %1838 = vmatmul.mubr.bf16.gmra.mrb[0].mxu0 %v858
          %v1839 = vpop.f32.mrb[0].mxu0
          %v1840 = vadd.f32 0.0, %v1839
          %v1841 = vpop.f32.mrb[0].mxu0
          %v1842 = vpop.f32.mrb[0].mxu0
          %v1843 = vadd.f32 0.0, %v1842
          %v1844 = vpop.f32.mrb[0].mxu0
          %1845 = vmatprep.mubr.bf16.mxu0 0
          %1846 = vmatmul.mubr.bf16.gmra.mrb[0].mxu0 %v859
          %v1847 = vpop.f32.mrb[0].mxu0
          %v1848 = vadd.f32 0.0, %v1847
          %v1849 = vpop.f32.mrb[0].mxu0
          %v1850 = vpop.f32.mrb[0].mxu0
          %v1851 = vadd.f32 0.0, %v1850
          %v1852 = vpop.f32.mrb[0].mxu0
          %1853 = vmatprep.mubr.bf16.mxu0 0
          %1854 = vmatmul.mubr.bf16.gmra.mrb[0].mxu0 %v860
          %v1855 = vpop.f32.mrb[0].mxu0
          %v1856 = vadd.f32 0.0, %v1855
          %v1857 = vpop.f32.mrb[0].mxu0
          %v1858 = vpop.f32.mrb[0].mxu0
          %v1859 = vadd.f32 0.0, %v1858
          %v1860 = vpop.f32.mrb[0].mxu0
          %1861 = vmatprep.mubr.bf16.mxu0 0
          %1862 = vmatmul.mubr.bf16.gmra.mrb[0].mxu0 %v861
          %v1863 = vpop.f32.mrb[0].mxu0
          %v1864 = vadd.f32 0.0, %v1863
          %v1865 = vpop.f32.mrb[0].mxu0
          %v1866 = vpop.f32.mrb[0].mxu0
          %v1867 = vadd.f32 0.0, %v1866
          %v1868 = vpop.f32.mrb[0].mxu0
          %1869 = vdwg.mxu0
          %v1870 = vpack.c.bf16 %v1811, %v1808
          %v1871 = vpack.c.bf16 %v1819, %v1816
          %v1872 = vpack.c.bf16 %v1827, %v1824
          %v1873 = vpack.c.bf16 %v1835, %v1832
          %v1874 = vpack.c.bf16 %v1843, %v1840
          %v1875 = vpack.c.bf16 %v1851, %v1848
          %v1876 = vpack.c.bf16 %v1859, %v1856
          %v1877 = vpack.c.bf16 %v1867, %v1864
          %s1878 = scalar_lea.vmem %s438, 96 [#allocation5]
          %v1879 = vld [vmem:[%s1878] sm:$0xff]
          %v1880 = vld [vmem:[%s1878 + $0x8] sm:$0xff]
          %v1881 = vld [vmem:[%s1878 + $0x10] sm:$0xff]
          %v1882 = vld [vmem:[%s1878 + $0x18] sm:$0xff]
          %v1883 = vunpack.c.l.s8.bf16 %v1879
          %v1884 = vunpack.c.h.s8.bf16 %v1879
          %v1885 = vunpack.c.l.s8.bf16 %v1880
          %v1886 = vunpack.c.h.s8.bf16 %v1880
          %v1887 = vunpack.c.l.s8.bf16 %v1881
          %v1888 = vunpack.c.h.s8.bf16 %v1881
          %v1889 = vunpack.c.l.s8.bf16 %v1882
          %v1890 = vunpack.c.h.s8.bf16 %v1882
          %1891 = vmatprep.subr.bf16.mxu0 0
          %1892 = vmatpush1.bf16.msra.mxu0 %v1870
          %1893 = vmatprep.subr.bf16.mxu0 0
          %1894 = vmatpush1.bf16.msra.mxu0 %v1871
          %1895 = vmatprep.subr.bf16.mxu0 0
          %1896 = vmatpush1.bf16.msra.mxu0 %v1872
          %1897 = vmatprep.subr.bf16.mxu0 0
          %1898 = vmatpush1.bf16.msra.mxu0 %v1873
          %1899 = vmatprep.subr.bf16.mxu0 0
          %1900 = vmatpush1.bf16.msra.mxu0 %v1874
          %1901 = vmatprep.subr.bf16.mxu0 0
          %1902 = vmatpush1.bf16.msra.mxu0 %v1875
          %1903 = vmatprep.subr.bf16.mxu0 0
          %1904 = vmatpush1.bf16.msra.mxu0 %v1876
          %1905 = vmatprep.subr.bf16.mxu0 0
          %1906 = vmatpush1.bf16.msra.mxu0 %v1877
          %1907 = vmatprep.subr.bf16.mxu0 0
          %1908 = vmatpush1.bf16.msra.mxu0 0
          %1909 = vmatprep.subr.bf16.mxu0 0
          %1910 = vmatpush1.bf16.msra.mxu0 0
          %1911 = vmatprep.subr.bf16.mxu0 0
          %1912 = vmatpush1.bf16.msra.mxu0 0
          %1913 = vmatprep.subr.bf16.mxu0 0
          %1914 = vmatpush1.bf16.msra.mxu0 0
          %1915 = vmatprep.subr.bf16.mxu0 0
          %1916 = vmatpush1.bf16.msra.mxu0 0
          %1917 = vmatprep.subr.bf16.mxu0 0
          %1918 = vmatpush1.bf16.msra.mxu0 0
          %1919 = vmatprep.subr.bf16.mxu0 0
          %1920 = vmatpush1.bf16.msra.mxu0 0
          %1921 = vmatprep.subr.bf16.mxu0 0
          %1922 = vmatpush1.bf16.msra.mxu0 0
          %1923 = vmatprep.mubr.bf16.mxu0 0
          %1924 = vmatmul.mubr.bf16.gmra.mrb[0].mxu0 %v1883
          %v1925 = vpop.f32.mrb[0].mxu0
          %v1926 = vadd.f32 0.0, %v1925
          %v1927 = vpop.f32.mrb[0].mxu0
          %v1928 = vpop.f32.mrb[0].mxu0
          %v1929 = vadd.f32 0.0, %v1928
          %v1930 = vpop.f32.mrb[0].mxu0
          %1931 = vmatprep.mubr.bf16.mxu0 0
          %1932 = vmatmul.mubr.bf16.gmra.mrb[0].mxu0 %v1884
          %v1933 = vpop.f32.mrb[0].mxu0
          %v1934 = vadd.f32 0.0, %v1933
          %v1935 = vpop.f32.mrb[0].mxu0
          %v1936 = vpop.f32.mrb[0].mxu0
          %v1937 = vadd.f32 0.0, %v1936
          %v1938 = vpop.f32.mrb[0].mxu0
          %1939 = vmatprep.mubr.bf16.mxu0 0
          %1940 = vmatmul.mubr.bf16.gmra.mrb[0].mxu0 %v1885
          %v1941 = vpop.f32.mrb[0].mxu0
          %v1942 = vadd.f32 0.0, %v1941
          %v1943 = vpop.f32.mrb[0].mxu0
          %v1944 = vpop.f32.mrb[0].mxu0
          %v1945 = vadd.f32 0.0, %v1944
          %v1946 = vpop.f32.mrb[0].mxu0
          %1947 = vmatprep.mubr.bf16.mxu0 0
          %1948 = vmatmul.mubr.bf16.gmra.mrb[0].mxu0 %v1886
          %v1949 = vpop.f32.mrb[0].mxu0
          %v1950 = vadd.f32 0.0, %v1949
          %v1951 = vpop.f32.mrb[0].mxu0
          %v1952 = vpop.f32.mrb[0].mxu0
          %v1953 = vadd.f32 0.0, %v1952
          %v1954 = vpop.f32.mrb[0].mxu0
          %1955 = vmatprep.mubr.bf16.mxu0 0
          %1956 = vmatmul.mubr.bf16.gmra.mrb[0].mxu0 %v1887
          %v1957 = vpop.f32.mrb[0].mxu0
          %v1958 = vadd.f32 0.0, %v1957
          %v1959 = vpop.f32.mrb[0].mxu0
          %v1960 = vpop.f32.mrb[0].mxu0
          %v1961 = vadd.f32 0.0, %v1960
          %v1962 = vpop.f32.mrb[0].mxu0
          %1963 = vmatprep.mubr.bf16.mxu0 0
          %1964 = vmatmul.mubr.bf16.gmra.mrb[0].mxu0 %v1888
          %v1965 = vpop.f32.mrb[0].mxu0
          %v1966 = vadd.f32 0.0, %v1965
          %v1967 = vpop.f32.mrb[0].mxu0
          %v1968 = vpop.f32.mrb[0].mxu0
          %v1969 = vadd.f32 0.0, %v1968
          %v1970 = vpop.f32.mrb[0].mxu0
          %1971 = vmatprep.mubr.bf16.mxu0 0
          %1972 = vmatmul.mubr.bf16.gmra.mrb[0].mxu0 %v1889
          %v1973 = vpop.f32.mrb[0].mxu0
          %v1974 = vadd.f32 0.0, %v1973
          %v1975 = vpop.f32.mrb[0].mxu0
          %v1976 = vpop.f32.mrb[0].mxu0
          %v1977 = vadd.f32 0.0, %v1976
          %v1978 = vpop.f32.mrb[0].mxu0
          %1979 = vmatprep.mubr.bf16.mxu0 0
          %1980 = vmatmul.mubr.bf16.gmra.mrb[0].mxu0 %v1890
          %v1981 = vpop.f32.mrb[0].mxu0
          %v1982 = vadd.f32 0.0, %v1981
          %v1983 = vpop.f32.mrb[0].mxu0
          %v1984 = vpop.f32.mrb[0].mxu0
          %v1985 = vadd.f32 0.0, %v1984
          %v1986 = vpop.f32.mrb[0].mxu0
          %1987 = vdwg.mxu0
          %v1988 = vadd.f32 %v1692, %v1926
          %v1989 = vadd.f32 %v1693, %v1929
          %v1990 = vadd.f32 %v1694, %v1934
          %v1991 = vadd.f32 %v1695, %v1937
          %v1992 = vadd.f32 %v1696, %v1942
          %v1993 = vadd.f32 %v1697, %v1945
          %v1994 = vadd.f32 %v1698, %v1950
          %v1995 = vadd.f32 %v1699, %v1953
          %v1996 = vadd.f32 %v1700, %v1958
          %v1997 = vadd.f32 %v1701, %v1961
          %v1998 = vadd.f32 %v1702, %v1966
          %v1999 = vadd.f32 %v1703, %v1969
          %v2000 = vadd.f32 %v1704, %v1974
          %v2001 = vadd.f32 %v1705, %v1977
          %v2002 = vadd.f32 %v1706, %v1982
          %v2003 = vadd.f32 %v1707, %v1985
          %s2004 = scalar_lea.vmem %s5, 256
          %v2005 = vld [vmem:[%s2004] sm:$0xf]
          %v2006 = vld [vmem:[%s2004 + $0x4] sm:$0xf]
          %v2007 = vld [vmem:[%s2004 + $0x8] sm:$0xf]
          %v2008 = vld [vmem:[%s2004 + $0xc] sm:$0xf]
          %v2009 = vld [vmem:[%s2004 + $0x10] sm:$0xf]
          %v2010 = vld [vmem:[%s2004 + $0x14] sm:$0xf]
          %v2011 = vld [vmem:[%s2004 + $0x18] sm:$0xf]
          %v2012 = vld [vmem:[%s2004 + $0x1c] sm:$0xf]
          %v2013 = vld [vmem:[%s2004 + $0x20] sm:$0xf]
          %v2014 = vld [vmem:[%s2004 + $0x24] sm:$0xf]
          %v2015 = vld [vmem:[%s2004 + $0x28] sm:$0xf]
          %v2016 = vld [vmem:[%s2004 + $0x2c] sm:$0xf]
          %v2017 = vld [vmem:[%s2004 + $0x30] sm:$0xf]
          %v2018 = vld [vmem:[%s2004 + $0x34] sm:$0xf]
          %v2019 = vld [vmem:[%s2004 + $0x38] sm:$0xf]
          %v2020 = vld [vmem:[%s2004 + $0x3c] sm:$0xf]
          %v2037 = vunpack.c.l.b16 %v2005
          %v2038 = vunpack.c.l.b16 %v2006
          %v2039 = vunpack.c.l.b16 %v2007
          %v2040 = vunpack.c.l.b16 %v2008
          %v2041 = vunpack.c.l.b16 %v2009
          %v2042 = vunpack.c.l.b16 %v2010
          %v2043 = vunpack.c.l.b16 %v2011
          %v2044 = vunpack.c.l.b16 %v2012
          %v2045 = vunpack.c.l.b16 %v2013
          %v2046 = vunpack.c.l.b16 %v2014
          %v2047 = vunpack.c.l.b16 %v2015
          %v2048 = vunpack.c.l.b16 %v2016
          %v2049 = vunpack.c.l.b16 %v2017
          %v2050 = vunpack.c.l.b16 %v2018
          %v2051 = vunpack.c.l.b16 %v2019
          %v2052 = vunpack.c.l.b16 %v2020
          %v2053 = vpack.c.b16 %v2038, %v2037
          %v2054 = vpack.c.b16 %v2040, %v2039
          %v2055 = vpack.c.b16 %v2042, %v2041
          %v2056 = vpack.c.b16 %v2044, %v2043
          %v2057 = vpack.c.b16 %v2046, %v2045
          %v2058 = vpack.c.b16 %v2048, %v2047
          %v2059 = vpack.c.b16 %v2050, %v2049
          %v2060 = vpack.c.b16 %v2052, %v2051
          %2069 = vmatprep.subr.bf16.mxu0 0
          %2070 = vmatpush1.bf16.msra.mxu0 %v2053
          %2071 = vmatprep.subr.bf16.mxu0 0
          %2072 = vmatpush1.bf16.msra.mxu0 %v2054
          %2073 = vmatprep.subr.bf16.mxu0 0
          %2074 = vmatpush1.bf16.msra.mxu0 %v2055
          %2075 = vmatprep.subr.bf16.mxu0 0
          %2076 = vmatpush1.bf16.msra.mxu0 %v2056
          %2077 = vmatprep.subr.bf16.mxu0 0
          %2078 = vmatpush1.bf16.msra.mxu0 %v2057
          %2079 = vmatprep.subr.bf16.mxu0 0
          %2080 = vmatpush1.bf16.msra.mxu0 %v2058
          %2081 = vmatprep.subr.bf16.mxu0 0
          %2082 = vmatpush1.bf16.msra.mxu0 %v2059
          %2083 = vmatprep.subr.bf16.mxu0 0
          %2084 = vmatpush1.bf16.msra.mxu0 %v2060
          %2085 = vmatprep.subr.bf16.mxu0 0
          %2086 = vmatpush1.bf16.msra.mxu0 0
          %2087 = vmatprep.subr.bf16.mxu0 0
          %2088 = vmatpush1.bf16.msra.mxu0 0
          %2089 = vmatprep.subr.bf16.mxu0 0
          %2090 = vmatpush1.bf16.msra.mxu0 0
          %2091 = vmatprep.subr.bf16.mxu0 0
          %2092 = vmatpush1.bf16.msra.mxu0 0
          %2093 = vmatprep.subr.bf16.mxu0 0
          %2094 = vmatpush1.bf16.msra.mxu0 0
          %2095 = vmatprep.subr.bf16.mxu0 0
          %2096 = vmatpush1.bf16.msra.mxu0 0
          %2097 = vmatprep.subr.bf16.mxu0 0
          %2098 = vmatpush1.bf16.msra.mxu0 0
          %2099 = vmatprep.subr.bf16.mxu0 0
          %2100 = vmatpush1.bf16.msra.mxu0 0
          %2101 = vmatprep.mubr.bf16.mxu0 0
          %2102 = vmatmul.mubr.bf16.gmra.mrb[0].mxu0 %v854
          %v2103 = vpop.f32.mrb[0].mxu0
          %v2104 = vadd.f32 0.0, %v2103
          %v2105 = vpop.f32.mrb[0].mxu0
          %v2106 = vpop.f32.mrb[0].mxu0
          %v2107 = vadd.f32 0.0, %v2106
          %v2108 = vpop.f32.mrb[0].mxu0
          %2109 = vmatprep.mubr.bf16.mxu0 0
          %2110 = vmatmul.mubr.bf16.gmra.mrb[0].mxu0 %v855
          %v2111 = vpop.f32.mrb[0].mxu0
          %v2112 = vadd.f32 0.0, %v2111
          %v2113 = vpop.f32.mrb[0].mxu0
          %v2114 = vpop.f32.mrb[0].mxu0
          %v2115 = vadd.f32 0.0, %v2114
          %v2116 = vpop.f32.mrb[0].mxu0
          %2117 = vmatprep.mubr.bf16.mxu0 0
          %2118 = vmatmul.mubr.bf16.gmra.mrb[0].mxu0 %v856
          %v2119 = vpop.f32.mrb[0].mxu0
          %v2120 = vadd.f32 0.0, %v2119
          %v2121 = vpop.f32.mrb[0].mxu0
          %v2122 = vpop.f32.mrb[0].mxu0
          %v2123 = vadd.f32 0.0, %v2122
          %v2124 = vpop.f32.mrb[0].mxu0
          %2125 = vmatprep.mubr.bf16.mxu0 0
          %2126 = vmatmul.mubr.bf16.gmra.mrb[0].mxu0 %v857
          %v2127 = vpop.f32.mrb[0].mxu0
          %v2128 = vadd.f32 0.0, %v2127
          %v2129 = vpop.f32.mrb[0].mxu0
          %v2130 = vpop.f32.mrb[0].mxu0
          %v2131 = vadd.f32 0.0, %v2130
          %v2132 = vpop.f32.mrb[0].mxu0
          %2133 = vmatprep.mubr.bf16.mxu0 0
          %2134 = vmatmul.mubr.bf16.gmra.mrb[0].mxu0 %v858
          %v2135 = vpop.f32.mrb[0].mxu0
          %v2136 = vadd.f32 0.0, %v2135
          %v2137 = vpop.f32.mrb[0].mxu0
          %v2138 = vpop.f32.mrb[0].mxu0
          %v2139 = vadd.f32 0.0, %v2138
          %v2140 = vpop.f32.mrb[0].mxu0
          %2141 = vmatprep.mubr.bf16.mxu0 0
          %2142 = vmatmul.mubr.bf16.gmra.mrb[0].mxu0 %v859
          %v2143 = vpop.f32.mrb[0].mxu0
          %v2144 = vadd.f32 0.0, %v2143
          %v2145 = vpop.f32.mrb[0].mxu0
          %v2146 = vpop.f32.mrb[0].mxu0
          %v2147 = vadd.f32 0.0, %v2146
          %v2148 = vpop.f32.mrb[0].mxu0
          %2149 = vmatprep.mubr.bf16.mxu0 0
          %2150 = vmatmul.mubr.bf16.gmra.mrb[0].mxu0 %v860
          %v2151 = vpop.f32.mrb[0].mxu0
          %v2152 = vadd.f32 0.0, %v2151
          %v2153 = vpop.f32.mrb[0].mxu0
          %v2154 = vpop.f32.mrb[0].mxu0
          %v2155 = vadd.f32 0.0, %v2154
          %v2156 = vpop.f32.mrb[0].mxu0
          %2157 = vmatprep.mubr.bf16.mxu0 0
          %2158 = vmatmul.mubr.bf16.gmra.mrb[0].mxu0 %v861
          %v2159 = vpop.f32.mrb[0].mxu0
          %v2160 = vadd.f32 0.0, %v2159
          %v2161 = vpop.f32.mrb[0].mxu0
          %v2162 = vpop.f32.mrb[0].mxu0
          %v2163 = vadd.f32 0.0, %v2162
          %v2164 = vpop.f32.mrb[0].mxu0
          %2165 = vdwg.mxu0
          %v2166 = vpack.c.bf16 %v2107, %v2104
          %v2167 = vpack.c.bf16 %v2115, %v2112
          %v2168 = vpack.c.bf16 %v2123, %v2120
          %v2169 = vpack.c.bf16 %v2131, %v2128
          %v2170 = vpack.c.bf16 %v2139, %v2136
          %v2171 = vpack.c.bf16 %v2147, %v2144
          %v2172 = vpack.c.bf16 %v2155, %v2152
          %v2173 = vpack.c.bf16 %v2163, %v2160
          %s2174 = scalar_lea.vmem %s438, 128 [#allocation5]
          %v2175 = vld [vmem:[%s2174] sm:$0xff]
          %v2176 = vld [vmem:[%s2174 + $0x8] sm:$0xff]
          %v2177 = vld [vmem:[%s2174 + $0x10] sm:$0xff]
          %v2178 = vld [vmem:[%s2174 + $0x18] sm:$0xff]
          %v2179 = vunpack.c.l.s8.bf16 %v2175
          %v2180 = vunpack.c.h.s8.bf16 %v2175
          %v2181 = vunpack.c.l.s8.bf16 %v2176
          %v2182 = vunpack.c.h.s8.bf16 %v2176
          %v2183 = vunpack.c.l.s8.bf16 %v2177
          %v2184 = vunpack.c.h.s8.bf16 %v2177
          %v2185 = vunpack.c.l.s8.bf16 %v2178
          %v2186 = vunpack.c.h.s8.bf16 %v2178
          %2187 = vmatprep.subr.bf16.mxu0 0
          %2188 = vmatpush1.bf16.msra.mxu0 %v2166
          %2189 = vmatprep.subr.bf16.mxu0 0
          %2190 = vmatpush1.bf16.msra.mxu0 %v2167
          %2191 = vmatprep.subr.bf16.mxu0 0
          %2192 = vmatpush1.bf16.msra.mxu0 %v2168
          %2193 = vmatprep.subr.bf16.mxu0 0
          %2194 = vmatpush1.bf16.msra.mxu0 %v2169
          %2195 = vmatprep.subr.bf16.mxu0 0
          %2196 = vmatpush1.bf16.msra.mxu0 %v2170
          %2197 = vmatprep.subr.bf16.mxu0 0
          %2198 = vmatpush1.bf16.msra.mxu0 %v2171
          %2199 = vmatprep.subr.bf16.mxu0 0
          %2200 = vmatpush1.bf16.msra.mxu0 %v2172
          %2201 = vmatprep.subr.bf16.mxu0 0
          %2202 = vmatpush1.bf16.msra.mxu0 %v2173
          %2203 = vmatprep.subr.bf16.mxu0 0
          %2204 = vmatpush1.bf16.msra.mxu0 0
          %2205 = vmatprep.subr.bf16.mxu0 0
          %2206 = vmatpush1.bf16.msra.mxu0 0
          %2207 = vmatprep.subr.bf16.mxu0 0
          %2208 = vmatpush1.bf16.msra.mxu0 0
          %2209 = vmatprep.subr.bf16.mxu0 0
          %2210 = vmatpush1.bf16.msra.mxu0 0
          %2211 = vmatprep.subr.bf16.mxu0 0
          %2212 = vmatpush1.bf16.msra.mxu0 0
          %2213 = vmatprep.subr.bf16.mxu0 0
          %2214 = vmatpush1.bf16.msra.mxu0 0
          %2215 = vmatprep.subr.bf16.mxu0 0
          %2216 = vmatpush1.bf16.msra.mxu0 0
          %2217 = vmatprep.subr.bf16.mxu0 0
          %2218 = vmatpush1.bf16.msra.mxu0 0
          %2219 = vmatprep.mubr.bf16.mxu0 0
          %2220 = vmatmul.mubr.bf16.gmra.mrb[0].mxu0 %v2179
          %v2221 = vpop.f32.mrb[0].mxu0
          %v2222 = vadd.f32 0.0, %v2221
          %v2223 = vpop.f32.mrb[0].mxu0
          %v2224 = vpop.f32.mrb[0].mxu0
          %v2225 = vadd.f32 0.0, %v2224
          %v2226 = vpop.f32.mrb[0].mxu0
          %2227 = vmatprep.mubr.bf16.mxu0 0
          %2228 = vmatmul.mubr.bf16.gmra.mrb[0].mxu0 %v2180
          %v2229 = vpop.f32.mrb[0].mxu0
          %v2230 = vadd.f32 0.0, %v2229
          %v2231 = vpop.f32.mrb[0].mxu0
          %v2232 = vpop.f32.mrb[0].mxu0
          %v2233 = vadd.f32 0.0, %v2232
          %v2234 = vpop.f32.mrb[0].mxu0
          %2235 = vmatprep.mubr.bf16.mxu0 0
          %2236 = vmatmul.mubr.bf16.gmra.mrb[0].mxu0 %v2181
          %v2237 = vpop.f32.mrb[0].mxu0
          %v2238 = vadd.f32 0.0, %v2237
          %v2239 = vpop.f32.mrb[0].mxu0
          %v2240 = vpop.f32.mrb[0].mxu0
          %v2241 = vadd.f32 0.0, %v2240
          %v2242 = vpop.f32.mrb[0].mxu0
          %2243 = vmatprep.mubr.bf16.mxu0 0
          %2244 = vmatmul.mubr.bf16.gmra.mrb[0].mxu0 %v2182
          %v2245 = vpop.f32.mrb[0].mxu0
          %v2246 = vadd.f32 0.0, %v2245
          %v2247 = vpop.f32.mrb[0].mxu0
          %v2248 = vpop.f32.mrb[0].mxu0
          %v2249 = vadd.f32 0.0, %v2248
          %v2250 = vpop.f32.mrb[0].mxu0
          %2251 = vmatprep.mubr.bf16.mxu0 0
          %2252 = vmatmul.mubr.bf16.gmra.mrb[0].mxu0 %v2183
          %v2253 = vpop.f32.mrb[0].mxu0
          %v2254 = vadd.f32 0.0, %v2253
          %v2255 = vpop.f32.mrb[0].mxu0
          %v2256 = vpop.f32.mrb[0].mxu0
          %v2257 = vadd.f32 0.0, %v2256
          %v2258 = vpop.f32.mrb[0].mxu0
          %2259 = vmatprep.mubr.bf16.mxu0 0
          %2260 = vmatmul.mubr.bf16.gmra.mrb[0].mxu0 %v2184
          %v2261 = vpop.f32.mrb[0].mxu0
          %v2262 = vadd.f32 0.0, %v2261
          %v2263 = vpop.f32.mrb[0].mxu0
          %v2264 = vpop.f32.mrb[0].mxu0
          %v2265 = vadd.f32 0.0, %v2264
          %v2266 = vpop.f32.mrb[0].mxu0
          %2267 = vmatprep.mubr.bf16.mxu0 0
          %2268 = vmatmul.mubr.bf16.gmra.mrb[0].mxu0 %v2185
          %v2269 = vpop.f32.mrb[0].mxu0
          %v2270 = vadd.f32 0.0, %v2269
          %v2271 = vpop.f32.mrb[0].mxu0
          %v2272 = vpop.f32.mrb[0].mxu0
          %v2273 = vadd.f32 0.0, %v2272
          %v2274 = vpop.f32.mrb[0].mxu0
          %2275 = vmatprep.mubr.bf16.mxu0 0
          %2276 = vmatmul.mubr.bf16.gmra.mrb[0].mxu0 %v2186
          %v2277 = vpop.f32.mrb[0].mxu0
          %v2278 = vadd.f32 0.0, %v2277
          %v2279 = vpop.f32.mrb[0].mxu0
          %v2280 = vpop.f32.mrb[0].mxu0
          %v2281 = vadd.f32 0.0, %v2280
          %v2282 = vpop.f32.mrb[0].mxu0
          %2283 = vdwg.mxu0
          %v2284 = vadd.f32 %v1988, %v2222
          %v2285 = vadd.f32 %v1989, %v2225
          %v2286 = vadd.f32 %v1990, %v2230
          %v2287 = vadd.f32 %v1991, %v2233
          %v2288 = vadd.f32 %v1992, %v2238
          %v2289 = vadd.f32 %v1993, %v2241
          %v2290 = vadd.f32 %v1994, %v2246
          %v2291 = vadd.f32 %v1995, %v2249
          %v2292 = vadd.f32 %v1996, %v2254
          %v2293 = vadd.f32 %v1997, %v2257
          %v2294 = vadd.f32 %v1998, %v2262
          %v2295 = vadd.f32 %v1999, %v2265
          %v2296 = vadd.f32 %v2000, %v2270
          %v2297 = vadd.f32 %v2001, %v2273
          %v2298 = vadd.f32 %v2002, %v2278
          %v2299 = vadd.f32 %v2003, %v2281
          %s2300 = scalar_lea.vmem %s5, 320
          %v2301 = vld [vmem:[%s2300] sm:$0xf]
          %v2302 = vld [vmem:[%s2300 + $0x4] sm:$0xf]
          %v2303 = vld [vmem:[%s2300 + $0x8] sm:$0xf]
          %v2304 = vld [vmem:[%s2300 + $0xc] sm:$0xf]
          %v2305 = vld [vmem:[%s2300 + $0x10] sm:$0xf]
          %v2306 = vld [vmem:[%s2300 + $0x14] sm:$0xf]
          %v2307 = vld [vmem:[%s2300 + $0x18] sm:$0xf]
          %v2308 = vld [vmem:[%s2300 + $0x1c] sm:$0xf]
          %v2309 = vld [vmem:[%s2300 + $0x20] sm:$0xf]
          %v2310 = vld [vmem:[%s2300 + $0x24] sm:$0xf]
          %v2311 = vld [vmem:[%s2300 + $0x28] sm:$0xf]
          %v2312 = vld [vmem:[%s2300 + $0x2c] sm:$0xf]
          %v2313 = vld [vmem:[%s2300 + $0x30] sm:$0xf]
          %v2314 = vld [vmem:[%s2300 + $0x34] sm:$0xf]
          %v2315 = vld [vmem:[%s2300 + $0x38] sm:$0xf]
          %v2316 = vld [vmem:[%s2300 + $0x3c] sm:$0xf]
          %v2333 = vunpack.c.l.b16 %v2301
          %v2334 = vunpack.c.l.b16 %v2302
          %v2335 = vunpack.c.l.b16 %v2303
          %v2336 = vunpack.c.l.b16 %v2304
          %v2337 = vunpack.c.l.b16 %v2305
          %v2338 = vunpack.c.l.b16 %v2306
          %v2339 = vunpack.c.l.b16 %v2307
          %v2340 = vunpack.c.l.b16 %v2308
          %v2341 = vunpack.c.l.b16 %v2309
          %v2342 = vunpack.c.l.b16 %v2310
          %v2343 = vunpack.c.l.b16 %v2311
          %v2344 = vunpack.c.l.b16 %v2312
          %v2345 = vunpack.c.l.b16 %v2313
          %v2346 = vunpack.c.l.b16 %v2314
          %v2347 = vunpack.c.l.b16 %v2315
          %v2348 = vunpack.c.l.b16 %v2316
          %v2349 = vpack.c.b16 %v2334, %v2333
          %v2350 = vpack.c.b16 %v2336, %v2335
          %v2351 = vpack.c.b16 %v2338, %v2337
          %v2352 = vpack.c.b16 %v2340, %v2339
          %v2353 = vpack.c.b16 %v2342, %v2341
          %v2354 = vpack.c.b16 %v2344, %v2343
          %v2355 = vpack.c.b16 %v2346, %v2345
          %v2356 = vpack.c.b16 %v2348, %v2347
          %2365 = vmatprep.subr.bf16.mxu0 0
          %2366 = vmatpush1.bf16.msra.mxu0 %v2349
          %2367 = vmatprep.subr.bf16.mxu0 0
          %2368 = vmatpush1.bf16.msra.mxu0 %v2350
          %2369 = vmatprep.subr.bf16.mxu0 0
          %2370 = vmatpush1.bf16.msra.mxu0 %v2351
          %2371 = vmatprep.subr.bf16.mxu0 0
          %2372 = vmatpush1.bf16.msra.mxu0 %v2352
          %2373 = vmatprep.subr.bf16.mxu0 0
          %2374 = vmatpush1.bf16.msra.mxu0 %v2353
          %2375 = vmatprep.subr.bf16.mxu0 0
          %2376 = vmatpush1.bf16.msra.mxu0 %v2354
          %2377 = vmatprep.subr.bf16.mxu0 0
          %2378 = vmatpush1.bf16.msra.mxu0 %v2355
          %2379 = vmatprep.subr.bf16.mxu0 0
          %2380 = vmatpush1.bf16.msra.mxu0 %v2356
          %2381 = vmatprep.subr.bf16.mxu0 0
          %2382 = vmatpush1.bf16.msra.mxu0 0
          %2383 = vmatprep.subr.bf16.mxu0 0
          %2384 = vmatpush1.bf16.msra.mxu0 0
          %2385 = vmatprep.subr.bf16.mxu0 0
          %2386 = vmatpush1.bf16.msra.mxu0 0
          %2387 = vmatprep.subr.bf16.mxu0 0
          %2388 = vmatpush1.bf16.msra.mxu0 0
          %2389 = vmatprep.subr.bf16.mxu0 0
          %2390 = vmatpush1.bf16.msra.mxu0 0
          %2391 = vmatprep.subr.bf16.mxu0 0
          %2392 = vmatpush1.bf16.msra.mxu0 0
          %2393 = vmatprep.subr.bf16.mxu0 0
          %2394 = vmatpush1.bf16.msra.mxu0 0
          %2395 = vmatprep.subr.bf16.mxu0 0
          %2396 = vmatpush1.bf16.msra.mxu0 0
          %2397 = vmatprep.mubr.bf16.mxu0 0
          %2398 = vmatmul.mubr.bf16.gmra.mrb[0].mxu0 %v854
          %v2399 = vpop.f32.mrb[0].mxu0
          %v2400 = vadd.f32 0.0, %v2399
          %v2401 = vpop.f32.mrb[0].mxu0
          %v2402 = vpop.f32.mrb[0].mxu0
          %v2403 = vadd.f32 0.0, %v2402
          %v2404 = vpop.f32.mrb[0].mxu0
          %2405 = vmatprep.mubr.bf16.mxu0 0
          %2406 = vmatmul.mubr.bf16.gmra.mrb[0].mxu0 %v855
          %v2407 = vpop.f32.mrb[0].mxu0
          %v2408 = vadd.f32 0.0, %v2407
          %v2409 = vpop.f32.mrb[0].mxu0
          %v2410 = vpop.f32.mrb[0].mxu0
          %v2411 = vadd.f32 0.0, %v2410
          %v2412 = vpop.f32.mrb[0].mxu0
          %2413 = vmatprep.mubr.bf16.mxu0 0
          %2414 = vmatmul.mubr.bf16.gmra.mrb[0].mxu0 %v856
          %v2415 = vpop.f32.mrb[0].mxu0
          %v2416 = vadd.f32 0.0, %v2415
          %v2417 = vpop.f32.mrb[0].mxu0
          %v2418 = vpop.f32.mrb[0].mxu0
          %v2419 = vadd.f32 0.0, %v2418
          %v2420 = vpop.f32.mrb[0].mxu0
          %2421 = vmatprep.mubr.bf16.mxu0 0
          %2422 = vmatmul.mubr.bf16.gmra.mrb[0].mxu0 %v857
          %v2423 = vpop.f32.mrb[0].mxu0
          %v2424 = vadd.f32 0.0, %v2423
          %v2425 = vpop.f32.mrb[0].mxu0
          %v2426 = vpop.f32.mrb[0].mxu0
          %v2427 = vadd.f32 0.0, %v2426
          %v2428 = vpop.f32.mrb[0].mxu0
          %2429 = vmatprep.mubr.bf16.mxu0 0
          %2430 = vmatmul.mubr.bf16.gmra.mrb[0].mxu0 %v858
          %v2431 = vpop.f32.mrb[0].mxu0
          %v2432 = vadd.f32 0.0, %v2431
          %v2433 = vpop.f32.mrb[0].mxu0
          %v2434 = vpop.f32.mrb[0].mxu0
          %v2435 = vadd.f32 0.0, %v2434
          %v2436 = vpop.f32.mrb[0].mxu0
          %2437 = vmatprep.mubr.bf16.mxu0 0
          %2438 = vmatmul.mubr.bf16.gmra.mrb[0].mxu0 %v859
          %v2439 = vpop.f32.mrb[0].mxu0
          %v2440 = vadd.f32 0.0, %v2439
          %v2441 = vpop.f32.mrb[0].mxu0
          %v2442 = vpop.f32.mrb[0].mxu0
          %v2443 = vadd.f32 0.0, %v2442
          %v2444 = vpop.f32.mrb[0].mxu0
          %2445 = vmatprep.mubr.bf16.mxu0 0
          %2446 = vmatmul.mubr.bf16.gmra.mrb[0].mxu0 %v860
          %v2447 = vpop.f32.mrb[0].mxu0
          %v2448 = vadd.f32 0.0, %v2447
          %v2449 = vpop.f32.mrb[0].mxu0
          %v2450 = vpop.f32.mrb[0].mxu0
          %v2451 = vadd.f32 0.0, %v2450
          %v2452 = vpop.f32.mrb[0].mxu0
          %2453 = vmatprep.mubr.bf16.mxu0 0
          %2454 = vmatmul.mubr.bf16.gmra.mrb[0].mxu0 %v861
          %v2455 = vpop.f32.mrb[0].mxu0
          %v2456 = vadd.f32 0.0, %v2455
          %v2457 = vpop.f32.mrb[0].mxu0
          %v2458 = vpop.f32.mrb[0].mxu0
          %v2459 = vadd.f32 0.0, %v2458
          %v2460 = vpop.f32.mrb[0].mxu0
          %2461 = vdwg.mxu0
          %v2462 = vpack.c.bf16 %v2403, %v2400
          %v2463 = vpack.c.bf16 %v2411, %v2408
          %v2464 = vpack.c.bf16 %v2419, %v2416
          %v2465 = vpack.c.bf16 %v2427, %v2424
          %v2466 = vpack.c.bf16 %v2435, %v2432
          %v2467 = vpack.c.bf16 %v2443, %v2440
          %v2468 = vpack.c.bf16 %v2451, %v2448
          %v2469 = vpack.c.bf16 %v2459, %v2456
          %s2470 = scalar_lea.vmem %s438, 160 [#allocation5]
          %v2471 = vld [vmem:[%s2470] sm:$0xff]
          %v2472 = vld [vmem:[%s2470 + $0x8] sm:$0xff]
          %v2473 = vld [vmem:[%s2470 + $0x10] sm:$0xff]
          %v2474 = vld [vmem:[%s2470 + $0x18] sm:$0xff]
          %v2475 = vunpack.c.l.s8.bf16 %v2471
          %v2476 = vunpack.c.h.s8.bf16 %v2471
          %v2477 = vunpack.c.l.s8.bf16 %v2472
          %v2478 = vunpack.c.h.s8.bf16 %v2472
          %v2479 = vunpack.c.l.s8.bf16 %v2473
          %v2480 = vunpack.c.h.s8.bf16 %v2473
          %v2481 = vunpack.c.l.s8.bf16 %v2474
          %v2482 = vunpack.c.h.s8.bf16 %v2474
          %2483 = vmatprep.subr.bf16.mxu0 0
          %2484 = vmatpush1.bf16.msra.mxu0 %v2462
          %2485 = vmatprep.subr.bf16.mxu0 0
          %2486 = vmatpush1.bf16.msra.mxu0 %v2463
          %2487 = vmatprep.subr.bf16.mxu0 0
          %2488 = vmatpush1.bf16.msra.mxu0 %v2464
          %2489 = vmatprep.subr.bf16.mxu0 0
          %2490 = vmatpush1.bf16.msra.mxu0 %v2465
          %2491 = vmatprep.subr.bf16.mxu0 0
          %2492 = vmatpush1.bf16.msra.mxu0 %v2466
          %2493 = vmatprep.subr.bf16.mxu0 0
          %2494 = vmatpush1.bf16.msra.mxu0 %v2467
          %2495 = vmatprep.subr.bf16.mxu0 0
          %2496 = vmatpush1.bf16.msra.mxu0 %v2468
          %2497 = vmatprep.subr.bf16.mxu0 0
          %2498 = vmatpush1.bf16.msra.mxu0 %v2469
          %2499 = vmatprep.subr.bf16.mxu0 0
          %2500 = vmatpush1.bf16.msra.mxu0 0
          %2501 = vmatprep.subr.bf16.mxu0 0
          %2502 = vmatpush1.bf16.msra.mxu0 0
          %2503 = vmatprep.subr.bf16.mxu0 0
          %2504 = vmatpush1.bf16.msra.mxu0 0
          %2505 = vmatprep.subr.bf16.mxu0 0
          %2506 = vmatpush1.bf16.msra.mxu0 0
          %2507 = vmatprep.subr.bf16.mxu0 0
          %2508 = vmatpush1.bf16.msra.mxu0 0
          %2509 = vmatprep.subr.bf16.mxu0 0
          %2510 = vmatpush1.bf16.msra.mxu0 0
          %2511 = vmatprep.subr.bf16.mxu0 0
          %2512 = vmatpush1.bf16.msra.mxu0 0
          %2513 = vmatprep.subr.bf16.mxu0 0
          %2514 = vmatpush1.bf16.msra.mxu0 0
          %2515 = vmatprep.mubr.bf16.mxu0 0
          %2516 = vmatmul.mubr.bf16.gmra.mrb[0].mxu0 %v2475
          %v2517 = vpop.f32.mrb[0].mxu0
          %v2518 = vadd.f32 0.0, %v2517
          %v2519 = vpop.f32.mrb[0].mxu0
          %v2520 = vpop.f32.mrb[0].mxu0
          %v2521 = vadd.f32 0.0, %v2520
          %v2522 = vpop.f32.mrb[0].mxu0
          %2523 = vmatprep.mubr.bf16.mxu0 0
          %2524 = vmatmul.mubr.bf16.gmra.mrb[0].mxu0 %v2476
          %v2525 = vpop.f32.mrb[0].mxu0
          %v2526 = vadd.f32 0.0, %v2525
          %v2527 = vpop.f32.mrb[0].mxu0
          %v2528 = vpop.f32.mrb[0].mxu0
          %v2529 = vadd.f32 0.0, %v2528
          %v2530 = vpop.f32.mrb[0].mxu0
          %2531 = vmatprep.mubr.bf16.mxu0 0
          %2532 = vmatmul.mubr.bf16.gmra.mrb[0].mxu0 %v2477
          %v2533 = vpop.f32.mrb[0].mxu0
          %v2534 = vadd.f32 0.0, %v2533
          %v2535 = vpop.f32.mrb[0].mxu0
          %v2536 = vpop.f32.mrb[0].mxu0
          %v2537 = vadd.f32 0.0, %v2536
          %v2538 = vpop.f32.mrb[0].mxu0
          %2539 = vmatprep.mubr.bf16.mxu0 0
          %2540 = vmatmul.mubr.bf16.gmra.mrb[0].mxu0 %v2478
          %v2541 = vpop.f32.mrb[0].mxu0
          %v2542 = vadd.f32 0.0, %v2541
          %v2543 = vpop.f32.mrb[0].mxu0
          %v2544 = vpop.f32.mrb[0].mxu0
          %v2545 = vadd.f32 0.0, %v2544
          %v2546 = vpop.f32.mrb[0].mxu0
          %2547 = vmatprep.mubr.bf16.mxu0 0
          %2548 = vmatmul.mubr.bf16.gmra.mrb[0].mxu0 %v2479
          %v2549 = vpop.f32.mrb[0].mxu0
          %v2550 = vadd.f32 0.0, %v2549
          %v2551 = vpop.f32.mrb[0].mxu0
          %v2552 = vpop.f32.mrb[0].mxu0
          %v2553 = vadd.f32 0.0, %v2552
          %v2554 = vpop.f32.mrb[0].mxu0
          %2555 = vmatprep.mubr.bf16.mxu0 0
          %2556 = vmatmul.mubr.bf16.gmra.mrb[0].mxu0 %v2480
          %v2557 = vpop.f32.mrb[0].mxu0
          %v2558 = vadd.f32 0.0, %v2557
          %v2559 = vpop.f32.mrb[0].mxu0
          %v2560 = vpop.f32.mrb[0].mxu0
          %v2561 = vadd.f32 0.0, %v2560
          %v2562 = vpop.f32.mrb[0].mxu0
          %2563 = vmatprep.mubr.bf16.mxu0 0
          %2564 = vmatmul.mubr.bf16.gmra.mrb[0].mxu0 %v2481
          %v2565 = vpop.f32.mrb[0].mxu0
          %v2566 = vadd.f32 0.0, %v2565
          %v2567 = vpop.f32.mrb[0].mxu0
          %v2568 = vpop.f32.mrb[0].mxu0
          %v2569 = vadd.f32 0.0, %v2568
          %v2570 = vpop.f32.mrb[0].mxu0
          %2571 = vmatprep.mubr.bf16.mxu0 0
          %2572 = vmatmul.mubr.bf16.gmra.mrb[0].mxu0 %v2482
          %v2573 = vpop.f32.mrb[0].mxu0
          %v2574 = vadd.f32 0.0, %v2573
          %v2575 = vpop.f32.mrb[0].mxu0
          %v2576 = vpop.f32.mrb[0].mxu0
          %v2577 = vadd.f32 0.0, %v2576
          %v2578 = vpop.f32.mrb[0].mxu0
          %2579 = vdwg.mxu0
          %v2580 = vadd.f32 %v2284, %v2518
          %v2581 = vadd.f32 %v2285, %v2521
          %v2582 = vadd.f32 %v2286, %v2526
          %v2583 = vadd.f32 %v2287, %v2529
          %v2584 = vadd.f32 %v2288, %v2534
          %v2585 = vadd.f32 %v2289, %v2537
          %v2586 = vadd.f32 %v2290, %v2542
          %v2587 = vadd.f32 %v2291, %v2545
          %v2588 = vadd.f32 %v2292, %v2550
          %v2589 = vadd.f32 %v2293, %v2553
          %v2590 = vadd.f32 %v2294, %v2558
          %v2591 = vadd.f32 %v2295, %v2561
          %v2592 = vadd.f32 %v2296, %v2566
          %v2593 = vadd.f32 %v2297, %v2569
          %v2594 = vadd.f32 %v2298, %v2574
          %v2595 = vadd.f32 %v2299, %v2577
          %v2596 = vld [vmem:[%s505] sm:$0xff]
          %v2597 = vld [vmem:[%s505 + $0x8] sm:$0xff]
          %v2598 = vld [vmem:[%s505 + $0x10] sm:$0xff]
          %v2599 = vld [vmem:[%s505 + $0x18] sm:$0xff]
          %v2600 = vld [vmem:[%s505 + $0x20] sm:$0xff]
          %v2601 = vld [vmem:[%s505 + $0x28] sm:$0xff]
          %v2602 = vld [vmem:[%s505 + $0x30] sm:$0xff]
          %v2603 = vld [vmem:[%s505 + $0x38] sm:$0xff]
          %v2604 = vld [vmem:[%s505 + $0x40] sm:$0xff]
          %v2605 = vld [vmem:[%s505 + $0x48] sm:$0xff]
          %v2606 = vld [vmem:[%s505 + $0x50] sm:$0xff]
          %v2607 = vld [vmem:[%s505 + $0x58] sm:$0xff]
          %v2608 = vld [vmem:[%s505 + $0x60] sm:$0xff]
          %v2609 = vld [vmem:[%s505 + $0x68] sm:$0xff]
          %v2610 = vld [vmem:[%s505 + $0x70] sm:$0xff]
          %v2611 = vld [vmem:[%s505 + $0x78] sm:$0xff]
          %v2612 = vld [vmem:[%s529] sm:$0xff]
          %v2613 = vld [vmem:[%s529 + $0x8] sm:$0xff]
          %v2614 = vld [vmem:[%s529 + $0x10] sm:$0xff]
          %v2615 = vld [vmem:[%s529 + $0x18] sm:$0xff]
          %v2616 = vld [vmem:[%s529 + $0x20] sm:$0xff]
          %v2617 = vld [vmem:[%s529 + $0x28] sm:$0xff]
          %v2618 = vld [vmem:[%s529 + $0x30] sm:$0xff]
          %v2619 = vld [vmem:[%s529 + $0x38] sm:$0xff]
          %v2620 = vld [vmem:[%s529 + $0x40] sm:$0xff]
          %v2621 = vld [vmem:[%s529 + $0x48] sm:$0xff]
          %v2622 = vld [vmem:[%s529 + $0x50] sm:$0xff]
          %v2623 = vld [vmem:[%s529 + $0x58] sm:$0xff]
          %v2624 = vld [vmem:[%s529 + $0x60] sm:$0xff]
          %v2625 = vld [vmem:[%s529 + $0x68] sm:$0xff]
          %v2626 = vld [vmem:[%s529 + $0x70] sm:$0xff]
          %v2627 = vld [vmem:[%s529 + $0x78] sm:$0xff]
          %2629 = vset.pattern.permute.xlu0 0
          %2630 = vperm.xlu0 %2629, %v2612
          %v2631 = vpop.permute.xlu0 %2630
          %2634 = vset.pattern.permute.xlu0 0
          %2635 = vperm.xlu0 %2634, %v2613
          %v2636 = vpop.permute.xlu0 %2635
          %2639 = vset.pattern.permute.xlu0 0
          %2640 = vperm.xlu0 %2639, %v2614
          %v2641 = vpop.permute.xlu0 %2640
          %2644 = vset.pattern.permute.xlu0 0
          %2645 = vperm.xlu0 %2644, %v2615
          %v2646 = vpop.permute.xlu0 %2645
          %2649 = vset.pattern.permute.xlu0 0
          %2650 = vperm.xlu0 %2649, %v2616
          %v2651 = vpop.permute.xlu0 %2650
          %2654 = vset.pattern.permute.xlu0 0
          %2655 = vperm.xlu0 %2654, %v2617
          %v2656 = vpop.permute.xlu0 %2655
          %2659 = vset.pattern.permute.xlu0 0
          %2660 = vperm.xlu0 %2659, %v2618
          %v2661 = vpop.permute.xlu0 %2660
          %2664 = vset.pattern.permute.xlu0 0
          %2665 = vperm.xlu0 %2664, %v2619
          %v2666 = vpop.permute.xlu0 %2665
          %2669 = vset.pattern.permute.xlu0 0
          %2670 = vperm.xlu0 %2669, %v2620
          %v2671 = vpop.permute.xlu0 %2670
          %2674 = vset.pattern.permute.xlu0 0
          %2675 = vperm.xlu0 %2674, %v2621
          %v2676 = vpop.permute.xlu0 %2675
          %2679 = vset.pattern.permute.xlu0 0
          %2680 = vperm.xlu0 %2679, %v2622
          %v2681 = vpop.permute.xlu0 %2680
          %2684 = vset.pattern.permute.xlu0 0
          %2685 = vperm.xlu0 %2684, %v2623
          %v2686 = vpop.permute.xlu0 %2685
          %2689 = vset.pattern.permute.xlu0 0
          %2690 = vperm.xlu0 %2689, %v2624
          %v2691 = vpop.permute.xlu0 %2690
          %2694 = vset.pattern.permute.xlu0 0
          %2695 = vperm.xlu0 %2694, %v2625
          %v2696 = vpop.permute.xlu0 %2695
          %2699 = vset.pattern.permute.xlu0 0
          %2700 = vperm.xlu0 %2699, %v2626
          %v2701 = vpop.permute.xlu0 %2700
          %2704 = vset.pattern.permute.xlu0 0
          %2705 = vperm.xlu0 %2704, %v2627
          %v2706 = vpop.permute.xlu0 %2705
          %v2708 = vmul.f32 %v2631, %v2580
          %v2709 = vmul.f32 %v2636, %v2581
          %v2710 = vmul.f32 %v2641, %v2582
          %v2711 = vmul.f32 %v2646, %v2583
          %v2712 = vmul.f32 %v2651, %v2584
          %v2713 = vmul.f32 %v2656, %v2585
          %v2714 = vmul.f32 %v2661, %v2586
          %v2715 = vmul.f32 %v2666, %v2587
          %v2716 = vmul.f32 %v2671, %v2588
          %v2717 = vmul.f32 %v2676, %v2589
          %v2718 = vmul.f32 %v2681, %v2590
          %v2719 = vmul.f32 %v2686, %v2591
          %v2720 = vmul.f32 %v2691, %v2592
          %v2721 = vmul.f32 %v2696, %v2593
          %v2722 = vmul.f32 %v2701, %v2594
          %v2723 = vmul.f32 %v2706, %v2595
          %v2724 = vadd.f32 %v2596, %v2708
          %v2725 = vadd.f32 %v2597, %v2709
          %v2726 = vadd.f32 %v2598, %v2710
          %v2727 = vadd.f32 %v2599, %v2711
          %v2728 = vadd.f32 %v2600, %v2712
          %v2729 = vadd.f32 %v2601, %v2713
          %v2730 = vadd.f32 %v2602, %v2714
          %v2731 = vadd.f32 %v2603, %v2715
          %v2732 = vadd.f32 %v2604, %v2716
          %v2733 = vadd.f32 %v2605, %v2717
          %v2734 = vadd.f32 %v2606, %v2718
          %v2735 = vadd.f32 %v2607, %v2719
          %v2736 = vadd.f32 %v2608, %v2720
          %v2737 = vadd.f32 %v2609, %v2721
          %v2738 = vadd.f32 %v2610, %v2722
          %v2739 = vadd.f32 %v2611, %v2723
          %2740 = vst [vmem:[%s505] sm:$0xff] %v2724
          %2741 = vst [vmem:[%s505 + $0x8] sm:$0xff] %v2725
          %2742 = vst [vmem:[%s505 + $0x10] sm:$0xff] %v2726
          %2743 = vst [vmem:[%s505 + $0x18] sm:$0xff] %v2727
          %2744 = vst [vmem:[%s505 + $0x20] sm:$0xff] %v2728
          %2745 = vst [vmem:[%s505 + $0x28] sm:$0xff] %v2729
          %2746 = vst [vmem:[%s505 + $0x30] sm:$0xff] %v2730
          %2747 = vst [vmem:[%s505 + $0x38] sm:$0xff] %v2731
          %2748 = vst [vmem:[%s505 + $0x40] sm:$0xff] %v2732
          %2749 = vst [vmem:[%s505 + $0x48] sm:$0xff] %v2733
          %2750 = vst [vmem:[%s505 + $0x50] sm:$0xff] %v2734
          %2751 = vst [vmem:[%s505 + $0x58] sm:$0xff] %v2735
          %2752 = vst [vmem:[%s505 + $0x60] sm:$0xff] %v2736
          %2753 = vst [vmem:[%s505 + $0x68] sm:$0xff] %v2737
          %2754 = vst [vmem:[%s505 + $0x70] sm:$0xff] %v2738
          %2755 = vst [vmem:[%s505 + $0x78] sm:$0xff] %v2739
        $region72: #{tpu_custom_call.1} parent=47 // pred_fallthru
          _
        %p2756 = scmp.eq.s32.totalorder %s45, 1
        // Predicated region
        $region73: #{tpu_custom_call.1} parent=47 // pred_check
          %p2757 = pneg %p2756
        $region74: #{tpu_custom_call.1} parent=47 // pred_check_branch
          %2759 = sbr.rel (%p2757) target = $region76
        $region75: #{tpu_custom_call.1} parent=47 // pred_region
          %v2760 = vld [vmem:[%s505] sm:$0xff]
          %v2761 = vld [vmem:[%s505 + $0x8] sm:$0xff]
          %v2762 = vld [vmem:[%s505 + $0x10] sm:$0xff]
          %v2763 = vld [vmem:[%s505 + $0x18] sm:$0xff]
          %v2764 = vld [vmem:[%s505 + $0x20] sm:$0xff]
          %v2765 = vld [vmem:[%s505 + $0x28] sm:$0xff]
          %v2766 = vld [vmem:[%s505 + $0x30] sm:$0xff]
          %v2767 = vld [vmem:[%s505 + $0x38] sm:$0xff]
          %v2768 = vld [vmem:[%s505 + $0x40] sm:$0xff]
          %v2769 = vld [vmem:[%s505 + $0x48] sm:$0xff]
          %v2770 = vld [vmem:[%s505 + $0x50] sm:$0xff]
          %v2771 = vld [vmem:[%s505 + $0x58] sm:$0xff]
          %v2772 = vld [vmem:[%s505 + $0x60] sm:$0xff]
          %v2773 = vld [vmem:[%s505 + $0x68] sm:$0xff]
          %v2774 = vld [vmem:[%s505 + $0x70] sm:$0xff]
          %v2775 = vld [vmem:[%s505 + $0x78] sm:$0xff]
          %v2776 = vmax.f32 %v2760, 0.0
          %v2777 = vmax.f32 %v2761, 0.0
          %v2778 = vmax.f32 %v2762, 0.0
          %v2779 = vmax.f32 %v2763, 0.0
          %v2780 = vmax.f32 %v2764, 0.0
          %v2781 = vmax.f32 %v2765, 0.0
          %v2782 = vmax.f32 %v2766, 0.0
          %v2783 = vmax.f32 %v2767, 0.0
          %v2784 = vmax.f32 %v2768, 0.0
          %v2785 = vmax.f32 %v2769, 0.0
          %v2786 = vmax.f32 %v2770, 0.0
          %v2787 = vmax.f32 %v2771, 0.0
          %v2788 = vmax.f32 %v2772, 0.0
          %v2789 = vmax.f32 %v2773, 0.0
          %v2790 = vmax.f32 %v2774, 0.0
          %v2791 = vmax.f32 %v2775, 0.0
          %2792 = vst [vmem:[%s505] sm:$0xff] %v2776
          %2793 = vst [vmem:[%s505 + $0x8] sm:$0xff] %v2777
          %2794 = vst [vmem:[%s505 + $0x10] sm:$0xff] %v2778
          %2795 = vst [vmem:[%s505 + $0x18] sm:$0xff] %v2779
          %2796 = vst [vmem:[%s505 + $0x20] sm:$0xff] %v2780
          %2797 = vst [vmem:[%s505 + $0x28] sm:$0xff] %v2781
          %2798 = vst [vmem:[%s505 + $0x30] sm:$0xff] %v2782
          %2799 = vst [vmem:[%s505 + $0x38] sm:$0xff] %v2783
          %2800 = vst [vmem:[%s505 + $0x40] sm:$0xff] %v2784
          %2801 = vst [vmem:[%s505 + $0x48] sm:$0xff] %v2785
          %2802 = vst [vmem:[%s505 + $0x50] sm:$0xff] %v2786
          %2803 = vst [vmem:[%s505 + $0x58] sm:$0xff] %v2787
          %2804 = vst [vmem:[%s505 + $0x60] sm:$0xff] %v2788
          %2805 = vst [vmem:[%s505 + $0x68] sm:$0xff] %v2789
          %2806 = vst [vmem:[%s505 + $0x70] sm:$0xff] %v2790
          %2807 = vst [vmem:[%s505 + $0x78] sm:$0xff] %v2791
        $region76: #{tpu_custom_call.1} parent=47 // pred_fallthru
          _
        %s2808 = sand.u32 %s261, 1
        %s2809 = scalar_lea.sflag [#allocation7], %s2808
        %s2810 = sand.u32 %s261, 1
        %s2811 = smul.addr %s2810, 128
        %s2812 = scalar_lea.vmem [#allocation13], %s2811
        // Predicated region
        $region77: #{tpu_custom_call.1} parent=47 // pred_check
          %p2813 = pneg %p271
        $region78: #{tpu_custom_call.1} parent=47 // pred_check_branch
          %2815 = sbr.rel (%p2813) target = $region80
        $region79: #{tpu_custom_call.1} parent=47 // pred_region
          %s2816 = smul.u32 16, %s44
          %s2818 = ssub.s32 2048, 2048
          %2819 = vsyncadd %s2809, %s2818
          %s2820 = smul.addr %s2816, 128
          %s2821 = scalar_lea.hbm %s9, %s2820
          %s2822 = sshll.u32 %s2812, 4
          %s2823 = int_to_ptr.vmem [resolvable:$true] %s2822
          %2828 = dma.vmem_to_hbm [thread:$0]  %s2823, 2048, %s2821, %s2809, 128, 128, 8
        $region80: #{tpu_custom_call.1} parent=47 // pred_fallthru
          _
      $region48: #{tpu_custom_call.1} parent=5 // pred_fallthru
        _
      %p2829 = scmp.le.s32.totalorder 2, %s35
      // Predicated region
      $region81: #{tpu_custom_call.1} parent=5 // pred_check
        %p2830 = pneg %p2829
      $region82: #{tpu_custom_call.1} parent=5 // pred_check_branch
        %2832 = sbr.rel (%p2830) target = $region84
      $region83: #{tpu_custom_call.1} parent=5 // pred_region
        %s2833 = ssub.s32 %s35, 2
        // Predicated region
        $region85: #{tpu_custom_call.1} parent=83 // pred_check
          %p2834 = pneg %p277
        $region86: #{tpu_custom_call.1} parent=83 // pred_check_branch
          %2836 = sbr.rel (%p2834) target = $region88
        $region87: #{tpu_custom_call.1} parent=83 // pred_region
          %s2837 = sand.u32 %s262, 1
          %s2838 = scalar_lea.sflag [#allocation7], %s2837
          %s2839 = sand.u32 %s262, 1
          %s2840 = smul.addr %s2839, 128
          %s2841 = scalar_lea.vmem [#allocation13], %s2840
          %2842 = dma.done %s2838, 2048
        $region88: #{tpu_custom_call.1} parent=83 // pred_fallthru
          _
      $region84: #{tpu_custom_call.1} parent=5 // pred_fallthru
        _
    $region6: #{tpu_custom_call.1} parent=1 // loop_footer
      %s39 = sadd.s32 1, %s35
    $region7: #{tpu_custom_call.1} parent=1 // loop_footer_branch
      %34 = sbr.rel target = $region3
    $region8: #{tpu_custom_call.1} parent=1 // loop_exit
      _
    %2843 = vsyncpa [#allocation6], 1
    %s2844 = scalar_lea.sflag [#allocation6], 1
    %2845 = vsyncpa %s2844, 1
    %2846 = vsyncpa [#allocation9], 1
    %s2847 = scalar_lea.sflag [#allocation9], 1
    %2848 = vsyncpa %s2847, 1
    %2849 = vsyncpa [#allocation12], 1
    %2850 = vsyncpa [#allocation7], 1
    %s2851 = scalar_lea.sflag [#allocation7], 1
    %2852 = vsyncpa %s2851, 1

</llo_original>
